<compile_context>
chip_gen: v7x
topology: tpu7x:2x2x1
jax: 0.10.0
libtpu: 0.0.40
codegen_flags: <defaults>
</compile_context>

<pallas_src>
import jax
import jax.numpy as jnp
from jax.experimental import pallas as pl
from jax.experimental.pallas import tpu as pltpu

D_IN, D_H1, D_H2 = 4096, 1024, 256
N_SPLIT = 2                  # parallel halves of fc1's output dim (dual-TC on v7x)
H1_BLK = D_H1 // N_SPLIT     # 512


# --------------------------------------------------------------------------
# Kernel 1: fc1 + bias + ReLU, parallel over halves of the output dimension.
# --------------------------------------------------------------------------
def fc1_relu_kernel(x_ref, w1_ref, b1_ref, h1_ref):
    acc = jnp.dot(x_ref[...], w1_ref[...], preferred_element_type=jnp.float32)
    # dropout1: identity in eval mode
    h1_ref[...] = jnp.maximum(acc + b1_ref[...], 0.0).astype(h1_ref.dtype)


# --------------------------------------------------------------------------
# Kernel 2: fc2 + bias + ReLU + fc3 + bias (tiny, everything resident).
# --------------------------------------------------------------------------
def head_kernel(h1_ref, w2_ref, b2_ref, w3_ref, b3_ref, out_ref):
    h2 = jnp.dot(h1_ref[...], w2_ref[...], preferred_element_type=jnp.float32)
    h2 = jnp.maximum(h2 + b2_ref[...], 0.0).astype(jnp.bfloat16)
    # dropout2: identity in eval mode
    logits = jnp.dot(h2, w3_ref[...], preferred_element_type=jnp.float32)
    out_ref[...] = (logits + b3_ref[...]).astype(out_ref.dtype)


def classifier_forward(x, params):
    """x: (B, 4096) float32.  params: bf16 weights (in,out layout), f32 biases (1,N)."""
    w1, b1, w2, b2, w3, b3 = (params["w1"], params["b1"], params["w2"],
                              params["b2"], params["w3"], params["b3"])
    B = x.shape[0]
    C = w3.shape[1]
    x_bf16 = x.astype(jnp.bfloat16)

    # ---- fc1 + ReLU ------------------------------------------------------
    h1 = pl.pallas_call(
        fc1_relu_kernel,
        out_shape=jax.ShapeDtypeStruct((B, D_H1), jnp.bfloat16),
        grid_spec=pltpu.PrefetchScalarGridSpec(
            num_scalar_prefetch=0,
            grid=(N_SPLIT,),
            in_specs=[
                pl.BlockSpec((B, D_IN),       lambda j: (0, 0)),  # x (small, re-fetched)
                pl.BlockSpec((D_IN, H1_BLK),  lambda j: (0, j)),  # W1 column half (4 MiB bf16)
                pl.BlockSpec((1, H1_BLK),     lambda j: (0, j)),  # b1 half
            ],
            out_specs=pl.BlockSpec((B, H1_BLK), lambda j: (0, j)),
        ),
        compiler_params=pltpu.CompilerParams(
            dimension_semantics=("parallel",),   # disjoint W1 halves -> both TCs on v7x
            vmem_limit_bytes=32 << 20,
        ),
    )(x_bf16, w1, b1)

    # ---- fc2 + ReLU + fc3 (tiny head, fully resident) --------------------
    out = pl.pallas_call(
        head_kernel,
        out_shape=jax.ShapeDtypeStruct((B, C), jnp.float32),
        grid_spec=pltpu.PrefetchScalarGridSpec(
            num_scalar_prefetch=0,
            grid=(1,),
            in_specs=[
                pl.BlockSpec((B, D_H1),     lambda i: (0, 0)),
                pl.BlockSpec((D_H1, D_H2),  lambda i: (0, 0)),
                pl.BlockSpec((1, D_H2),     lambda i: (0, 0)),
                pl.BlockSpec((D_H2, C),     lambda i: (0, 0)),
                pl.BlockSpec((1, C),        lambda i: (0, 0)),
            ],
            out_specs=pl.BlockSpec((B, C), lambda i: (0, 0)),
        ),
        compiler_params=pltpu.CompilerParams(
            dimension_semantics=("arbitrary",),
        ),
    )(h1, w2, b2, w3, b3)

    return out


def init_params(key, cls_num=2):
    """PyTorch-style uniform(-1/sqrt(fan_in), +1/sqrt(fan_in)) init.

    Weights are cast to bf16 for HBM-bandwidth (the kernel is DMA bound);
    biases stay f32.
    """
    ks = jax.random.split(key, 6)

    def lin(kw, kb, fan_in, fan_out):
        bound = 1.0 / jnp.sqrt(fan_in)
        w = jax.random.uniform(kw, (fan_in, fan_out), jnp.float32, -bound, bound)
        b = jax.random.uniform(kb, (1, fan_out), jnp.float32, -bound, bound)
        return w.astype(jnp.bfloat16), b

    w1, b1 = lin(ks[0], ks[1], D_IN, D_H1)
    w2, b2 = lin(ks[2], ks[3], D_H1, D_H2)
    w3, b3 = lin(ks[4], ks[5], D_H2, cls_num)
    return dict(w1=w1, b1=b1, w2=w2, b2=b2, w3=w3, b3=b3)


def reference_forward(x, p):
    """Plain-XLA reference mirroring the kernel's numerics (bf16 inputs, f32 accum)."""
    xb = x.astype(jnp.bfloat16)
    h1 = jnp.maximum(
        jnp.dot(xb, p["w1"], preferred_element_type=jnp.float32) + p["b1"], 0.0
    ).astype(jnp.bfloat16)
    h2 = jnp.maximum(
        jnp.dot(h1, p["w2"], preferred_element_type=jnp.float32) + p["b2"], 0.0
    ).astype(jnp.bfloat16)
    return jnp.dot(h2, p["w3"], preferred_element_type=jnp.float32) + p["b3"]


if __name__ == "__main__":
    key = jax.random.PRNGKey(0)
    k_x, k_p = jax.random.split(key)

    B, CLS = 8, 2
    x = jax.random.normal(k_x, (B, D_IN), dtype=jnp.float32)
    params = init_params(k_p, cls_num=CLS)

    out = classifier_forward(x, params)
    out = jax.block_until_ready(out)

    ref = reference_forward(x, params)
    assert out.shape == (B, CLS), out.shape
    assert jnp.allclose(out, ref, atol=2e-3, rtol=2e-3), \
        f"max abs err {jnp.max(jnp.abs(out - ref))}"

    print("KERNEL_OK")
</pallas_src>

<mosaic_0001>
module attributes {stable_mosaic.version = 11 : i64} {
  func.func @fc1_relu_kernel(%arg0: i32, %arg1: memref<8x4096xbf16, #tpu.memory_space<vmem>>, %arg2: memref<4096x512xbf16, #tpu.memory_space<vmem>>, %arg3: memref<1x512xf32, #tpu.memory_space<vmem>>, %arg4: memref<8x512xbf16, #tpu.memory_space<vmem>>) attributes {dimension_semantics = [#tpu.dimension_semantics<parallel>], iteration_bounds = array<i64: 2>, scalar_prefetch = 0 : i64, scratch_operands = 0 : i64, tpu.core_type = #tpu.core_type<tc>, window_params = [{pipeline_mode = #tpu.pipeline_mode<synchronous>, transform_indices = @transform_0, window_bounds = array<i64: 8, 4096>}, {transform_indices = @transform_1, window_bounds = array<i64: 4096, 512>}, {transform_indices = @transform_2, window_bounds = array<i64: 1, 512>}, {transform_indices = @transform_3, window_bounds = array<i64: 8, 512>}]} {
    %c0 = arith.constant 0 : index
    %c0_0 = arith.constant 0 : index
    %0 = vector.load %arg1[%c0, %c0_0] : memref<8x4096xbf16, #tpu.memory_space<vmem>>, vector<8x4096xbf16>
    %c0_1 = arith.constant 0 : index
    %c0_2 = arith.constant 0 : index
    %1 = vector.load %arg2[%c0_1, %c0_2] : memref<4096x512xbf16, #tpu.memory_space<vmem>>, vector<4096x512xbf16>
    %cst = arith.constant dense<0.000000e+00> : vector<8x512xf32>
    %2 = tpu.matmul %0, %1, %cst {dimension_numbers = #tpu.dot_dimension_numbers<[1], [0], [0], [1], [0, 0, 1, 1], [], []>} : vector<8x4096xbf16>, vector<4096x512xbf16>, vector<8x512xf32> -> vector<8x512xf32>
    %c0_3 = arith.constant 0 : index
    %c0_4 = arith.constant 0 : index
    %3 = vector.load %arg3[%c0_3, %c0_4] : memref<1x512xf32, #tpu.memory_space<vmem>>, vector<1x512xf32>
    %4 = vector.broadcast %3 : vector<1x512xf32> to vector<8x512xf32>
    %5 = arith.addf %2, %4 : vector<8x512xf32>
    %cst_5 = arith.constant 0.000000e+00 : f32
    %6 = vector.broadcast %cst_5 : f32 to vector<8x512xf32>
    %7 = arith.maximumf %5, %6 : vector<8x512xf32>
    %8 = arith.truncf %7 : vector<8x512xf32> to vector<8x512xbf16>
    %c0_6 = arith.constant 0 : index
    %c0_7 = arith.constant 0 : index
    %9 = vector.load %arg4[%c0_6, %c0_7] : memref<8x512xbf16, #tpu.memory_space<vmem>>, vector<8x512xbf16>
    tpu.vector_store %arg4[%c0_6, %c0_7], %8 {strides = array<i32>} : memref<8x512xbf16, #tpu.memory_space<vmem>>, vector<8x512xbf16>,
    return
  }
  func.func @transform_0(%arg0: i32) -> (i32, i32) {
    %c0_i32 = arith.constant 0 : i32
    %c0_i32_0 = arith.constant 0 : i32
    %c0_i32_1 = arith.constant 0 : i32
    return %c0_i32, %c0_i32_0 : i32, i32
  }
  func.func @transform_1(%arg0: i32) -> (i32, i32) {
    %c0_i32 = arith.constant 0 : i32
    %c0_i32_0 = arith.constant 0 : i32
    return %c0_i32, %arg0 : i32, i32
  }
  func.func @transform_2(%arg0: i32) -> (i32, i32) {
    %c0_i32 = arith.constant 0 : i32
    %c0_i32_0 = arith.constant 0 : i32
    return %c0_i32, %arg0 : i32, i32
  }
  func.func @transform_3(%arg0: i32) -> (i32, i32) {
    %c0_i32 = arith.constant 0 : i32
    %c0_i32_0 = arith.constant 0 : i32
    return %c0_i32, %arg0 : i32, i32
  }
}

</mosaic_0001>

<llo_original>
// kernel: tpu_custom_call.1
$region0: #{tpu_custom_call.1}
  #allocation0 [shape = 'u32[]', space=smem, size = 0x4, offset = 0x4, fixed_abs, tag = 'smem constant byte address 0x4 - core index']
  #allocation1 [shape = 'u32[144,128]{1,0:T(1,128)}', space=vmem, size = 0x12000, scoped, tag = 'internal scratch']
  %s0 = inlined_call_operand.hbm [shape: bf16[8,4096], index: 0, kind: input, shape index: {}]
  %s1 = inlined_call_operand.hbm [shape: bf16[4096,1024], index: 1, kind: input, shape index: {}]
  %s2 = inlined_call_operand.hbm [shape: f32[1,1024], index: 2, kind: input, shape index: {}]
  %s3 = inlined_call_operand.hbm [shape: bf16[8,1024], index: 3, kind: output, shape index: {}]
  %s4 = sld [smem:[#allocation0]]
  $region57: #{tpu_custom_call.1} parent=0
    _
  %s6 = ssub.s32 1, %s4
  %s7 = scalar_select 0, %s6, %s4
  $region1: #{tpu_custom_call.1} parent=0
    #allocation2 [shape = 'u8[65536]{0}', space=vmem, size = 0x10000, scoped, tag = 'input window, operand 0, single buffered']
    #allocation3 [shape = 's32[2]{0}', space=sflag, size = 0x8, scoped, tag = 'scoped memory for tpu_custom_call.1']
    #allocation4 [shape = 's32[2]{0}', space=sflag, size = 0x8, scoped, tag = 'scoped memory for tpu_custom_call.1']
    #allocation5 [shape = 'u8[8388608]{0}', space=vmem, size = 0x800000, scoped, tag = 'input window, operand 1']
    #allocation6 [shape = 's32[2]{0}', space=sflag, size = 0x8, scoped, tag = 'scoped memory for tpu_custom_call.1']
    #allocation7 [shape = 'u8[4096]{0}', space=vmem, size = 0x1000, scoped, tag = 'input window, operand 2']
    #allocation8 [shape = 'u8[16384]{0}', space=vmem, size = 0x4000, scoped, tag = 'output window, operand 0']
    %8 = vsyncpa [#allocation3], 0
    %9 = vsyncpa [#allocation6], 0
    %s10 = scalar_lea.sflag [#allocation6], 1
    %11 = vsyncpa %s10, 0
    %12 = vsyncpa [#allocation4], 0
    %s13 = scalar_lea.sflag [#allocation4], 1
    %14 = vsyncpa %s13, 0
    loop: start=0, step=1, limit=4
    $region2: #{tpu_custom_call.1} parent=1 // loop_pre_header
      _
    $region3: #{tpu_custom_call.1} parent=1 // loop_header
      %s16 = sphi 0, %s20
      %p17 = scmp.ge.s32.totalorder %s16, 4
      %s24 = sphi 0, %s24
      %s26 = sphi 0, %s24
      %s27 = sphi 0, %s26
      %s41 = sphi 0, %s27
      %s47 = sphi 0, %s49
      %s50 = sphi 0, %s47
      %s51 = sphi 0, %s50
      %s67 = sphi 0, %s51
      %s73 = sphi 0, %s75
      %s76 = sphi 0, %s73
      %s77 = sphi 0, %s76
      %s93 = sphi 0, %s77
      %s99 = sphi 0, %s101
      %s102 = sphi 0, %s99
      %s103 = sphi 0, %s102
      %s119 = sphi 0, %s103
    $region4: #{tpu_custom_call.1} parent=1 // loop_header_branch
      %19 = sbr.rel (%p17) target = $region8
    $region5: #{tpu_custom_call.1} parent=1 // loop_body
      %s21 = ssub.s32 %s16, 1
      %s22 = ssub.s32 %s16, 2
      %s23 = sadd.s32 %s16, 1
      %s25 = sadd.s32 %s24, 1
      %p28 = scmp.eq.s32.totalorder %s16, 1
      %p29 = scmp.ne.s32.totalorder %s24, %s26
      %p30 = scmp.eq.s32.totalorder %s16, 0
      %p31 = por %p29, %p30
      %p32 = scmp.ne.s32.totalorder %s24, %s26
      %p33 = scmp.eq.s32.totalorder %s21, 1
      %p34 = por %p32, %p33
      %p35 = scmp.ne.s32.totalorder %s26, %s27
      %p36 = scmp.eq.s32.totalorder %s21, 0
      %p37 = por %p35, %p36
      %p38 = scmp.ne.s32.totalorder %s26, %s27
      %p39 = scmp.eq.s32.totalorder %s22, 1
      %p40 = por %p38, %p39
      %p42 = scmp.ne.s32.totalorder %s27, %s41
      %p43 = scmp.eq.s32.totalorder %s22, 0
      %p44 = por %p42, %p43
      %s45 = ssub.s32 %s16, %s23
      %p46 = scmp.eq.s32.totalorder %s45, 0
      %s48 = sadd.s32 %s47, 1
      %s49 = scalar_select %p46, %s47, %s48
      %p52 = pneg %p46
      %p53 = scmp.eq.s32.totalorder %s16, 1
      %p54 = por %p52, %p53
      %p55 = scmp.ne.s32.totalorder %s47, %s50
      %p56 = scmp.eq.s32.totalorder %s16, 0
      %p57 = por %p55, %p56
      %p58 = scmp.ne.s32.totalorder %s47, %s50
      %p59 = scmp.eq.s32.totalorder %s21, 1
      %p60 = por %p58, %p59
      %p61 = scmp.ne.s32.totalorder %s50, %s51
      %p62 = scmp.eq.s32.totalorder %s21, 0
      %p63 = por %p61, %p62
      %p64 = scmp.ne.s32.totalorder %s50, %s51
      %p65 = scmp.eq.s32.totalorder %s22, 1
      %p66 = por %p64, %p65
      %p68 = scmp.ne.s32.totalorder %s51, %s67
      %p69 = scmp.eq.s32.totalorder %s22, 0
      %p70 = por %p68, %p69
      %s71 = ssub.s32 %s16, %s23
      %p72 = scmp.eq.s32.totalorder %s71, 0
      %s74 = sadd.s32 %s73, 1
      %s75 = scalar_select %p72, %s73, %s74
      %p78 = pneg %p72
      %p79 = scmp.eq.s32.totalorder %s16, 1
      %p80 = por %p78, %p79
      %p81 = scmp.ne.s32.totalorder %s73, %s76
      %p82 = scmp.eq.s32.totalorder %s16, 0
      %p83 = por %p81, %p82
      %p84 = scmp.ne.s32.totalorder %s73, %s76
      %p85 = scmp.eq.s32.totalorder %s21, 1
      %p86 = por %p84, %p85
      %p87 = scmp.ne.s32.totalorder %s76, %s77
      %p88 = scmp.eq.s32.totalorder %s21, 0
      %p89 = por %p87, %p88
      %p90 = scmp.ne.s32.totalorder %s76, %s77
      %p91 = scmp.eq.s32.totalorder %s22, 1
      %p92 = por %p90, %p91
      %p94 = scmp.ne.s32.totalorder %s77, %s93
      %p95 = scmp.eq.s32.totalorder %s22, 0
      %p96 = por %p94, %p95
      %s97 = ssub.s32 %s16, %s23
      %p98 = scmp.eq.s32.totalorder %s97, 0
      %s100 = sadd.s32 %s99, 1
      %s101 = scalar_select %p98, %s99, %s100
      %p104 = pneg %p98
      %p105 = scmp.eq.s32.totalorder %s16, 1
      %p106 = por %p104, %p105
      %p107 = scmp.ne.s32.totalorder %s99, %s102
      %p108 = scmp.eq.s32.totalorder %s16, 0
      %p109 = por %p107, %p108
      %p110 = scmp.ne.s32.totalorder %s99, %s102
      %p111 = scmp.eq.s32.totalorder %s21, 1
      %p112 = por %p110, %p111
      %p113 = scmp.ne.s32.totalorder %s102, %s103
      %p114 = scmp.eq.s32.totalorder %s21, 0
      %p115 = por %p113, %p114
      %p116 = scmp.ne.s32.totalorder %s102, %s103
      %p117 = scmp.eq.s32.totalorder %s22, 1
      %p118 = por %p116, %p117
      %p120 = scmp.ne.s32.totalorder %s103, %s119
      %p121 = scmp.eq.s32.totalorder %s22, 0
      %p122 = por %p120, %p121
      %p123 = scmp.le.s32.totalorder 1, %s16
      %p124 = scmp.lt.s32.totalorder %s16, 3
      %p125 = pnand %p123, %p124
      %p126 = pneg %p125
      // Predicated region
      $region9: #{tpu_custom_call.1} parent=5 // pred_check
        _
      $region10: #{tpu_custom_call.1} parent=5 // pred_check_branch
        %128 = sbr.rel (%p125) target = $region12
      $region11: #{tpu_custom_call.1} parent=5 // pred_region
        %s129 = ssub.s32 %s16, 1
        // Predicated region
        $region13: #{tpu_custom_call.1} parent=11 // pred_check
          %p130 = pneg %p37
        $region14: #{tpu_custom_call.1} parent=11 // pred_check_branch
          %132 = sbr.rel (%p130) target = $region16
        $region15: #{tpu_custom_call.1} parent=11 // pred_region
          %s134 = ssub.s32 2048, 2048
          %135 = vsyncadd [#allocation3], %s134
          %s137 = sshll.u32 [#allocation2], 4
          %s138 = int_to_ptr.vmem [resolvable:$true] %s137
          %140 = dma.hbm_to_vmem [thread:$0]  %s0, 2048, %s138, [#allocation3]
        $region16: #{tpu_custom_call.1} parent=11 // pred_fallthru
          _
      $region12: #{tpu_custom_call.1} parent=5 // pred_fallthru
        _
      %p141 = scmp.lt.s32.totalorder %s16, 2
      // Predicated region
      $region17: #{tpu_custom_call.1} parent=5 // pred_check
        %p142 = pneg %p141
      $region18: #{tpu_custom_call.1} parent=5 // pred_check_branch
        %144 = sbr.rel (%p142) target = $region20
      $region19: #{tpu_custom_call.1} parent=5 // pred_region
        // Predicated region
        $region21: #{tpu_custom_call.1} parent=19 // pred_check
          %p145 = pneg %p57
        $region22: #{tpu_custom_call.1} parent=19 // pred_check_branch
          %147 = sbr.rel (%p145) target = $region24
        $region23: #{tpu_custom_call.1} parent=19 // pred_region
          %s148 = sand.u32 %s16, 1
          %s149 = scalar_lea.sflag [#allocation6], %s148
          %s150 = sand.u32 %s47, 1
          %s151 = smul.addr %s150, 8192
          %s152 = scalar_lea.vmem [#allocation5], %s151
          %s153 = smul.u32 4, %s16
          %s155 = ssub.s32 131072, 131072
          %156 = vsyncadd %s149, %s155
          %s157 = smul.addr %s153, 64
          %s158 = scalar_lea.hbm %s1, %s157
          %s159 = sshll.u32 %s152, 4
          %s160 = int_to_ptr.vmem [resolvable:$true] %s159
          %165 = dma.hbm_to_vmem [thread:$0]  %s158, 131072, %s160, %s149, 512, 256, 16
        $region24: #{tpu_custom_call.1} parent=19 // pred_fallthru
          _
        // Predicated region
        $region25: #{tpu_custom_call.1} parent=19 // pred_check
          %p166 = pneg %p83
        $region26: #{tpu_custom_call.1} parent=19 // pred_check_branch
          %168 = sbr.rel (%p166) target = $region28
        $region27: #{tpu_custom_call.1} parent=19 // pred_region
          %s169 = sand.u32 %s16, 1
          %s170 = scalar_lea.sflag [#allocation6], %s169
          %s171 = sand.u32 %s73, 1
          %s172 = smul.addr %s171, 4
          %s173 = scalar_lea.vmem [#allocation7], %s172
          %s174 = smul.u32 4, %s16
          %s176 = ssub.s32 64, 64
          %177 = vsyncadd %s170, %s176
          %s178 = smul.addr %s174, 16
          %s179 = scalar_lea.hbm %s2, %s178
          %s181 = sshll.u32 %s173, 4
          %s182 = int_to_ptr.vmem [resolvable:$true] %s181
          %184 = dma.hbm_to_vmem [thread:$0]  %s179, 64, %s182, %s170
        $region28: #{tpu_custom_call.1} parent=19 // pred_fallthru
          _
      $region20: #{tpu_custom_call.1} parent=5 // pred_fallthru
        _
      %p185 = scmp.le.s32.totalorder 1, %s16
      %p186 = scmp.lt.s32.totalorder %s16, 3
      %p187 = pnand %p185, %p186
      %p188 = pneg %p187
      // Predicated region
      $region29: #{tpu_custom_call.1} parent=5 // pred_check
        _
      $region30: #{tpu_custom_call.1} parent=5 // pred_check_branch
        %190 = sbr.rel (%p187) target = $region32
      $region31: #{tpu_custom_call.1} parent=5 // pred_region
        %s191 = ssub.s32 %s16, 1
        // Predicated region
        $region33: #{tpu_custom_call.1} parent=31 // pred_check
          %p192 = pneg %p37
        $region34: #{tpu_custom_call.1} parent=31 // pred_check_branch
          %194 = sbr.rel (%p192) target = $region36
        $region35: #{tpu_custom_call.1} parent=31 // pred_region
          %195 = dma.done [#allocation3], 2048
        $region36: #{tpu_custom_call.1} parent=31 // pred_fallthru
          _
        %s196 = sand.u32 %s21, 1
        %s197 = scalar_lea.sflag [#allocation6], %s196
        %s198 = sand.u32 %s50, 1
        %s199 = smul.addr %s198, 8192
        %s200 = scalar_lea.vmem [#allocation5], %s199
        // Predicated region
        $region37: #{tpu_custom_call.1} parent=31 // pred_check
          %p201 = pneg %p63
        $region38: #{tpu_custom_call.1} parent=31 // pred_check_branch
          %203 = sbr.rel (%p201) target = $region40
        $region39: #{tpu_custom_call.1} parent=31 // pred_region
          %204 = dma.done %s197, 131072
        $region40: #{tpu_custom_call.1} parent=31 // pred_fallthru
          _
        %s205 = sand.u32 %s21, 1
        %s206 = scalar_lea.sflag [#allocation6], %s205
        %s207 = sand.u32 %s76, 1
        %s208 = smul.addr %s207, 4
        %s209 = scalar_lea.vmem [#allocation7], %s208
        // Predicated region
        $region41: #{tpu_custom_call.1} parent=31 // pred_check
          %p210 = pneg %p89
        $region42: #{tpu_custom_call.1} parent=31 // pred_check_branch
          %212 = sbr.rel (%p210) target = $region44
        $region43: #{tpu_custom_call.1} parent=31 // pred_region
          %213 = dma.done %s206, 64
        $region44: #{tpu_custom_call.1} parent=31 // pred_fallthru
          _
        %p214 = pneg %p37
        %p215 = pneg %p34
        %s216 = sand.u32 %s21, 1
        %s217 = scalar_lea.sflag [#allocation6], %s216
        %s218 = sand.u32 %s50, 1
        %s219 = smul.addr %s218, 8192
        %s220 = scalar_lea.vmem [#allocation5], %s219
        %p221 = pneg %p63
        %p222 = pneg %p60
        %s223 = sand.u32 %s21, 1
        %s224 = scalar_lea.sflag [#allocation6], %s223
        %s225 = sand.u32 %s76, 1
        %s226 = smul.addr %s225, 4
        %s227 = scalar_lea.vmem [#allocation7], %s226
        %p228 = pneg %p89
        %p229 = pneg %p86
        %p230 = pneg %p115
        %p231 = pneg %p112
        %s232 = sand.u32 %s102, 1
        %s233 = scalar_lea.sflag [#allocation4], %s232
        %s234 = sand.u32 %s102, 1
        %s235 = smul.addr %s234, 16
        %s236 = scalar_lea.vmem [#allocation8], %s235
        %s237 = smul.u32 4, %s21
        %s238 = smul.u32 4, %s21
        %s239 = smul.u32 4, %s21
        %v240 = vld [vmem:[#allocation2] sm:$0xff]
        %v241 = vld [vmem:[#allocation2 + $0x8] sm:$0xff]
        %v242 = vld [vmem:[#allocation2 + $0x10] sm:$0xff]
        %v243 = vld [vmem:[#allocation2 + $0x18] sm:$0xff]
        %v244 = vld [vmem:[#allocation2 + $0x20] sm:$0xff]
        %v245 = vld [vmem:[#allocation2 + $0x28] sm:$0xff]
        %v246 = vld [vmem:[#allocation2 + $0x30] sm:$0xff]
        %v247 = vld [vmem:[#allocation2 + $0x38] sm:$0xff]
        %v248 = vld [vmem:[#allocation2 + $0x40] sm:$0xff]
        %v249 = vld [vmem:[#allocation2 + $0x48] sm:$0xff]
        %v250 = vld [vmem:[#allocation2 + $0x50] sm:$0xff]
        %v251 = vld [vmem:[#allocation2 + $0x58] sm:$0xff]
        %v252 = vld [vmem:[#allocation2 + $0x60] sm:$0xff]
        %v253 = vld [vmem:[#allocation2 + $0x68] sm:$0xff]
        %v254 = vld [vmem:[#allocation2 + $0x70] sm:$0xff]
        %v255 = vld [vmem:[#allocation2 + $0x78] sm:$0xff]
        %v256 = vld [vmem:[%s200] sm:$0xff]
        %v257 = vld [vmem:[%s200 + $0x8] sm:$0xff]
        %v258 = vld [vmem:[%s200 + $0x10] sm:$0xff]
        %v259 = vld [vmem:[%s200 + $0x18] sm:$0xff]
        %v260 = vld [vmem:[%s200 + $0x20] sm:$0xff]
        %v261 = vld [vmem:[%s200 + $0x28] sm:$0xff]
        %v262 = vld [vmem:[%s200 + $0x30] sm:$0xff]
        %v263 = vld [vmem:[%s200 + $0x38] sm:$0xff]
        %v264 = vld [vmem:[%s200 + $0x40] sm:$0xff]
        %v265 = vld [vmem:[%s200 + $0x48] sm:$0xff]
        %v266 = vld [vmem:[%s200 + $0x50] sm:$0xff]
        %v267 = vld [vmem:[%s200 + $0x58] sm:$0xff]
        %v268 = vld [vmem:[%s200 + $0x60] sm:$0xff]
        %v269 = vld [vmem:[%s200 + $0x68] sm:$0xff]
        %v270 = vld [vmem:[%s200 + $0x70] sm:$0xff]
        %v271 = vld [vmem:[%s200 + $0x78] sm:$0xff]
        %v272 = vld [vmem:[%s200 + $0x80] sm:$0xff]
        %v273 = vld [vmem:[%s200 + $0x88] sm:$0xff]
        %v274 = vld [vmem:[%s200 + $0x90] sm:$0xff]
        %v275 = vld [vmem:[%s200 + $0x98] sm:$0xff]
        %v276 = vld [vmem:[%s200 + $0xa0] sm:$0xff]
        %v277 = vld [vmem:[%s200 + $0xa8] sm:$0xff]
        %v278 = vld [vmem:[%s200 + $0xb0] sm:$0xff]
        %v279 = vld [vmem:[%s200 + $0xb8] sm:$0xff]
        %v280 = vld [vmem:[%s200 + $0xc0] sm:$0xff]
        %v281 = vld [vmem:[%s200 + $0xc8] sm:$0xff]
        %v282 = vld [vmem:[%s200 + $0xd0] sm:$0xff]
        %v283 = vld [vmem:[%s200 + $0xd8] sm:$0xff]
        %v284 = vld [vmem:[%s200 + $0xe0] sm:$0xff]
        %v285 = vld [vmem:[%s200 + $0xe8] sm:$0xff]
        %v286 = vld [vmem:[%s200 + $0xf0] sm:$0xff]
        %v287 = vld [vmem:[%s200 + $0xf8] sm:$0xff]
        %v288 = vld [vmem:[%s200 + $0x100] sm:$0xff]
        %v289 = vld [vmem:[%s200 + $0x108] sm:$0xff]
        %v290 = vld [vmem:[%s200 + $0x110] sm:$0xff]
        %v291 = vld [vmem:[%s200 + $0x118] sm:$0xff]
        %v292 = vld [vmem:[%s200 + $0x120] sm:$0xff]
        %v293 = vld [vmem:[%s200 + $0x128] sm:$0xff]
        %v294 = vld [vmem:[%s200 + $0x130] sm:$0xff]
        %v295 = vld [vmem:[%s200 + $0x138] sm:$0xff]
        %v296 = vld [vmem:[%s200 + $0x140] sm:$0xff]
        %v297 = vld [vmem:[%s200 + $0x148] sm:$0xff]
        %v298 = vld [vmem:[%s200 + $0x150] sm:$0xff]
        %v299 = vld [vmem:[%s200 + $0x158] sm:$0xff]
        %v300 = vld [vmem:[%s200 + $0x160] sm:$0xff]
        %v301 = vld [vmem:[%s200 + $0x168] sm:$0xff]
        %v302 = vld [vmem:[%s200 + $0x170] sm:$0xff]
        %v303 = vld [vmem:[%s200 + $0x178] sm:$0xff]
        %v304 = vld [vmem:[%s200 + $0x180] sm:$0xff]
        %v305 = vld [vmem:[%s200 + $0x188] sm:$0xff]
        %v306 = vld [vmem:[%s200 + $0x190] sm:$0xff]
        %v307 = vld [vmem:[%s200 + $0x198] sm:$0xff]
        %v308 = vld [vmem:[%s200 + $0x1a0] sm:$0xff]
        %v309 = vld [vmem:[%s200 + $0x1a8] sm:$0xff]
        %v310 = vld [vmem:[%s200 + $0x1b0] sm:$0xff]
        %v311 = vld [vmem:[%s200 + $0x1b8] sm:$0xff]
        %v312 = vld [vmem:[%s200 + $0x1c0] sm:$0xff]
        %v313 = vld [vmem:[%s200 + $0x1c8] sm:$0xff]
        %v314 = vld [vmem:[%s200 + $0x1d0] sm:$0xff]
        %v315 = vld [vmem:[%s200 + $0x1d8] sm:$0xff]
        %v316 = vld [vmem:[%s200 + $0x1e0] sm:$0xff]
        %v317 = vld [vmem:[%s200 + $0x1e8] sm:$0xff]
        %v318 = vld [vmem:[%s200 + $0x1f0] sm:$0xff]
        %v319 = vld [vmem:[%s200 + $0x1f8] sm:$0xff]
        %v320 = vld [vmem:[%s200 + $0x200] sm:$0xff]
        %v321 = vld [vmem:[%s200 + $0x208] sm:$0xff]
        %v322 = vld [vmem:[%s200 + $0x210] sm:$0xff]
        %v323 = vld [vmem:[%s200 + $0x218] sm:$0xff]
        %v324 = vld [vmem:[%s200 + $0x220] sm:$0xff]
        %v325 = vld [vmem:[%s200 + $0x228] sm:$0xff]
        %v326 = vld [vmem:[%s200 + $0x230] sm:$0xff]
        %v327 = vld [vmem:[%s200 + $0x238] sm:$0xff]
        %v328 = vld [vmem:[%s200 + $0x240] sm:$0xff]
        %v329 = vld [vmem:[%s200 + $0x248] sm:$0xff]
        %v330 = vld [vmem:[%s200 + $0x250] sm:$0xff]
        %v331 = vld [vmem:[%s200 + $0x258] sm:$0xff]
        %v332 = vld [vmem:[%s200 + $0x260] sm:$0xff]
        %v333 = vld [vmem:[%s200 + $0x268] sm:$0xff]
        %v334 = vld [vmem:[%s200 + $0x270] sm:$0xff]
        %v335 = vld [vmem:[%s200 + $0x278] sm:$0xff]
        %v336 = vld [vmem:[%s200 + $0x280] sm:$0xff]
        %v337 = vld [vmem:[%s200 + $0x288] sm:$0xff]
        %v338 = vld [vmem:[%s200 + $0x290] sm:$0xff]
        %v339 = vld [vmem:[%s200 + $0x298] sm:$0xff]
        %v340 = vld [vmem:[%s200 + $0x2a0] sm:$0xff]
        %v341 = vld [vmem:[%s200 + $0x2a8] sm:$0xff]
        %v342 = vld [vmem:[%s200 + $0x2b0] sm:$0xff]
        %v343 = vld [vmem:[%s200 + $0x2b8] sm:$0xff]
        %v344 = vld [vmem:[%s200 + $0x2c0] sm:$0xff]
        %v345 = vld [vmem:[%s200 + $0x2c8] sm:$0xff]
        %v346 = vld [vmem:[%s200 + $0x2d0] sm:$0xff]
        %v347 = vld [vmem:[%s200 + $0x2d8] sm:$0xff]
        %v348 = vld [vmem:[%s200 + $0x2e0] sm:$0xff]
        %v349 = vld [vmem:[%s200 + $0x2e8] sm:$0xff]
        %v350 = vld [vmem:[%s200 + $0x2f0] sm:$0xff]
        %v351 = vld [vmem:[%s200 + $0x2f8] sm:$0xff]
        %v352 = vld [vmem:[%s200 + $0x300] sm:$0xff]
        %v353 = vld [vmem:[%s200 + $0x308] sm:$0xff]
        %v354 = vld [vmem:[%s200 + $0x310] sm:$0xff]
        %v355 = vld [vmem:[%s200 + $0x318] sm:$0xff]
        %v356 = vld [vmem:[%s200 + $0x320] sm:$0xff]
        %v357 = vld [vmem:[%s200 + $0x328] sm:$0xff]
        %v358 = vld [vmem:[%s200 + $0x330] sm:$0xff]
        %v359 = vld [vmem:[%s200 + $0x338] sm:$0xff]
        %v360 = vld [vmem:[%s200 + $0x340] sm:$0xff]
        %v361 = vld [vmem:[%s200 + $0x348] sm:$0xff]
        %v362 = vld [vmem:[%s200 + $0x350] sm:$0xff]
        %v363 = vld [vmem:[%s200 + $0x358] sm:$0xff]
        %v364 = vld [vmem:[%s200 + $0x360] sm:$0xff]
        %v365 = vld [vmem:[%s200 + $0x368] sm:$0xff]
        %v366 = vld [vmem:[%s200 + $0x370] sm:$0xff]
        %v367 = vld [vmem:[%s200 + $0x378] sm:$0xff]
        %v368 = vld [vmem:[%s200 + $0x380] sm:$0xff]
        %v369 = vld [vmem:[%s200 + $0x388] sm:$0xff]
        %v370 = vld [vmem:[%s200 + $0x390] sm:$0xff]
        %v371 = vld [vmem:[%s200 + $0x398] sm:$0xff]
        %v372 = vld [vmem:[%s200 + $0x3a0] sm:$0xff]
        %v373 = vld [vmem:[%s200 + $0x3a8] sm:$0xff]
        %v374 = vld [vmem:[%s200 + $0x3b0] sm:$0xff]
        %v375 = vld [vmem:[%s200 + $0x3b8] sm:$0xff]
        %v376 = vld [vmem:[%s200 + $0x3c0] sm:$0xff]
        %v377 = vld [vmem:[%s200 + $0x3c8] sm:$0xff]
        %v378 = vld [vmem:[%s200 + $0x3d0] sm:$0xff]
        %v379 = vld [vmem:[%s200 + $0x3d8] sm:$0xff]
        %v380 = vld [vmem:[%s200 + $0x3e0] sm:$0xff]
        %v381 = vld [vmem:[%s200 + $0x3e8] sm:$0xff]
        %v382 = vld [vmem:[%s200 + $0x3f0] sm:$0xff]
        %v383 = vld [vmem:[%s200 + $0x3f8] sm:$0xff]
        %v384 = vld [vmem:[%s200 + $0x400] sm:$0xff]
        %v385 = vld [vmem:[%s200 + $0x408] sm:$0xff]
        %v386 = vld [vmem:[%s200 + $0x410] sm:$0xff]
        %v387 = vld [vmem:[%s200 + $0x418] sm:$0xff]
        %v388 = vld [vmem:[%s200 + $0x420] sm:$0xff]
        %v389 = vld [vmem:[%s200 + $0x428] sm:$0xff]
        %v390 = vld [vmem:[%s200 + $0x430] sm:$0xff]
        %v391 = vld [vmem:[%s200 + $0x438] sm:$0xff]
        %v392 = vld [vmem:[%s200 + $0x440] sm:$0xff]
        %v393 = vld [vmem:[%s200 + $0x448] sm:$0xff]
        %v394 = vld [vmem:[%s200 + $0x450] sm:$0xff]
        %v395 = vld [vmem:[%s200 + $0x458] sm:$0xff]
        %v396 = vld [vmem:[%s200 + $0x460] sm:$0xff]
        %v397 = vld [vmem:[%s200 + $0x468] sm:$0xff]
        %v398 = vld [vmem:[%s200 + $0x470] sm:$0xff]
        %v399 = vld [vmem:[%s200 + $0x478] sm:$0xff]
        %v400 = vld [vmem:[%s200 + $0x480] sm:$0xff]
        %v401 = vld [vmem:[%s200 + $0x488] sm:$0xff]
        %v402 = vld [vmem:[%s200 + $0x490] sm:$0xff]
        %v403 = vld [vmem:[%s200 + $0x498] sm:$0xff]
        %v404 = vld [vmem:[%s200 + $0x4a0] sm:$0xff]
        %v405 = vld [vmem:[%s200 + $0x4a8] sm:$0xff]
        %v406 = vld [vmem:[%s200 + $0x4b0] sm:$0xff]
        %v407 = vld [vmem:[%s200 + $0x4b8] sm:$0xff]
        %v408 = vld [vmem:[%s200 + $0x4c0] sm:$0xff]
        %v409 = vld [vmem:[%s200 + $0x4c8] sm:$0xff]
        %v410 = vld [vmem:[%s200 + $0x4d0] sm:$0xff]
        %v411 = vld [vmem:[%s200 + $0x4d8] sm:$0xff]
        %v412 = vld [vmem:[%s200 + $0x4e0] sm:$0xff]
        %v413 = vld [vmem:[%s200 + $0x4e8] sm:$0xff]
        %v414 = vld [vmem:[%s200 + $0x4f0] sm:$0xff]
        %v415 = vld [vmem:[%s200 + $0x4f8] sm:$0xff]
        %v416 = vld [vmem:[%s200 + $0x500] sm:$0xff]
        %v417 = vld [vmem:[%s200 + $0x508] sm:$0xff]
        %v418 = vld [vmem:[%s200 + $0x510] sm:$0xff]
        %v419 = vld [vmem:[%s200 + $0x518] sm:$0xff]
        %v420 = vld [vmem:[%s200 + $0x520] sm:$0xff]
        %v421 = vld [vmem:[%s200 + $0x528] sm:$0xff]
        %v422 = vld [vmem:[%s200 + $0x530] sm:$0xff]
        %v423 = vld [vmem:[%s200 + $0x538] sm:$0xff]
        %v424 = vld [vmem:[%s200 + $0x540] sm:$0xff]
        %v425 = vld [vmem:[%s200 + $0x548] sm:$0xff]
        %v426 = vld [vmem:[%s200 + $0x550] sm:$0xff]
        %v427 = vld [vmem:[%s200 + $0x558] sm:$0xff]
        %v428 = vld [vmem:[%s200 + $0x560] sm:$0xff]
        %v429 = vld [vmem:[%s200 + $0x568] sm:$0xff]
        %v430 = vld [vmem:[%s200 + $0x570] sm:$0xff]
        %v431 = vld [vmem:[%s200 + $0x578] sm:$0xff]
        %v432 = vld [vmem:[%s200 + $0x580] sm:$0xff]
        %v433 = vld [vmem:[%s200 + $0x588] sm:$0xff]
        %v434 = vld [vmem:[%s200 + $0x590] sm:$0xff]
        %v435 = vld [vmem:[%s200 + $0x598] sm:$0xff]
        %v436 = vld [vmem:[%s200 + $0x5a0] sm:$0xff]
        %v437 = vld [vmem:[%s200 + $0x5a8] sm:$0xff]
        %v438 = vld [vmem:[%s200 + $0x5b0] sm:$0xff]
        %v439 = vld [vmem:[%s200 + $0x5b8] sm:$0xff]
        %v440 = vld [vmem:[%s200 + $0x5c0] sm:$0xff]
        %v441 = vld [vmem:[%s200 + $0x5c8] sm:$0xff]
        %v442 = vld [vmem:[%s200 + $0x5d0] sm:$0xff]
        %v443 = vld [vmem:[%s200 + $0x5d8] sm:$0xff]
        %v444 = vld [vmem:[%s200 + $0x5e0] sm:$0xff]
        %v445 = vld [vmem:[%s200 + $0x5e8] sm:$0xff]
        %v446 = vld [vmem:[%s200 + $0x5f0] sm:$0xff]
        %v447 = vld [vmem:[%s200 + $0x5f8] sm:$0xff]
        %v448 = vld [vmem:[%s200 + $0x600] sm:$0xff]
        %v449 = vld [vmem:[%s200 + $0x608] sm:$0xff]
        %v450 = vld [vmem:[%s200 + $0x610] sm:$0xff]
        %v451 = vld [vmem:[%s200 + $0x618] sm:$0xff]
        %v452 = vld [vmem:[%s200 + $0x620] sm:$0xff]
        %v453 = vld [vmem:[%s200 + $0x628] sm:$0xff]
        %v454 = vld [vmem:[%s200 + $0x630] sm:$0xff]
        %v455 = vld [vmem:[%s200 + $0x638] sm:$0xff]
        %v456 = vld [vmem:[%s200 + $0x640] sm:$0xff]
        %v457 = vld [vmem:[%s200 + $0x648] sm:$0xff]
        %v458 = vld [vmem:[%s200 + $0x650] sm:$0xff]
        %v459 = vld [vmem:[%s200 + $0x658] sm:$0xff]
        %v460 = vld [vmem:[%s200 + $0x660] sm:$0xff]
        %v461 = vld [vmem:[%s200 + $0x668] sm:$0xff]
        %v462 = vld [vmem:[%s200 + $0x670] sm:$0xff]
        %v463 = vld [vmem:[%s200 + $0x678] sm:$0xff]
        %v464 = vld [vmem:[%s200 + $0x680] sm:$0xff]
        %v465 = vld [vmem:[%s200 + $0x688] sm:$0xff]
        %v466 = vld [vmem:[%s200 + $0x690] sm:$0xff]
        %v467 = vld [vmem:[%s200 + $0x698] sm:$0xff]
        %v468 = vld [vmem:[%s200 + $0x6a0] sm:$0xff]
        %v469 = vld [vmem:[%s200 + $0x6a8] sm:$0xff]
        %v470 = vld [vmem:[%s200 + $0x6b0] sm:$0xff]
        %v471 = vld [vmem:[%s200 + $0x6b8] sm:$0xff]
        %v472 = vld [vmem:[%s200 + $0x6c0] sm:$0xff]
        %v473 = vld [vmem:[%s200 + $0x6c8] sm:$0xff]
        %v474 = vld [vmem:[%s200 + $0x6d0] sm:$0xff]
        %v475 = vld [vmem:[%s200 + $0x6d8] sm:$0xff]
        %v476 = vld [vmem:[%s200 + $0x6e0] sm:$0xff]
        %v477 = vld [vmem:[%s200 + $0x6e8] sm:$0xff]
        %v478 = vld [vmem:[%s200 + $0x6f0] sm:$0xff]
        %v479 = vld [vmem:[%s200 + $0x6f8] sm:$0xff]
        %v480 = vld [vmem:[%s200 + $0x700] sm:$0xff]
        %v481 = vld [vmem:[%s200 + $0x708] sm:$0xff]
        %v482 = vld [vmem:[%s200 + $0x710] sm:$0xff]
        %v483 = vld [vmem:[%s200 + $0x718] sm:$0xff]
        %v484 = vld [vmem:[%s200 + $0x720] sm:$0xff]
        %v485 = vld [vmem:[%s200 + $0x728] sm:$0xff]
        %v486 = vld [vmem:[%s200 + $0x730] sm:$0xff]
        %v487 = vld [vmem:[%s200 + $0x738] sm:$0xff]
        %v488 = vld [vmem:[%s200 + $0x740] sm:$0xff]
        %v489 = vld [vmem:[%s200 + $0x748] sm:$0xff]
        %v490 = vld [vmem:[%s200 + $0x750] sm:$0xff]
        %v491 = vld [vmem:[%s200 + $0x758] sm:$0xff]
        %v492 = vld [vmem:[%s200 + $0x760] sm:$0xff]
        %v493 = vld [vmem:[%s200 + $0x768] sm:$0xff]
        %v494 = vld [vmem:[%s200 + $0x770] sm:$0xff]
        %v495 = vld [vmem:[%s200 + $0x778] sm:$0xff]
        %v496 = vld [vmem:[%s200 + $0x780] sm:$0xff]
        %v497 = vld [vmem:[%s200 + $0x788] sm:$0xff]
        %v498 = vld [vmem:[%s200 + $0x790] sm:$0xff]
        %v499 = vld [vmem:[%s200 + $0x798] sm:$0xff]
        %v500 = vld [vmem:[%s200 + $0x7a0] sm:$0xff]
        %v501 = vld [vmem:[%s200 + $0x7a8] sm:$0xff]
        %v502 = vld [vmem:[%s200 + $0x7b0] sm:$0xff]
        %v503 = vld [vmem:[%s200 + $0x7b8] sm:$0xff]
        %v504 = vld [vmem:[%s200 + $0x7c0] sm:$0xff]
        %v505 = vld [vmem:[%s200 + $0x7c8] sm:$0xff]
        %v506 = vld [vmem:[%s200 + $0x7d0] sm:$0xff]
        %v507 = vld [vmem:[%s200 + $0x7d8] sm:$0xff]
        %v508 = vld [vmem:[%s200 + $0x7e0] sm:$0xff]
        %v509 = vld [vmem:[%s200 + $0x7e8] sm:$0xff]
        %v510 = vld [vmem:[%s200 + $0x7f0] sm:$0xff]
        %v511 = vld [vmem:[%s200 + $0x7f8] sm:$0xff]
        %v512 = vld [vmem:[%s200 + $0x800] sm:$0xff]
        %v513 = vld [vmem:[%s200 + $0x808] sm:$0xff]
        %v514 = vld [vmem:[%s200 + $0x810] sm:$0xff]
        %v515 = vld [vmem:[%s200 + $0x818] sm:$0xff]
        %v516 = vld [vmem:[%s200 + $0x820] sm:$0xff]
        %v517 = vld [vmem:[%s200 + $0x828] sm:$0xff]
        %v518 = vld [vmem:[%s200 + $0x830] sm:$0xff]
        %v519 = vld [vmem:[%s200 + $0x838] sm:$0xff]
        %v520 = vld [vmem:[%s200 + $0x840] sm:$0xff]
        %v521 = vld [vmem:[%s200 + $0x848] sm:$0xff]
        %v522 = vld [vmem:[%s200 + $0x850] sm:$0xff]
        %v523 = vld [vmem:[%s200 + $0x858] sm:$0xff]
        %v524 = vld [vmem:[%s200 + $0x860] sm:$0xff]
        %v525 = vld [vmem:[%s200 + $0x868] sm:$0xff]
        %v526 = vld [vmem:[%s200 + $0x870] sm:$0xff]
        %v527 = vld [vmem:[%s200 + $0x878] sm:$0xff]
        %v528 = vld [vmem:[%s200 + $0x880] sm:$0xff]
        %v529 = vld [vmem:[%s200 + $0x888] sm:$0xff]
        %v530 = vld [vmem:[%s200 + $0x890] sm:$0xff]
        %v531 = vld [vmem:[%s200 + $0x898] sm:$0xff]
        %v532 = vld [vmem:[%s200 + $0x8a0] sm:$0xff]
        %v533 = vld [vmem:[%s200 + $0x8a8] sm:$0xff]
        %v534 = vld [vmem:[%s200 + $0x8b0] sm:$0xff]
        %v535 = vld [vmem:[%s200 + $0x8b8] sm:$0xff]
        %v536 = vld [vmem:[%s200 + $0x8c0] sm:$0xff]
        %v537 = vld [vmem:[%s200 + $0x8c8] sm:$0xff]
        %v538 = vld [vmem:[%s200 + $0x8d0] sm:$0xff]
        %v539 = vld [vmem:[%s200 + $0x8d8] sm:$0xff]
        %v540 = vld [vmem:[%s200 + $0x8e0] sm:$0xff]
        %v541 = vld [vmem:[%s200 + $0x8e8] sm:$0xff]
        %v542 = vld [vmem:[%s200 + $0x8f0] sm:$0xff]
        %v543 = vld [vmem:[%s200 + $0x8f8] sm:$0xff]
        %v544 = vld [vmem:[%s200 + $0x900] sm:$0xff]
        %v545 = vld [vmem:[%s200 + $0x908] sm:$0xff]
        %v546 = vld [vmem:[%s200 + $0x910] sm:$0xff]
        %v547 = vld [vmem:[%s200 + $0x918] sm:$0xff]
        %v548 = vld [vmem:[%s200 + $0x920] sm:$0xff]
        %v549 = vld [vmem:[%s200 + $0x928] sm:$0xff]
        %v550 = vld [vmem:[%s200 + $0x930] sm:$0xff]
        %v551 = vld [vmem:[%s200 + $0x938] sm:$0xff]
        %v552 = vld [vmem:[%s200 + $0x940] sm:$0xff]
        %v553 = vld [vmem:[%s200 + $0x948] sm:$0xff]
        %v554 = vld [vmem:[%s200 + $0x950] sm:$0xff]
        %v555 = vld [vmem:[%s200 + $0x958] sm:$0xff]
        %v556 = vld [vmem:[%s200 + $0x960] sm:$0xff]
        %v557 = vld [vmem:[%s200 + $0x968] sm:$0xff]
        %v558 = vld [vmem:[%s200 + $0x970] sm:$0xff]
        %v559 = vld [vmem:[%s200 + $0x978] sm:$0xff]
        %v560 = vld [vmem:[%s200 + $0x980] sm:$0xff]
        %v561 = vld [vmem:[%s200 + $0x988] sm:$0xff]
        %v562 = vld [vmem:[%s200 + $0x990] sm:$0xff]
        %v563 = vld [vmem:[%s200 + $0x998] sm:$0xff]
        %v564 = vld [vmem:[%s200 + $0x9a0] sm:$0xff]
        %v565 = vld [vmem:[%s200 + $0x9a8] sm:$0xff]
        %v566 = vld [vmem:[%s200 + $0x9b0] sm:$0xff]
        %v567 = vld [vmem:[%s200 + $0x9b8] sm:$0xff]
        %v568 = vld [vmem:[%s200 + $0x9c0] sm:$0xff]
        %v569 = vld [vmem:[%s200 + $0x9c8] sm:$0xff]
        %v570 = vld [vmem:[%s200 + $0x9d0] sm:$0xff]
        %v571 = vld [vmem:[%s200 + $0x9d8] sm:$0xff]
        %v572 = vld [vmem:[%s200 + $0x9e0] sm:$0xff]
        %v573 = vld [vmem:[%s200 + $0x9e8] sm:$0xff]
        %v574 = vld [vmem:[%s200 + $0x9f0] sm:$0xff]
        %v575 = vld [vmem:[%s200 + $0x9f8] sm:$0xff]
        %v576 = vld [vmem:[%s200 + $0xa00] sm:$0xff]
        %v577 = vld [vmem:[%s200 + $0xa08] sm:$0xff]
        %v578 = vld [vmem:[%s200 + $0xa10] sm:$0xff]
        %v579 = vld [vmem:[%s200 + $0xa18] sm:$0xff]
        %v580 = vld [vmem:[%s200 + $0xa20] sm:$0xff]
        %v581 = vld [vmem:[%s200 + $0xa28] sm:$0xff]
        %v582 = vld [vmem:[%s200 + $0xa30] sm:$0xff]
        %v583 = vld [vmem:[%s200 + $0xa38] sm:$0xff]
        %v584 = vld [vmem:[%s200 + $0xa40] sm:$0xff]
        %v585 = vld [vmem:[%s200 + $0xa48] sm:$0xff]
        %v586 = vld [vmem:[%s200 + $0xa50] sm:$0xff]
        %v587 = vld [vmem:[%s200 + $0xa58] sm:$0xff]
        %v588 = vld [vmem:[%s200 + $0xa60] sm:$0xff]
        %v589 = vld [vmem:[%s200 + $0xa68] sm:$0xff]
        %v590 = vld [vmem:[%s200 + $0xa70] sm:$0xff]
        %v591 = vld [vmem:[%s200 + $0xa78] sm:$0xff]
        %v592 = vld [vmem:[%s200 + $0xa80] sm:$0xff]
        %v593 = vld [vmem:[%s200 + $0xa88] sm:$0xff]
        %v594 = vld [vmem:[%s200 + $0xa90] sm:$0xff]
        %v595 = vld [vmem:[%s200 + $0xa98] sm:$0xff]
        %v596 = vld [vmem:[%s200 + $0xaa0] sm:$0xff]
        %v597 = vld [vmem:[%s200 + $0xaa8] sm:$0xff]
        %v598 = vld [vmem:[%s200 + $0xab0] sm:$0xff]
        %v599 = vld [vmem:[%s200 + $0xab8] sm:$0xff]
        %v600 = vld [vmem:[%s200 + $0xac0] sm:$0xff]
        %v601 = vld [vmem:[%s200 + $0xac8] sm:$0xff]
        %v602 = vld [vmem:[%s200 + $0xad0] sm:$0xff]
        %v603 = vld [vmem:[%s200 + $0xad8] sm:$0xff]
        %v604 = vld [vmem:[%s200 + $0xae0] sm:$0xff]
        %v605 = vld [vmem:[%s200 + $0xae8] sm:$0xff]
        %v606 = vld [vmem:[%s200 + $0xaf0] sm:$0xff]
        %v607 = vld [vmem:[%s200 + $0xaf8] sm:$0xff]
        %v608 = vld [vmem:[%s200 + $0xb00] sm:$0xff]
        %v609 = vld [vmem:[%s200 + $0xb08] sm:$0xff]
        %v610 = vld [vmem:[%s200 + $0xb10] sm:$0xff]
        %v611 = vld [vmem:[%s200 + $0xb18] sm:$0xff]
        %v612 = vld [vmem:[%s200 + $0xb20] sm:$0xff]
        %v613 = vld [vmem:[%s200 + $0xb28] sm:$0xff]
        %v614 = vld [vmem:[%s200 + $0xb30] sm:$0xff]
        %v615 = vld [vmem:[%s200 + $0xb38] sm:$0xff]
        %v616 = vld [vmem:[%s200 + $0xb40] sm:$0xff]
        %v617 = vld [vmem:[%s200 + $0xb48] sm:$0xff]
        %v618 = vld [vmem:[%s200 + $0xb50] sm:$0xff]
        %v619 = vld [vmem:[%s200 + $0xb58] sm:$0xff]
        %v620 = vld [vmem:[%s200 + $0xb60] sm:$0xff]
        %v621 = vld [vmem:[%s200 + $0xb68] sm:$0xff]
        %v622 = vld [vmem:[%s200 + $0xb70] sm:$0xff]
        %v623 = vld [vmem:[%s200 + $0xb78] sm:$0xff]
        %v624 = vld [vmem:[%s200 + $0xb80] sm:$0xff]
        %v625 = vld [vmem:[%s200 + $0xb88] sm:$0xff]
        %v626 = vld [vmem:[%s200 + $0xb90] sm:$0xff]
        %v627 = vld [vmem:[%s200 + $0xb98] sm:$0xff]
        %v628 = vld [vmem:[%s200 + $0xba0] sm:$0xff]
        %v629 = vld [vmem:[%s200 + $0xba8] sm:$0xff]
        %v630 = vld [vmem:[%s200 + $0xbb0] sm:$0xff]
        %v631 = vld [vmem:[%s200 + $0xbb8] sm:$0xff]
        %v632 = vld [vmem:[%s200 + $0xbc0] sm:$0xff]
        %v633 = vld [vmem:[%s200 + $0xbc8] sm:$0xff]
        %v634 = vld [vmem:[%s200 + $0xbd0] sm:$0xff]
        %v635 = vld [vmem:[%s200 + $0xbd8] sm:$0xff]
        %v636 = vld [vmem:[%s200 + $0xbe0] sm:$0xff]
        %v637 = vld [vmem:[%s200 + $0xbe8] sm:$0xff]
        %v638 = vld [vmem:[%s200 + $0xbf0] sm:$0xff]
        %v639 = vld [vmem:[%s200 + $0xbf8] sm:$0xff]
        %v640 = vld [vmem:[%s200 + $0xc00] sm:$0xff]
        %v641 = vld [vmem:[%s200 + $0xc08] sm:$0xff]
        %v642 = vld [vmem:[%s200 + $0xc10] sm:$0xff]
        %v643 = vld [vmem:[%s200 + $0xc18] sm:$0xff]
        %v644 = vld [vmem:[%s200 + $0xc20] sm:$0xff]
        %v645 = vld [vmem:[%s200 + $0xc28] sm:$0xff]
        %v646 = vld [vmem:[%s200 + $0xc30] sm:$0xff]
        %v647 = vld [vmem:[%s200 + $0xc38] sm:$0xff]
        %v648 = vld [vmem:[%s200 + $0xc40] sm:$0xff]
        %v649 = vld [vmem:[%s200 + $0xc48] sm:$0xff]
        %v650 = vld [vmem:[%s200 + $0xc50] sm:$0xff]
        %v651 = vld [vmem:[%s200 + $0xc58] sm:$0xff]
        %v652 = vld [vmem:[%s200 + $0xc60] sm:$0xff]
        %v653 = vld [vmem:[%s200 + $0xc68] sm:$0xff]
        %v654 = vld [vmem:[%s200 + $0xc70] sm:$0xff]
        %v655 = vld [vmem:[%s200 + $0xc78] sm:$0xff]
        %v656 = vld [vmem:[%s200 + $0xc80] sm:$0xff]
        %v657 = vld [vmem:[%s200 + $0xc88] sm:$0xff]
        %v658 = vld [vmem:[%s200 + $0xc90] sm:$0xff]
        %v659 = vld [vmem:[%s200 + $0xc98] sm:$0xff]
        %v660 = vld [vmem:[%s200 + $0xca0] sm:$0xff]
        %v661 = vld [vmem:[%s200 + $0xca8] sm:$0xff]
        %v662 = vld [vmem:[%s200 + $0xcb0] sm:$0xff]
        %v663 = vld [vmem:[%s200 + $0xcb8] sm:$0xff]
        %v664 = vld [vmem:[%s200 + $0xcc0] sm:$0xff]
        %v665 = vld [vmem:[%s200 + $0xcc8] sm:$0xff]
        %v666 = vld [vmem:[%s200 + $0xcd0] sm:$0xff]
        %v667 = vld [vmem:[%s200 + $0xcd8] sm:$0xff]
        %v668 = vld [vmem:[%s200 + $0xce0] sm:$0xff]
        %v669 = vld [vmem:[%s200 + $0xce8] sm:$0xff]
        %v670 = vld [vmem:[%s200 + $0xcf0] sm:$0xff]
        %v671 = vld [vmem:[%s200 + $0xcf8] sm:$0xff]
        %v672 = vld [vmem:[%s200 + $0xd00] sm:$0xff]
        %v673 = vld [vmem:[%s200 + $0xd08] sm:$0xff]
        %v674 = vld [vmem:[%s200 + $0xd10] sm:$0xff]
        %v675 = vld [vmem:[%s200 + $0xd18] sm:$0xff]
        %v676 = vld [vmem:[%s200 + $0xd20] sm:$0xff]
        %v677 = vld [vmem:[%s200 + $0xd28] sm:$0xff]
        %v678 = vld [vmem:[%s200 + $0xd30] sm:$0xff]
        %v679 = vld [vmem:[%s200 + $0xd38] sm:$0xff]
        %v680 = vld [vmem:[%s200 + $0xd40] sm:$0xff]
        %v681 = vld [vmem:[%s200 + $0xd48] sm:$0xff]
        %v682 = vld [vmem:[%s200 + $0xd50] sm:$0xff]
        %v683 = vld [vmem:[%s200 + $0xd58] sm:$0xff]
        %v684 = vld [vmem:[%s200 + $0xd60] sm:$0xff]
        %v685 = vld [vmem:[%s200 + $0xd68] sm:$0xff]
        %v686 = vld [vmem:[%s200 + $0xd70] sm:$0xff]
        %v687 = vld [vmem:[%s200 + $0xd78] sm:$0xff]
        %v688 = vld [vmem:[%s200 + $0xd80] sm:$0xff]
        %v689 = vld [vmem:[%s200 + $0xd88] sm:$0xff]
        %v690 = vld [vmem:[%s200 + $0xd90] sm:$0xff]
        %v691 = vld [vmem:[%s200 + $0xd98] sm:$0xff]
        %v692 = vld [vmem:[%s200 + $0xda0] sm:$0xff]
        %v693 = vld [vmem:[%s200 + $0xda8] sm:$0xff]
        %v694 = vld [vmem:[%s200 + $0xdb0] sm:$0xff]
        %v695 = vld [vmem:[%s200 + $0xdb8] sm:$0xff]
        %v696 = vld [vmem:[%s200 + $0xdc0] sm:$0xff]
        %v697 = vld [vmem:[%s200 + $0xdc8] sm:$0xff]
        %v698 = vld [vmem:[%s200 + $0xdd0] sm:$0xff]
        %v699 = vld [vmem:[%s200 + $0xdd8] sm:$0xff]
        %v700 = vld [vmem:[%s200 + $0xde0] sm:$0xff]
        %v701 = vld [vmem:[%s200 + $0xde8] sm:$0xff]
        %v702 = vld [vmem:[%s200 + $0xdf0] sm:$0xff]
        %v703 = vld [vmem:[%s200 + $0xdf8] sm:$0xff]
        %v704 = vld [vmem:[%s200 + $0xe00] sm:$0xff]
        %v705 = vld [vmem:[%s200 + $0xe08] sm:$0xff]
        %v706 = vld [vmem:[%s200 + $0xe10] sm:$0xff]
        %v707 = vld [vmem:[%s200 + $0xe18] sm:$0xff]
        %v708 = vld [vmem:[%s200 + $0xe20] sm:$0xff]
        %v709 = vld [vmem:[%s200 + $0xe28] sm:$0xff]
        %v710 = vld [vmem:[%s200 + $0xe30] sm:$0xff]
        %v711 = vld [vmem:[%s200 + $0xe38] sm:$0xff]
        %v712 = vld [vmem:[%s200 + $0xe40] sm:$0xff]
        %v713 = vld [vmem:[%s200 + $0xe48] sm:$0xff]
        %v714 = vld [vmem:[%s200 + $0xe50] sm:$0xff]
        %v715 = vld [vmem:[%s200 + $0xe58] sm:$0xff]
        %v716 = vld [vmem:[%s200 + $0xe60] sm:$0xff]
        %v717 = vld [vmem:[%s200 + $0xe68] sm:$0xff]
        %v718 = vld [vmem:[%s200 + $0xe70] sm:$0xff]
        %v719 = vld [vmem:[%s200 + $0xe78] sm:$0xff]
        %v720 = vld [vmem:[%s200 + $0xe80] sm:$0xff]
        %v721 = vld [vmem:[%s200 + $0xe88] sm:$0xff]
        %v722 = vld [vmem:[%s200 + $0xe90] sm:$0xff]
        %v723 = vld [vmem:[%s200 + $0xe98] sm:$0xff]
        %v724 = vld [vmem:[%s200 + $0xea0] sm:$0xff]
        %v725 = vld [vmem:[%s200 + $0xea8] sm:$0xff]
        %v726 = vld [vmem:[%s200 + $0xeb0] sm:$0xff]
        %v727 = vld [vmem:[%s200 + $0xeb8] sm:$0xff]
        %v728 = vld [vmem:[%s200 + $0xec0] sm:$0xff]
        %v729 = vld [vmem:[%s200 + $0xec8] sm:$0xff]
        %v730 = vld [vmem:[%s200 + $0xed0] sm:$0xff]
        %v731 = vld [vmem:[%s200 + $0xed8] sm:$0xff]
        %v732 = vld [vmem:[%s200 + $0xee0] sm:$0xff]
        %v733 = vld [vmem:[%s200 + $0xee8] sm:$0xff]
        %v734 = vld [vmem:[%s200 + $0xef0] sm:$0xff]
        %v735 = vld [vmem:[%s200 + $0xef8] sm:$0xff]
        %v736 = vld [vmem:[%s200 + $0xf00] sm:$0xff]
        %v737 = vld [vmem:[%s200 + $0xf08] sm:$0xff]
        %v738 = vld [vmem:[%s200 + $0xf10] sm:$0xff]
        %v739 = vld [vmem:[%s200 + $0xf18] sm:$0xff]
        %v740 = vld [vmem:[%s200 + $0xf20] sm:$0xff]
        %v741 = vld [vmem:[%s200 + $0xf28] sm:$0xff]
        %v742 = vld [vmem:[%s200 + $0xf30] sm:$0xff]
        %v743 = vld [vmem:[%s200 + $0xf38] sm:$0xff]
        %v744 = vld [vmem:[%s200 + $0xf40] sm:$0xff]
        %v745 = vld [vmem:[%s200 + $0xf48] sm:$0xff]
        %v746 = vld [vmem:[%s200 + $0xf50] sm:$0xff]
        %v747 = vld [vmem:[%s200 + $0xf58] sm:$0xff]
        %v748 = vld [vmem:[%s200 + $0xf60] sm:$0xff]
        %v749 = vld [vmem:[%s200 + $0xf68] sm:$0xff]
        %v750 = vld [vmem:[%s200 + $0xf70] sm:$0xff]
        %v751 = vld [vmem:[%s200 + $0xf78] sm:$0xff]
        %v752 = vld [vmem:[%s200 + $0xf80] sm:$0xff]
        %v753 = vld [vmem:[%s200 + $0xf88] sm:$0xff]
        %v754 = vld [vmem:[%s200 + $0xf90] sm:$0xff]
        %v755 = vld [vmem:[%s200 + $0xf98] sm:$0xff]
        %v756 = vld [vmem:[%s200 + $0xfa0] sm:$0xff]
        %v757 = vld [vmem:[%s200 + $0xfa8] sm:$0xff]
        %v758 = vld [vmem:[%s200 + $0xfb0] sm:$0xff]
        %v759 = vld [vmem:[%s200 + $0xfb8] sm:$0xff]
        %v760 = vld [vmem:[%s200 + $0xfc0] sm:$0xff]
        %v761 = vld [vmem:[%s200 + $0xfc8] sm:$0xff]
        %v762 = vld [vmem:[%s200 + $0xfd0] sm:$0xff]
        %v763 = vld [vmem:[%s200 + $0xfd8] sm:$0xff]
        %v764 = vld [vmem:[%s200 + $0xfe0] sm:$0xff]
        %v765 = vld [vmem:[%s200 + $0xfe8] sm:$0xff]
        %v766 = vld [vmem:[%s200 + $0xff0] sm:$0xff]
        %v767 = vld [vmem:[%s200 + $0xff8] sm:$0xff]
        %v768 = vld [vmem:[%s200 + $0x1000] sm:$0xff]
        %v769 = vld [vmem:[%s200 + $0x1008] sm:$0xff]
        %v770 = vld [vmem:[%s200 + $0x1010] sm:$0xff]
        %v771 = vld [vmem:[%s200 + $0x1018] sm:$0xff]
        %v772 = vld [vmem:[%s200 + $0x1020] sm:$0xff]
        %v773 = vld [vmem:[%s200 + $0x1028] sm:$0xff]
        %v774 = vld [vmem:[%s200 + $0x1030] sm:$0xff]
        %v775 = vld [vmem:[%s200 + $0x1038] sm:$0xff]
        %v776 = vld [vmem:[%s200 + $0x1040] sm:$0xff]
        %v777 = vld [vmem:[%s200 + $0x1048] sm:$0xff]
        %v778 = vld [vmem:[%s200 + $0x1050] sm:$0xff]
        %v779 = vld [vmem:[%s200 + $0x1058] sm:$0xff]
        %v780 = vld [vmem:[%s200 + $0x1060] sm:$0xff]
        %v781 = vld [vmem:[%s200 + $0x1068] sm:$0xff]
        %v782 = vld [vmem:[%s200 + $0x1070] sm:$0xff]
        %v783 = vld [vmem:[%s200 + $0x1078] sm:$0xff]
        %v784 = vld [vmem:[%s200 + $0x1080] sm:$0xff]
        %v785 = vld [vmem:[%s200 + $0x1088] sm:$0xff]
        %v786 = vld [vmem:[%s200 + $0x1090] sm:$0xff]
        %v787 = vld [vmem:[%s200 + $0x1098] sm:$0xff]
        %v788 = vld [vmem:[%s200 + $0x10a0] sm:$0xff]
        %v789 = vld [vmem:[%s200 + $0x10a8] sm:$0xff]
        %v790 = vld [vmem:[%s200 + $0x10b0] sm:$0xff]
        %v791 = vld [vmem:[%s200 + $0x10b8] sm:$0xff]
        %v792 = vld [vmem:[%s200 + $0x10c0] sm:$0xff]
        %v793 = vld [vmem:[%s200 + $0x10c8] sm:$0xff]
        %v794 = vld [vmem:[%s200 + $0x10d0] sm:$0xff]
        %v795 = vld [vmem:[%s200 + $0x10d8] sm:$0xff]
        %v796 = vld [vmem:[%s200 + $0x10e0] sm:$0xff]
        %v797 = vld [vmem:[%s200 + $0x10e8] sm:$0xff]
        %v798 = vld [vmem:[%s200 + $0x10f0] sm:$0xff]
        %v799 = vld [vmem:[%s200 + $0x10f8] sm:$0xff]
        %v800 = vld [vmem:[%s200 + $0x1100] sm:$0xff]
        %v801 = vld [vmem:[%s200 + $0x1108] sm:$0xff]
        %v802 = vld [vmem:[%s200 + $0x1110] sm:$0xff]
        %v803 = vld [vmem:[%s200 + $0x1118] sm:$0xff]
        %v804 = vld [vmem:[%s200 + $0x1120] sm:$0xff]
        %v805 = vld [vmem:[%s200 + $0x1128] sm:$0xff]
        %v806 = vld [vmem:[%s200 + $0x1130] sm:$0xff]
        %v807 = vld [vmem:[%s200 + $0x1138] sm:$0xff]
        %v808 = vld [vmem:[%s200 + $0x1140] sm:$0xff]
        %v809 = vld [vmem:[%s200 + $0x1148] sm:$0xff]
        %v810 = vld [vmem:[%s200 + $0x1150] sm:$0xff]
        %v811 = vld [vmem:[%s200 + $0x1158] sm:$0xff]
        %v812 = vld [vmem:[%s200 + $0x1160] sm:$0xff]
        %v813 = vld [vmem:[%s200 + $0x1168] sm:$0xff]
        %v814 = vld [vmem:[%s200 + $0x1170] sm:$0xff]
        %v815 = vld [vmem:[%s200 + $0x1178] sm:$0xff]
        %v816 = vld [vmem:[%s200 + $0x1180] sm:$0xff]
        %v817 = vld [vmem:[%s200 + $0x1188] sm:$0xff]
        %v818 = vld [vmem:[%s200 + $0x1190] sm:$0xff]
        %v819 = vld [vmem:[%s200 + $0x1198] sm:$0xff]
        %v820 = vld [vmem:[%s200 + $0x11a0] sm:$0xff]
        %v821 = vld [vmem:[%s200 + $0x11a8] sm:$0xff]
        %v822 = vld [vmem:[%s200 + $0x11b0] sm:$0xff]
        %v823 = vld [vmem:[%s200 + $0x11b8] sm:$0xff]
        %v824 = vld [vmem:[%s200 + $0x11c0] sm:$0xff]
        %v825 = vld [vmem:[%s200 + $0x11c8] sm:$0xff]
        %v826 = vld [vmem:[%s200 + $0x11d0] sm:$0xff]
        %v827 = vld [vmem:[%s200 + $0x11d8] sm:$0xff]
        %v828 = vld [vmem:[%s200 + $0x11e0] sm:$0xff]
        %v829 = vld [vmem:[%s200 + $0x11e8] sm:$0xff]
        %v830 = vld [vmem:[%s200 + $0x11f0] sm:$0xff]
        %v831 = vld [vmem:[%s200 + $0x11f8] sm:$0xff]
        %v832 = vld [vmem:[%s200 + $0x1200] sm:$0xff]
        %v833 = vld [vmem:[%s200 + $0x1208] sm:$0xff]
        %v834 = vld [vmem:[%s200 + $0x1210] sm:$0xff]
        %v835 = vld [vmem:[%s200 + $0x1218] sm:$0xff]
        %v836 = vld [vmem:[%s200 + $0x1220] sm:$0xff]
        %v837 = vld [vmem:[%s200 + $0x1228] sm:$0xff]
        %v838 = vld [vmem:[%s200 + $0x1230] sm:$0xff]
        %v839 = vld [vmem:[%s200 + $0x1238] sm:$0xff]
        %v840 = vld [vmem:[%s200 + $0x1240] sm:$0xff]
        %v841 = vld [vmem:[%s200 + $0x1248] sm:$0xff]
        %v842 = vld [vmem:[%s200 + $0x1250] sm:$0xff]
        %v843 = vld [vmem:[%s200 + $0x1258] sm:$0xff]
        %v844 = vld [vmem:[%s200 + $0x1260] sm:$0xff]
        %v845 = vld [vmem:[%s200 + $0x1268] sm:$0xff]
        %v846 = vld [vmem:[%s200 + $0x1270] sm:$0xff]
        %v847 = vld [vmem:[%s200 + $0x1278] sm:$0xff]
        %v848 = vld [vmem:[%s200 + $0x1280] sm:$0xff]
        %v849 = vld [vmem:[%s200 + $0x1288] sm:$0xff]
        %v850 = vld [vmem:[%s200 + $0x1290] sm:$0xff]
        %v851 = vld [vmem:[%s200 + $0x1298] sm:$0xff]
        %v852 = vld [vmem:[%s200 + $0x12a0] sm:$0xff]
        %v853 = vld [vmem:[%s200 + $0x12a8] sm:$0xff]
        %v854 = vld [vmem:[%s200 + $0x12b0] sm:$0xff]
        %v855 = vld [vmem:[%s200 + $0x12b8] sm:$0xff]
        %v856 = vld [vmem:[%s200 + $0x12c0] sm:$0xff]
        %v857 = vld [vmem:[%s200 + $0x12c8] sm:$0xff]
        %v858 = vld [vmem:[%s200 + $0x12d0] sm:$0xff]
        %v859 = vld [vmem:[%s200 + $0x12d8] sm:$0xff]
        %v860 = vld [vmem:[%s200 + $0x12e0] sm:$0xff]
        %v861 = vld [vmem:[%s200 + $0x12e8] sm:$0xff]
        %v862 = vld [vmem:[%s200 + $0x12f0] sm:$0xff]
        %v863 = vld [vmem:[%s200 + $0x12f8] sm:$0xff]
        %v864 = vld [vmem:[%s200 + $0x1300] sm:$0xff]
        %v865 = vld [vmem:[%s200 + $0x1308] sm:$0xff]
        %v866 = vld [vmem:[%s200 + $0x1310] sm:$0xff]
        %v867 = vld [vmem:[%s200 + $0x1318] sm:$0xff]
        %v868 = vld [vmem:[%s200 + $0x1320] sm:$0xff]
        %v869 = vld [vmem:[%s200 + $0x1328] sm:$0xff]
        %v870 = vld [vmem:[%s200 + $0x1330] sm:$0xff]
        %v871 = vld [vmem:[%s200 + $0x1338] sm:$0xff]
        %v872 = vld [vmem:[%s200 + $0x1340] sm:$0xff]
        %v873 = vld [vmem:[%s200 + $0x1348] sm:$0xff]
        %v874 = vld [vmem:[%s200 + $0x1350] sm:$0xff]
        %v875 = vld [vmem:[%s200 + $0x1358] sm:$0xff]
        %v876 = vld [vmem:[%s200 + $0x1360] sm:$0xff]
        %v877 = vld [vmem:[%s200 + $0x1368] sm:$0xff]
        %v878 = vld [vmem:[%s200 + $0x1370] sm:$0xff]
        %v879 = vld [vmem:[%s200 + $0x1378] sm:$0xff]
        %v880 = vld [vmem:[%s200 + $0x1380] sm:$0xff]
        %v881 = vld [vmem:[%s200 + $0x1388] sm:$0xff]
        %v882 = vld [vmem:[%s200 + $0x1390] sm:$0xff]
        %v883 = vld [vmem:[%s200 + $0x1398] sm:$0xff]
        %v884 = vld [vmem:[%s200 + $0x13a0] sm:$0xff]
        %v885 = vld [vmem:[%s200 + $0x13a8] sm:$0xff]
        %v886 = vld [vmem:[%s200 + $0x13b0] sm:$0xff]
        %v887 = vld [vmem:[%s200 + $0x13b8] sm:$0xff]
        %v888 = vld [vmem:[%s200 + $0x13c0] sm:$0xff]
        %v889 = vld [vmem:[%s200 + $0x13c8] sm:$0xff]
        %v890 = vld [vmem:[%s200 + $0x13d0] sm:$0xff]
        %v891 = vld [vmem:[%s200 + $0x13d8] sm:$0xff]
        %v892 = vld [vmem:[%s200 + $0x13e0] sm:$0xff]
        %v893 = vld [vmem:[%s200 + $0x13e8] sm:$0xff]
        %v894 = vld [vmem:[%s200 + $0x13f0] sm:$0xff]
        %v895 = vld [vmem:[%s200 + $0x13f8] sm:$0xff]
        %v896 = vld [vmem:[%s200 + $0x1400] sm:$0xff]
        %v897 = vld [vmem:[%s200 + $0x1408] sm:$0xff]
        %v898 = vld [vmem:[%s200 + $0x1410] sm:$0xff]
        %v899 = vld [vmem:[%s200 + $0x1418] sm:$0xff]
        %v900 = vld [vmem:[%s200 + $0x1420] sm:$0xff]
        %v901 = vld [vmem:[%s200 + $0x1428] sm:$0xff]
        %v902 = vld [vmem:[%s200 + $0x1430] sm:$0xff]
        %v903 = vld [vmem:[%s200 + $0x1438] sm:$0xff]
        %v904 = vld [vmem:[%s200 + $0x1440] sm:$0xff]
        %v905 = vld [vmem:[%s200 + $0x1448] sm:$0xff]
        %v906 = vld [vmem:[%s200 + $0x1450] sm:$0xff]
        %v907 = vld [vmem:[%s200 + $0x1458] sm:$0xff]
        %v908 = vld [vmem:[%s200 + $0x1460] sm:$0xff]
        %v909 = vld [vmem:[%s200 + $0x1468] sm:$0xff]
        %v910 = vld [vmem:[%s200 + $0x1470] sm:$0xff]
        %v911 = vld [vmem:[%s200 + $0x1478] sm:$0xff]
        %v912 = vld [vmem:[%s200 + $0x1480] sm:$0xff]
        %v913 = vld [vmem:[%s200 + $0x1488] sm:$0xff]
        %v914 = vld [vmem:[%s200 + $0x1490] sm:$0xff]
        %v915 = vld [vmem:[%s200 + $0x1498] sm:$0xff]
        %v916 = vld [vmem:[%s200 + $0x14a0] sm:$0xff]
        %v917 = vld [vmem:[%s200 + $0x14a8] sm:$0xff]
        %v918 = vld [vmem:[%s200 + $0x14b0] sm:$0xff]
        %v919 = vld [vmem:[%s200 + $0x14b8] sm:$0xff]
        %v920 = vld [vmem:[%s200 + $0x14c0] sm:$0xff]
        %v921 = vld [vmem:[%s200 + $0x14c8] sm:$0xff]
        %v922 = vld [vmem:[%s200 + $0x14d0] sm:$0xff]
        %v923 = vld [vmem:[%s200 + $0x14d8] sm:$0xff]
        %v924 = vld [vmem:[%s200 + $0x14e0] sm:$0xff]
        %v925 = vld [vmem:[%s200 + $0x14e8] sm:$0xff]
        %v926 = vld [vmem:[%s200 + $0x14f0] sm:$0xff]
        %v927 = vld [vmem:[%s200 + $0x14f8] sm:$0xff]
        %v928 = vld [vmem:[%s200 + $0x1500] sm:$0xff]
        %v929 = vld [vmem:[%s200 + $0x1508] sm:$0xff]
        %v930 = vld [vmem:[%s200 + $0x1510] sm:$0xff]
        %v931 = vld [vmem:[%s200 + $0x1518] sm:$0xff]
        %v932 = vld [vmem:[%s200 + $0x1520] sm:$0xff]
        %v933 = vld [vmem:[%s200 + $0x1528] sm:$0xff]
        %v934 = vld [vmem:[%s200 + $0x1530] sm:$0xff]
        %v935 = vld [vmem:[%s200 + $0x1538] sm:$0xff]
        %v936 = vld [vmem:[%s200 + $0x1540] sm:$0xff]
        %v937 = vld [vmem:[%s200 + $0x1548] sm:$0xff]
        %v938 = vld [vmem:[%s200 + $0x1550] sm:$0xff]
        %v939 = vld [vmem:[%s200 + $0x1558] sm:$0xff]
        %v940 = vld [vmem:[%s200 + $0x1560] sm:$0xff]
        %v941 = vld [vmem:[%s200 + $0x1568] sm:$0xff]
        %v942 = vld [vmem:[%s200 + $0x1570] sm:$0xff]
        %v943 = vld [vmem:[%s200 + $0x1578] sm:$0xff]
        %v944 = vld [vmem:[%s200 + $0x1580] sm:$0xff]
        %v945 = vld [vmem:[%s200 + $0x1588] sm:$0xff]
        %v946 = vld [vmem:[%s200 + $0x1590] sm:$0xff]
        %v947 = vld [vmem:[%s200 + $0x1598] sm:$0xff]
        %v948 = vld [vmem:[%s200 + $0x15a0] sm:$0xff]
        %v949 = vld [vmem:[%s200 + $0x15a8] sm:$0xff]
        %v950 = vld [vmem:[%s200 + $0x15b0] sm:$0xff]
        %v951 = vld [vmem:[%s200 + $0x15b8] sm:$0xff]
        %v952 = vld [vmem:[%s200 + $0x15c0] sm:$0xff]
        %v953 = vld [vmem:[%s200 + $0x15c8] sm:$0xff]
        %v954 = vld [vmem:[%s200 + $0x15d0] sm:$0xff]
        %v955 = vld [vmem:[%s200 + $0x15d8] sm:$0xff]
        %v956 = vld [vmem:[%s200 + $0x15e0] sm:$0xff]
        %v957 = vld [vmem:[%s200 + $0x15e8] sm:$0xff]
        %v958 = vld [vmem:[%s200 + $0x15f0] sm:$0xff]
        %v959 = vld [vmem:[%s200 + $0x15f8] sm:$0xff]
        %v960 = vld [vmem:[%s200 + $0x1600] sm:$0xff]
        %v961 = vld [vmem:[%s200 + $0x1608] sm:$0xff]
        %v962 = vld [vmem:[%s200 + $0x1610] sm:$0xff]
        %v963 = vld [vmem:[%s200 + $0x1618] sm:$0xff]
        %v964 = vld [vmem:[%s200 + $0x1620] sm:$0xff]
        %v965 = vld [vmem:[%s200 + $0x1628] sm:$0xff]
        %v966 = vld [vmem:[%s200 + $0x1630] sm:$0xff]
        %v967 = vld [vmem:[%s200 + $0x1638] sm:$0xff]
        %v968 = vld [vmem:[%s200 + $0x1640] sm:$0xff]
        %v969 = vld [vmem:[%s200 + $0x1648] sm:$0xff]
        %v970 = vld [vmem:[%s200 + $0x1650] sm:$0xff]
        %v971 = vld [vmem:[%s200 + $0x1658] sm:$0xff]
        %v972 = vld [vmem:[%s200 + $0x1660] sm:$0xff]
        %v973 = vld [vmem:[%s200 + $0x1668] sm:$0xff]
        %v974 = vld [vmem:[%s200 + $0x1670] sm:$0xff]
        %v975 = vld [vmem:[%s200 + $0x1678] sm:$0xff]
        %v976 = vld [vmem:[%s200 + $0x1680] sm:$0xff]
        %v977 = vld [vmem:[%s200 + $0x1688] sm:$0xff]
        %v978 = vld [vmem:[%s200 + $0x1690] sm:$0xff]
        %v979 = vld [vmem:[%s200 + $0x1698] sm:$0xff]
        %v980 = vld [vmem:[%s200 + $0x16a0] sm:$0xff]
        %v981 = vld [vmem:[%s200 + $0x16a8] sm:$0xff]
        %v982 = vld [vmem:[%s200 + $0x16b0] sm:$0xff]
        %v983 = vld [vmem:[%s200 + $0x16b8] sm:$0xff]
        %v984 = vld [vmem:[%s200 + $0x16c0] sm:$0xff]
        %v985 = vld [vmem:[%s200 + $0x16c8] sm:$0xff]
        %v986 = vld [vmem:[%s200 + $0x16d0] sm:$0xff]
        %v987 = vld [vmem:[%s200 + $0x16d8] sm:$0xff]
        %v988 = vld [vmem:[%s200 + $0x16e0] sm:$0xff]
        %v989 = vld [vmem:[%s200 + $0x16e8] sm:$0xff]
        %v990 = vld [vmem:[%s200 + $0x16f0] sm:$0xff]
        %v991 = vld [vmem:[%s200 + $0x16f8] sm:$0xff]
        %v992 = vld [vmem:[%s200 + $0x1700] sm:$0xff]
        %v993 = vld [vmem:[%s200 + $0x1708] sm:$0xff]
        %v994 = vld [vmem:[%s200 + $0x1710] sm:$0xff]
        %v995 = vld [vmem:[%s200 + $0x1718] sm:$0xff]
        %v996 = vld [vmem:[%s200 + $0x1720] sm:$0xff]
        %v997 = vld [vmem:[%s200 + $0x1728] sm:$0xff]
        %v998 = vld [vmem:[%s200 + $0x1730] sm:$0xff]
        %v999 = vld [vmem:[%s200 + $0x1738] sm:$0xff]
        %v1000 = vld [vmem:[%s200 + $0x1740] sm:$0xff]
        %v1001 = vld [vmem:[%s200 + $0x1748] sm:$0xff]
        %v1002 = vld [vmem:[%s200 + $0x1750] sm:$0xff]
        %v1003 = vld [vmem:[%s200 + $0x1758] sm:$0xff]
        %v1004 = vld [vmem:[%s200 + $0x1760] sm:$0xff]
        %v1005 = vld [vmem:[%s200 + $0x1768] sm:$0xff]
        %v1006 = vld [vmem:[%s200 + $0x1770] sm:$0xff]
        %v1007 = vld [vmem:[%s200 + $0x1778] sm:$0xff]
        %v1008 = vld [vmem:[%s200 + $0x1780] sm:$0xff]
        %v1009 = vld [vmem:[%s200 + $0x1788] sm:$0xff]
        %v1010 = vld [vmem:[%s200 + $0x1790] sm:$0xff]
        %v1011 = vld [vmem:[%s200 + $0x1798] sm:$0xff]
        %v1012 = vld [vmem:[%s200 + $0x17a0] sm:$0xff]
        %v1013 = vld [vmem:[%s200 + $0x17a8] sm:$0xff]
        %v1014 = vld [vmem:[%s200 + $0x17b0] sm:$0xff]
        %v1015 = vld [vmem:[%s200 + $0x17b8] sm:$0xff]
        %v1016 = vld [vmem:[%s200 + $0x17c0] sm:$0xff]
        %v1017 = vld [vmem:[%s200 + $0x17c8] sm:$0xff]
        %v1018 = vld [vmem:[%s200 + $0x17d0] sm:$0xff]
        %v1019 = vld [vmem:[%s200 + $0x17d8] sm:$0xff]
        %v1020 = vld [vmem:[%s200 + $0x17e0] sm:$0xff]
        %v1021 = vld [vmem:[%s200 + $0x17e8] sm:$0xff]
        %v1022 = vld [vmem:[%s200 + $0x17f0] sm:$0xff]
        %v1023 = vld [vmem:[%s200 + $0x17f8] sm:$0xff]
        %v1024 = vld [vmem:[%s200 + $0x1800] sm:$0xff]
        %v1025 = vld [vmem:[%s200 + $0x1808] sm:$0xff]
        %v1026 = vld [vmem:[%s200 + $0x1810] sm:$0xff]
        %v1027 = vld [vmem:[%s200 + $0x1818] sm:$0xff]
        %v1028 = vld [vmem:[%s200 + $0x1820] sm:$0xff]
        %v1029 = vld [vmem:[%s200 + $0x1828] sm:$0xff]
        %v1030 = vld [vmem:[%s200 + $0x1830] sm:$0xff]
        %v1031 = vld [vmem:[%s200 + $0x1838] sm:$0xff]
        %v1032 = vld [vmem:[%s200 + $0x1840] sm:$0xff]
        %v1033 = vld [vmem:[%s200 + $0x1848] sm:$0xff]
        %v1034 = vld [vmem:[%s200 + $0x1850] sm:$0xff]
        %v1035 = vld [vmem:[%s200 + $0x1858] sm:$0xff]
        %v1036 = vld [vmem:[%s200 + $0x1860] sm:$0xff]
        %v1037 = vld [vmem:[%s200 + $0x1868] sm:$0xff]
        %v1038 = vld [vmem:[%s200 + $0x1870] sm:$0xff]
        %v1039 = vld [vmem:[%s200 + $0x1878] sm:$0xff]
        %v1040 = vld [vmem:[%s200 + $0x1880] sm:$0xff]
        %v1041 = vld [vmem:[%s200 + $0x1888] sm:$0xff]
        %v1042 = vld [vmem:[%s200 + $0x1890] sm:$0xff]
        %v1043 = vld [vmem:[%s200 + $0x1898] sm:$0xff]
        %v1044 = vld [vmem:[%s200 + $0x18a0] sm:$0xff]
        %v1045 = vld [vmem:[%s200 + $0x18a8] sm:$0xff]
        %v1046 = vld [vmem:[%s200 + $0x18b0] sm:$0xff]
        %v1047 = vld [vmem:[%s200 + $0x18b8] sm:$0xff]
        %v1048 = vld [vmem:[%s200 + $0x18c0] sm:$0xff]
        %v1049 = vld [vmem:[%s200 + $0x18c8] sm:$0xff]
        %v1050 = vld [vmem:[%s200 + $0x18d0] sm:$0xff]
        %v1051 = vld [vmem:[%s200 + $0x18d8] sm:$0xff]
        %v1052 = vld [vmem:[%s200 + $0x18e0] sm:$0xff]
        %v1053 = vld [vmem:[%s200 + $0x18e8] sm:$0xff]
        %v1054 = vld [vmem:[%s200 + $0x18f0] sm:$0xff]
        %v1055 = vld [vmem:[%s200 + $0x18f8] sm:$0xff]
        %v1056 = vld [vmem:[%s200 + $0x1900] sm:$0xff]
        %v1057 = vld [vmem:[%s200 + $0x1908] sm:$0xff]
        %v1058 = vld [vmem:[%s200 + $0x1910] sm:$0xff]
        %v1059 = vld [vmem:[%s200 + $0x1918] sm:$0xff]
        %v1060 = vld [vmem:[%s200 + $0x1920] sm:$0xff]
        %v1061 = vld [vmem:[%s200 + $0x1928] sm:$0xff]
        %v1062 = vld [vmem:[%s200 + $0x1930] sm:$0xff]
        %v1063 = vld [vmem:[%s200 + $0x1938] sm:$0xff]
        %v1064 = vld [vmem:[%s200 + $0x1940] sm:$0xff]
        %v1065 = vld [vmem:[%s200 + $0x1948] sm:$0xff]
        %v1066 = vld [vmem:[%s200 + $0x1950] sm:$0xff]
        %v1067 = vld [vmem:[%s200 + $0x1958] sm:$0xff]
        %v1068 = vld [vmem:[%s200 + $0x1960] sm:$0xff]
        %v1069 = vld [vmem:[%s200 + $0x1968] sm:$0xff]
        %v1070 = vld [vmem:[%s200 + $0x1970] sm:$0xff]
        %v1071 = vld [vmem:[%s200 + $0x1978] sm:$0xff]
        %v1072 = vld [vmem:[%s200 + $0x1980] sm:$0xff]
        %v1073 = vld [vmem:[%s200 + $0x1988] sm:$0xff]
        %v1074 = vld [vmem:[%s200 + $0x1990] sm:$0xff]
        %v1075 = vld [vmem:[%s200 + $0x1998] sm:$0xff]
        %v1076 = vld [vmem:[%s200 + $0x19a0] sm:$0xff]
        %v1077 = vld [vmem:[%s200 + $0x19a8] sm:$0xff]
        %v1078 = vld [vmem:[%s200 + $0x19b0] sm:$0xff]
        %v1079 = vld [vmem:[%s200 + $0x19b8] sm:$0xff]
        %v1080 = vld [vmem:[%s200 + $0x19c0] sm:$0xff]
        %v1081 = vld [vmem:[%s200 + $0x19c8] sm:$0xff]
        %v1082 = vld [vmem:[%s200 + $0x19d0] sm:$0xff]
        %v1083 = vld [vmem:[%s200 + $0x19d8] sm:$0xff]
        %v1084 = vld [vmem:[%s200 + $0x19e0] sm:$0xff]
        %v1085 = vld [vmem:[%s200 + $0x19e8] sm:$0xff]
        %v1086 = vld [vmem:[%s200 + $0x19f0] sm:$0xff]
        %v1087 = vld [vmem:[%s200 + $0x19f8] sm:$0xff]
        %v1088 = vld [vmem:[%s200 + $0x1a00] sm:$0xff]
        %v1089 = vld [vmem:[%s200 + $0x1a08] sm:$0xff]
        %v1090 = vld [vmem:[%s200 + $0x1a10] sm:$0xff]
        %v1091 = vld [vmem:[%s200 + $0x1a18] sm:$0xff]
        %v1092 = vld [vmem:[%s200 + $0x1a20] sm:$0xff]
        %v1093 = vld [vmem:[%s200 + $0x1a28] sm:$0xff]
        %v1094 = vld [vmem:[%s200 + $0x1a30] sm:$0xff]
        %v1095 = vld [vmem:[%s200 + $0x1a38] sm:$0xff]
        %v1096 = vld [vmem:[%s200 + $0x1a40] sm:$0xff]
        %v1097 = vld [vmem:[%s200 + $0x1a48] sm:$0xff]
        %v1098 = vld [vmem:[%s200 + $0x1a50] sm:$0xff]
        %v1099 = vld [vmem:[%s200 + $0x1a58] sm:$0xff]
        %v1100 = vld [vmem:[%s200 + $0x1a60] sm:$0xff]
        %v1101 = vld [vmem:[%s200 + $0x1a68] sm:$0xff]
        %v1102 = vld [vmem:[%s200 + $0x1a70] sm:$0xff]
        %v1103 = vld [vmem:[%s200 + $0x1a78] sm:$0xff]
        %v1104 = vld [vmem:[%s200 + $0x1a80] sm:$0xff]
        %v1105 = vld [vmem:[%s200 + $0x1a88] sm:$0xff]
        %v1106 = vld [vmem:[%s200 + $0x1a90] sm:$0xff]
        %v1107 = vld [vmem:[%s200 + $0x1a98] sm:$0xff]
        %v1108 = vld [vmem:[%s200 + $0x1aa0] sm:$0xff]
        %v1109 = vld [vmem:[%s200 + $0x1aa8] sm:$0xff]
        %v1110 = vld [vmem:[%s200 + $0x1ab0] sm:$0xff]
        %v1111 = vld [vmem:[%s200 + $0x1ab8] sm:$0xff]
        %v1112 = vld [vmem:[%s200 + $0x1ac0] sm:$0xff]
        %v1113 = vld [vmem:[%s200 + $0x1ac8] sm:$0xff]
        %v1114 = vld [vmem:[%s200 + $0x1ad0] sm:$0xff]
        %v1115 = vld [vmem:[%s200 + $0x1ad8] sm:$0xff]
        %v1116 = vld [vmem:[%s200 + $0x1ae0] sm:$0xff]
        %v1117 = vld [vmem:[%s200 + $0x1ae8] sm:$0xff]
        %v1118 = vld [vmem:[%s200 + $0x1af0] sm:$0xff]
        %v1119 = vld [vmem:[%s200 + $0x1af8] sm:$0xff]
        %v1120 = vld [vmem:[%s200 + $0x1b00] sm:$0xff]
        %v1121 = vld [vmem:[%s200 + $0x1b08] sm:$0xff]
        %v1122 = vld [vmem:[%s200 + $0x1b10] sm:$0xff]
        %v1123 = vld [vmem:[%s200 + $0x1b18] sm:$0xff]
        %v1124 = vld [vmem:[%s200 + $0x1b20] sm:$0xff]
        %v1125 = vld [vmem:[%s200 + $0x1b28] sm:$0xff]
        %v1126 = vld [vmem:[%s200 + $0x1b30] sm:$0xff]
        %v1127 = vld [vmem:[%s200 + $0x1b38] sm:$0xff]
        %v1128 = vld [vmem:[%s200 + $0x1b40] sm:$0xff]
        %v1129 = vld [vmem:[%s200 + $0x1b48] sm:$0xff]
        %v1130 = vld [vmem:[%s200 + $0x1b50] sm:$0xff]
        %v1131 = vld [vmem:[%s200 + $0x1b58] sm:$0xff]
        %v1132 = vld [vmem:[%s200 + $0x1b60] sm:$0xff]
        %v1133 = vld [vmem:[%s200 + $0x1b68] sm:$0xff]
        %v1134 = vld [vmem:[%s200 + $0x1b70] sm:$0xff]
        %v1135 = vld [vmem:[%s200 + $0x1b78] sm:$0xff]
        %v1136 = vld [vmem:[%s200 + $0x1b80] sm:$0xff]
        %v1137 = vld [vmem:[%s200 + $0x1b88] sm:$0xff]
        %v1138 = vld [vmem:[%s200 + $0x1b90] sm:$0xff]
        %v1139 = vld [vmem:[%s200 + $0x1b98] sm:$0xff]
        %v1140 = vld [vmem:[%s200 + $0x1ba0] sm:$0xff]
        %v1141 = vld [vmem:[%s200 + $0x1ba8] sm:$0xff]
        %v1142 = vld [vmem:[%s200 + $0x1bb0] sm:$0xff]
        %v1143 = vld [vmem:[%s200 + $0x1bb8] sm:$0xff]
        %v1144 = vld [vmem:[%s200 + $0x1bc0] sm:$0xff]
        %v1145 = vld [vmem:[%s200 + $0x1bc8] sm:$0xff]
        %v1146 = vld [vmem:[%s200 + $0x1bd0] sm:$0xff]
        %v1147 = vld [vmem:[%s200 + $0x1bd8] sm:$0xff]
        %v1148 = vld [vmem:[%s200 + $0x1be0] sm:$0xff]
        %v1149 = vld [vmem:[%s200 + $0x1be8] sm:$0xff]
        %v1150 = vld [vmem:[%s200 + $0x1bf0] sm:$0xff]
        %v1151 = vld [vmem:[%s200 + $0x1bf8] sm:$0xff]
        %v1152 = vld [vmem:[%s200 + $0x1c00] sm:$0xff]
        %v1153 = vld [vmem:[%s200 + $0x1c08] sm:$0xff]
        %v1154 = vld [vmem:[%s200 + $0x1c10] sm:$0xff]
        %v1155 = vld [vmem:[%s200 + $0x1c18] sm:$0xff]
        %v1156 = vld [vmem:[%s200 + $0x1c20] sm:$0xff]
        %v1157 = vld [vmem:[%s200 + $0x1c28] sm:$0xff]
        %v1158 = vld [vmem:[%s200 + $0x1c30] sm:$0xff]
        %v1159 = vld [vmem:[%s200 + $0x1c38] sm:$0xff]
        %v1160 = vld [vmem:[%s200 + $0x1c40] sm:$0xff]
        %v1161 = vld [vmem:[%s200 + $0x1c48] sm:$0xff]
        %v1162 = vld [vmem:[%s200 + $0x1c50] sm:$0xff]
        %v1163 = vld [vmem:[%s200 + $0x1c58] sm:$0xff]
        %v1164 = vld [vmem:[%s200 + $0x1c60] sm:$0xff]
        %v1165 = vld [vmem:[%s200 + $0x1c68] sm:$0xff]
        %v1166 = vld [vmem:[%s200 + $0x1c70] sm:$0xff]
        %v1167 = vld [vmem:[%s200 + $0x1c78] sm:$0xff]
        %v1168 = vld [vmem:[%s200 + $0x1c80] sm:$0xff]
        %v1169 = vld [vmem:[%s200 + $0x1c88] sm:$0xff]
        %v1170 = vld [vmem:[%s200 + $0x1c90] sm:$0xff]
        %v1171 = vld [vmem:[%s200 + $0x1c98] sm:$0xff]
        %v1172 = vld [vmem:[%s200 + $0x1ca0] sm:$0xff]
        %v1173 = vld [vmem:[%s200 + $0x1ca8] sm:$0xff]
        %v1174 = vld [vmem:[%s200 + $0x1cb0] sm:$0xff]
        %v1175 = vld [vmem:[%s200 + $0x1cb8] sm:$0xff]
        %v1176 = vld [vmem:[%s200 + $0x1cc0] sm:$0xff]
        %v1177 = vld [vmem:[%s200 + $0x1cc8] sm:$0xff]
        %v1178 = vld [vmem:[%s200 + $0x1cd0] sm:$0xff]
        %v1179 = vld [vmem:[%s200 + $0x1cd8] sm:$0xff]
        %v1180 = vld [vmem:[%s200 + $0x1ce0] sm:$0xff]
        %v1181 = vld [vmem:[%s200 + $0x1ce8] sm:$0xff]
        %v1182 = vld [vmem:[%s200 + $0x1cf0] sm:$0xff]
        %v1183 = vld [vmem:[%s200 + $0x1cf8] sm:$0xff]
        %v1184 = vld [vmem:[%s200 + $0x1d00] sm:$0xff]
        %v1185 = vld [vmem:[%s200 + $0x1d08] sm:$0xff]
        %v1186 = vld [vmem:[%s200 + $0x1d10] sm:$0xff]
        %v1187 = vld [vmem:[%s200 + $0x1d18] sm:$0xff]
        %v1188 = vld [vmem:[%s200 + $0x1d20] sm:$0xff]
        %v1189 = vld [vmem:[%s200 + $0x1d28] sm:$0xff]
        %v1190 = vld [vmem:[%s200 + $0x1d30] sm:$0xff]
        %v1191 = vld [vmem:[%s200 + $0x1d38] sm:$0xff]
        %v1192 = vld [vmem:[%s200 + $0x1d40] sm:$0xff]
        %v1193 = vld [vmem:[%s200 + $0x1d48] sm:$0xff]
        %v1194 = vld [vmem:[%s200 + $0x1d50] sm:$0xff]
        %v1195 = vld [vmem:[%s200 + $0x1d58] sm:$0xff]
        %v1196 = vld [vmem:[%s200 + $0x1d60] sm:$0xff]
        %v1197 = vld [vmem:[%s200 + $0x1d68] sm:$0xff]
        %v1198 = vld [vmem:[%s200 + $0x1d70] sm:$0xff]
        %v1199 = vld [vmem:[%s200 + $0x1d78] sm:$0xff]
        %v1200 = vld [vmem:[%s200 + $0x1d80] sm:$0xff]
        %v1201 = vld [vmem:[%s200 + $0x1d88] sm:$0xff]
        %v1202 = vld [vmem:[%s200 + $0x1d90] sm:$0xff]
        %v1203 = vld [vmem:[%s200 + $0x1d98] sm:$0xff]
        %v1204 = vld [vmem:[%s200 + $0x1da0] sm:$0xff]
        %v1205 = vld [vmem:[%s200 + $0x1da8] sm:$0xff]
        %v1206 = vld [vmem:[%s200 + $0x1db0] sm:$0xff]
        %v1207 = vld [vmem:[%s200 + $0x1db8] sm:$0xff]
        %v1208 = vld [vmem:[%s200 + $0x1dc0] sm:$0xff]
        %v1209 = vld [vmem:[%s200 + $0x1dc8] sm:$0xff]
        %v1210 = vld [vmem:[%s200 + $0x1dd0] sm:$0xff]
        %v1211 = vld [vmem:[%s200 + $0x1dd8] sm:$0xff]
        %v1212 = vld [vmem:[%s200 + $0x1de0] sm:$0xff]
        %v1213 = vld [vmem:[%s200 + $0x1de8] sm:$0xff]
        %v1214 = vld [vmem:[%s200 + $0x1df0] sm:$0xff]
        %v1215 = vld [vmem:[%s200 + $0x1df8] sm:$0xff]
        %v1216 = vld [vmem:[%s200 + $0x1e00] sm:$0xff]
        %v1217 = vld [vmem:[%s200 + $0x1e08] sm:$0xff]
        %v1218 = vld [vmem:[%s200 + $0x1e10] sm:$0xff]
        %v1219 = vld [vmem:[%s200 + $0x1e18] sm:$0xff]
        %v1220 = vld [vmem:[%s200 + $0x1e20] sm:$0xff]
        %v1221 = vld [vmem:[%s200 + $0x1e28] sm:$0xff]
        %v1222 = vld [vmem:[%s200 + $0x1e30] sm:$0xff]
        %v1223 = vld [vmem:[%s200 + $0x1e38] sm:$0xff]
        %v1224 = vld [vmem:[%s200 + $0x1e40] sm:$0xff]
        %v1225 = vld [vmem:[%s200 + $0x1e48] sm:$0xff]
        %v1226 = vld [vmem:[%s200 + $0x1e50] sm:$0xff]
        %v1227 = vld [vmem:[%s200 + $0x1e58] sm:$0xff]
        %v1228 = vld [vmem:[%s200 + $0x1e60] sm:$0xff]
        %v1229 = vld [vmem:[%s200 + $0x1e68] sm:$0xff]
        %v1230 = vld [vmem:[%s200 + $0x1e70] sm:$0xff]
        %v1231 = vld [vmem:[%s200 + $0x1e78] sm:$0xff]
        %v1232 = vld [vmem:[%s200 + $0x1e80] sm:$0xff]
        %v1233 = vld [vmem:[%s200 + $0x1e88] sm:$0xff]
        %v1234 = vld [vmem:[%s200 + $0x1e90] sm:$0xff]
        %v1235 = vld [vmem:[%s200 + $0x1e98] sm:$0xff]
        %v1236 = vld [vmem:[%s200 + $0x1ea0] sm:$0xff]
        %v1237 = vld [vmem:[%s200 + $0x1ea8] sm:$0xff]
        %v1238 = vld [vmem:[%s200 + $0x1eb0] sm:$0xff]
        %v1239 = vld [vmem:[%s200 + $0x1eb8] sm:$0xff]
        %v1240 = vld [vmem:[%s200 + $0x1ec0] sm:$0xff]
        %v1241 = vld [vmem:[%s200 + $0x1ec8] sm:$0xff]
        %v1242 = vld [vmem:[%s200 + $0x1ed0] sm:$0xff]
        %v1243 = vld [vmem:[%s200 + $0x1ed8] sm:$0xff]
        %v1244 = vld [vmem:[%s200 + $0x1ee0] sm:$0xff]
        %v1245 = vld [vmem:[%s200 + $0x1ee8] sm:$0xff]
        %v1246 = vld [vmem:[%s200 + $0x1ef0] sm:$0xff]
        %v1247 = vld [vmem:[%s200 + $0x1ef8] sm:$0xff]
        %v1248 = vld [vmem:[%s200 + $0x1f00] sm:$0xff]
        %v1249 = vld [vmem:[%s200 + $0x1f08] sm:$0xff]
        %v1250 = vld [vmem:[%s200 + $0x1f10] sm:$0xff]
        %v1251 = vld [vmem:[%s200 + $0x1f18] sm:$0xff]
        %v1252 = vld [vmem:[%s200 + $0x1f20] sm:$0xff]
        %v1253 = vld [vmem:[%s200 + $0x1f28] sm:$0xff]
        %v1254 = vld [vmem:[%s200 + $0x1f30] sm:$0xff]
        %v1255 = vld [vmem:[%s200 + $0x1f38] sm:$0xff]
        %v1256 = vld [vmem:[%s200 + $0x1f40] sm:$0xff]
        %v1257 = vld [vmem:[%s200 + $0x1f48] sm:$0xff]
        %v1258 = vld [vmem:[%s200 + $0x1f50] sm:$0xff]
        %v1259 = vld [vmem:[%s200 + $0x1f58] sm:$0xff]
        %v1260 = vld [vmem:[%s200 + $0x1f60] sm:$0xff]
        %v1261 = vld [vmem:[%s200 + $0x1f68] sm:$0xff]
        %v1262 = vld [vmem:[%s200 + $0x1f70] sm:$0xff]
        %v1263 = vld [vmem:[%s200 + $0x1f78] sm:$0xff]
        %v1264 = vld [vmem:[%s200 + $0x1f80] sm:$0xff]
        %v1265 = vld [vmem:[%s200 + $0x1f88] sm:$0xff]
        %v1266 = vld [vmem:[%s200 + $0x1f90] sm:$0xff]
        %v1267 = vld [vmem:[%s200 + $0x1f98] sm:$0xff]
        %v1268 = vld [vmem:[%s200 + $0x1fa0] sm:$0xff]
        %v1269 = vld [vmem:[%s200 + $0x1fa8] sm:$0xff]
        %v1270 = vld [vmem:[%s200 + $0x1fb0] sm:$0xff]
        %v1271 = vld [vmem:[%s200 + $0x1fb8] sm:$0xff]
        %v1272 = vld [vmem:[%s200 + $0x1fc0] sm:$0xff]
        %v1273 = vld [vmem:[%s200 + $0x1fc8] sm:$0xff]
        %v1274 = vld [vmem:[%s200 + $0x1fd0] sm:$0xff]
        %v1275 = vld [vmem:[%s200 + $0x1fd8] sm:$0xff]
        %v1276 = vld [vmem:[%s200 + $0x1fe0] sm:$0xff]
        %v1277 = vld [vmem:[%s200 + $0x1fe8] sm:$0xff]
        %v1278 = vld [vmem:[%s200 + $0x1ff0] sm:$0xff]
        %v1279 = vld [vmem:[%s200 + $0x1ff8] sm:$0xff]
        %v1280 = vld [vmem:[%s209] sm:$0xf]
        %v1282 = vlaneseq
        %v1283 = vshrl.u32 %v1282, 7
        %v1284 = vsub.s32 0, %v1283
        %v1285 = vrot.slane %v1280, %v1284
        %v1286 = vlaneseq
        %v1287 = vshrl.u32 %v1286, 7
        %v1288 = vsub.s32 1, %v1287
        %v1289 = vrot.slane %v1280, %v1288
        %v1290 = vlaneseq
        %v1291 = vshrl.u32 %v1290, 7
        %v1292 = vsub.s32 2, %v1291
        %v1293 = vrot.slane %v1280, %v1292
        %v1294 = vlaneseq
        %v1295 = vshrl.u32 %v1294, 7
        %v1296 = vsub.s32 3, %v1295
        %v1297 = vrot.slane %v1280, %v1296
        %v1318 = vunpack.c.l.b16 %v240
        %v1319 = vunpack.c.h.b16 %v240
        %v1320 = vunpack.c.l.b16 %v241
        %v1321 = vunpack.c.h.b16 %v241
        %v1322 = vunpack.c.l.b16 %v242
        %v1323 = vunpack.c.h.b16 %v242
        %v1324 = vunpack.c.l.b16 %v243
        %v1325 = vunpack.c.h.b16 %v243
        %v1326 = vunpack.c.l.b16 %v244
        %v1327 = vunpack.c.h.b16 %v244
        %v1328 = vunpack.c.l.b16 %v245
        %v1329 = vunpack.c.h.b16 %v245
        %v1330 = vunpack.c.l.b16 %v246
        %v1331 = vunpack.c.h.b16 %v246
        %v1332 = vunpack.c.l.b16 %v247
        %v1333 = vunpack.c.h.b16 %v247
        %v1334 = vunpack.c.l.b16 %v248
        %v1335 = vunpack.c.h.b16 %v248
        %v1336 = vunpack.c.l.b16 %v249
        %v1337 = vunpack.c.h.b16 %v249
        %v1338 = vunpack.c.l.b16 %v250
        %v1339 = vunpack.c.h.b16 %v250
        %v1340 = vunpack.c.l.b16 %v251
        %v1341 = vunpack.c.h.b16 %v251
        %v1342 = vunpack.c.l.b16 %v252
        %v1343 = vunpack.c.h.b16 %v252
        %v1344 = vunpack.c.l.b16 %v253
        %v1345 = vunpack.c.h.b16 %v253
        %v1346 = vunpack.c.l.b16 %v254
        %v1347 = vunpack.c.h.b16 %v254
        %v1348 = vunpack.c.l.b16 %v255
        %v1349 = vunpack.c.h.b16 %v255
        %v1350 = vpack.c.b16 %v1318, %v1318
        %v1351 = vpack.c.b16 %v1319, %v1319
        %v1352 = vpack.c.b16 %v1320, %v1320
        %v1353 = vpack.c.b16 %v1321, %v1321
        %v1354 = vpack.c.b16 %v1322, %v1322
        %v1355 = vpack.c.b16 %v1323, %v1323
        %v1356 = vpack.c.b16 %v1324, %v1324
        %v1357 = vpack.c.b16 %v1325, %v1325
        %v1358 = vpack.c.b16 %v1326, %v1326
        %v1359 = vpack.c.b16 %v1327, %v1327
        %v1360 = vpack.c.b16 %v1328, %v1328
        %v1361 = vpack.c.b16 %v1329, %v1329
        %v1362 = vpack.c.b16 %v1330, %v1330
        %v1363 = vpack.c.b16 %v1331, %v1331
        %v1364 = vpack.c.b16 %v1332, %v1332
        %v1365 = vpack.c.b16 %v1333, %v1333
        %v1366 = vpack.c.b16 %v1334, %v1334
        %v1367 = vpack.c.b16 %v1335, %v1335
        %v1368 = vpack.c.b16 %v1336, %v1336
        %v1369 = vpack.c.b16 %v1337, %v1337
        %v1370 = vpack.c.b16 %v1338, %v1338
        %v1371 = vpack.c.b16 %v1339, %v1339
        %v1372 = vpack.c.b16 %v1340, %v1340
        %v1373 = vpack.c.b16 %v1341, %v1341
        %v1374 = vpack.c.b16 %v1342, %v1342
        %v1375 = vpack.c.b16 %v1343, %v1343
        %v1376 = vpack.c.b16 %v1344, %v1344
        %v1377 = vpack.c.b16 %v1345, %v1345
        %v1378 = vpack.c.b16 %v1346, %v1346
        %v1379 = vpack.c.b16 %v1347, %v1347
        %v1380 = vpack.c.b16 %v1348, %v1348
        %v1381 = vpack.c.b16 %v1349, %v1349
        %v2438 = vunpack.c.l.b16 %v256
        %v2439 = vunpack.c.h.b16 %v256
        %v2440 = vunpack.c.l.b16 %v257
        %v2441 = vunpack.c.h.b16 %v257
        %v2442 = vunpack.c.l.b16 %v258
        %v2443 = vunpack.c.h.b16 %v258
        %v2444 = vunpack.c.l.b16 %v259
        %v2445 = vunpack.c.h.b16 %v259
        %v2446 = vunpack.c.l.b16 %v260
        %v2447 = vunpack.c.h.b16 %v260
        %v2448 = vunpack.c.l.b16 %v261
        %v2449 = vunpack.c.h.b16 %v261
        %v2450 = vunpack.c.l.b16 %v262
        %v2451 = vunpack.c.h.b16 %v262
        %v2452 = vunpack.c.l.b16 %v263
        %v2453 = vunpack.c.h.b16 %v263
        %v2454 = vunpack.c.l.b16 %v264
        %v2455 = vunpack.c.h.b16 %v264
        %v2456 = vunpack.c.l.b16 %v265
        %v2457 = vunpack.c.h.b16 %v265
        %v2458 = vunpack.c.l.b16 %v266
        %v2459 = vunpack.c.h.b16 %v266
        %v2460 = vunpack.c.l.b16 %v267
        %v2461 = vunpack.c.h.b16 %v267
        %v2462 = vunpack.c.l.b16 %v268
        %v2463 = vunpack.c.h.b16 %v268
        %v2464 = vunpack.c.l.b16 %v269
        %v2465 = vunpack.c.h.b16 %v269
        %v2466 = vunpack.c.l.b16 %v270
        %v2467 = vunpack.c.h.b16 %v270
        %v2468 = vunpack.c.l.b16 %v271
        %v2469 = vunpack.c.h.b16 %v271
        %v2470 = vunpack.c.l.b16 %v272
        %v2471 = vunpack.c.h.b16 %v272
        %v2472 = vunpack.c.l.b16 %v273
        %v2473 = vunpack.c.h.b16 %v273
        %v2474 = vunpack.c.l.b16 %v274
        %v2475 = vunpack.c.h.b16 %v274
        %v2476 = vunpack.c.l.b16 %v275
        %v2477 = vunpack.c.h.b16 %v275
        %v2478 = vunpack.c.l.b16 %v276
        %v2479 = vunpack.c.h.b16 %v276
        %v2480 = vunpack.c.l.b16 %v277
        %v2481 = vunpack.c.h.b16 %v277
        %v2482 = vunpack.c.l.b16 %v278
        %v2483 = vunpack.c.h.b16 %v278
        %v2484 = vunpack.c.l.b16 %v279
        %v2485 = vunpack.c.h.b16 %v279
        %v2486 = vunpack.c.l.b16 %v280
        %v2487 = vunpack.c.h.b16 %v280
        %v2488 = vunpack.c.l.b16 %v281
        %v2489 = vunpack.c.h.b16 %v281
        %v2490 = vunpack.c.l.b16 %v282
        %v2491 = vunpack.c.h.b16 %v282
        %v2492 = vunpack.c.l.b16 %v283
        %v2493 = vunpack.c.h.b16 %v283
        %v2494 = vunpack.c.l.b16 %v284
        %v2495 = vunpack.c.h.b16 %v284
        %v2496 = vunpack.c.l.b16 %v285
        %v2497 = vunpack.c.h.b16 %v285
        %v2498 = vunpack.c.l.b16 %v286
        %v2499 = vunpack.c.h.b16 %v286
        %v2500 = vunpack.c.l.b16 %v287
        %v2501 = vunpack.c.h.b16 %v287
        %v2502 = vunpack.c.l.b16 %v288
        %v2503 = vunpack.c.h.b16 %v288
        %v2504 = vunpack.c.l.b16 %v289
        %v2505 = vunpack.c.h.b16 %v289
        %v2506 = vunpack.c.l.b16 %v290
        %v2507 = vunpack.c.h.b16 %v290
        %v2508 = vunpack.c.l.b16 %v291
        %v2509 = vunpack.c.h.b16 %v291
        %v2510 = vunpack.c.l.b16 %v292
        %v2511 = vunpack.c.h.b16 %v292
        %v2512 = vunpack.c.l.b16 %v293
        %v2513 = vunpack.c.h.b16 %v293
        %v2514 = vunpack.c.l.b16 %v294
        %v2515 = vunpack.c.h.b16 %v294
        %v2516 = vunpack.c.l.b16 %v295
        %v2517 = vunpack.c.h.b16 %v295
        %v2518 = vunpack.c.l.b16 %v296
        %v2519 = vunpack.c.h.b16 %v296
        %v2520 = vunpack.c.l.b16 %v297
        %v2521 = vunpack.c.h.b16 %v297
        %v2522 = vunpack.c.l.b16 %v298
        %v2523 = vunpack.c.h.b16 %v298
        %v2524 = vunpack.c.l.b16 %v299
        %v2525 = vunpack.c.h.b16 %v299
        %v2526 = vunpack.c.l.b16 %v300
        %v2527 = vunpack.c.h.b16 %v300
        %v2528 = vunpack.c.l.b16 %v301
        %v2529 = vunpack.c.h.b16 %v301
        %v2530 = vunpack.c.l.b16 %v302
        %v2531 = vunpack.c.h.b16 %v302
        %v2532 = vunpack.c.l.b16 %v303
        %v2533 = vunpack.c.h.b16 %v303
        %v2534 = vunpack.c.l.b16 %v304
        %v2535 = vunpack.c.h.b16 %v304
        %v2536 = vunpack.c.l.b16 %v305
        %v2537 = vunpack.c.h.b16 %v305
        %v2538 = vunpack.c.l.b16 %v306
        %v2539 = vunpack.c.h.b16 %v306
        %v2540 = vunpack.c.l.b16 %v307
        %v2541 = vunpack.c.h.b16 %v307
        %v2542 = vunpack.c.l.b16 %v308
        %v2543 = vunpack.c.h.b16 %v308
        %v2544 = vunpack.c.l.b16 %v309
        %v2545 = vunpack.c.h.b16 %v309
        %v2546 = vunpack.c.l.b16 %v310
        %v2547 = vunpack.c.h.b16 %v310
        %v2548 = vunpack.c.l.b16 %v311
        %v2549 = vunpack.c.h.b16 %v311
        %v2550 = vunpack.c.l.b16 %v312
        %v2551 = vunpack.c.h.b16 %v312
        %v2552 = vunpack.c.l.b16 %v313
        %v2553 = vunpack.c.h.b16 %v313
        %v2554 = vunpack.c.l.b16 %v314
        %v2555 = vunpack.c.h.b16 %v314
        %v2556 = vunpack.c.l.b16 %v315
        %v2557 = vunpack.c.h.b16 %v315
        %v2558 = vunpack.c.l.b16 %v316
        %v2559 = vunpack.c.h.b16 %v316
        %v2560 = vunpack.c.l.b16 %v317
        %v2561 = vunpack.c.h.b16 %v317
        %v2562 = vunpack.c.l.b16 %v318
        %v2563 = vunpack.c.h.b16 %v318
        %v2564 = vunpack.c.l.b16 %v319
        %v2565 = vunpack.c.h.b16 %v319
        %v2566 = vunpack.c.l.b16 %v320
        %v2567 = vunpack.c.h.b16 %v320
        %v2568 = vunpack.c.l.b16 %v321
        %v2569 = vunpack.c.h.b16 %v321
        %v2570 = vunpack.c.l.b16 %v322
        %v2571 = vunpack.c.h.b16 %v322
        %v2572 = vunpack.c.l.b16 %v323
        %v2573 = vunpack.c.h.b16 %v323
        %v2574 = vunpack.c.l.b16 %v324
        %v2575 = vunpack.c.h.b16 %v324
        %v2576 = vunpack.c.l.b16 %v325
        %v2577 = vunpack.c.h.b16 %v325
        %v2578 = vunpack.c.l.b16 %v326
        %v2579 = vunpack.c.h.b16 %v326
        %v2580 = vunpack.c.l.b16 %v327
        %v2581 = vunpack.c.h.b16 %v327
        %v2582 = vunpack.c.l.b16 %v328
        %v2583 = vunpack.c.h.b16 %v328
        %v2584 = vunpack.c.l.b16 %v329
        %v2585 = vunpack.c.h.b16 %v329
        %v2586 = vunpack.c.l.b16 %v330
        %v2587 = vunpack.c.h.b16 %v330
        %v2588 = vunpack.c.l.b16 %v331
        %v2589 = vunpack.c.h.b16 %v331
        %v2590 = vunpack.c.l.b16 %v332
        %v2591 = vunpack.c.h.b16 %v332
        %v2592 = vunpack.c.l.b16 %v333
        %v2593 = vunpack.c.h.b16 %v333
        %v2594 = vunpack.c.l.b16 %v334
        %v2595 = vunpack.c.h.b16 %v334
        %v2596 = vunpack.c.l.b16 %v335
        %v2597 = vunpack.c.h.b16 %v335
        %v2598 = vunpack.c.l.b16 %v336
        %v2599 = vunpack.c.h.b16 %v336
        %v2600 = vunpack.c.l.b16 %v337
        %v2601 = vunpack.c.h.b16 %v337
        %v2602 = vunpack.c.l.b16 %v338
        %v2603 = vunpack.c.h.b16 %v338
        %v2604 = vunpack.c.l.b16 %v339
        %v2605 = vunpack.c.h.b16 %v339
        %v2606 = vunpack.c.l.b16 %v340
        %v2607 = vunpack.c.h.b16 %v340
        %v2608 = vunpack.c.l.b16 %v341
        %v2609 = vunpack.c.h.b16 %v341
        %v2610 = vunpack.c.l.b16 %v342
        %v2611 = vunpack.c.h.b16 %v342
        %v2612 = vunpack.c.l.b16 %v343
        %v2613 = vunpack.c.h.b16 %v343
        %v2614 = vunpack.c.l.b16 %v344
        %v2615 = vunpack.c.h.b16 %v344
        %v2616 = vunpack.c.l.b16 %v345
        %v2617 = vunpack.c.h.b16 %v345
        %v2618 = vunpack.c.l.b16 %v346
        %v2619 = vunpack.c.h.b16 %v346
        %v2620 = vunpack.c.l.b16 %v347
        %v2621 = vunpack.c.h.b16 %v347
        %v2622 = vunpack.c.l.b16 %v348
        %v2623 = vunpack.c.h.b16 %v348
        %v2624 = vunpack.c.l.b16 %v349
        %v2625 = vunpack.c.h.b16 %v349
        %v2626 = vunpack.c.l.b16 %v350
        %v2627 = vunpack.c.h.b16 %v350
        %v2628 = vunpack.c.l.b16 %v351
        %v2629 = vunpack.c.h.b16 %v351
        %v2630 = vunpack.c.l.b16 %v352
        %v2631 = vunpack.c.h.b16 %v352
        %v2632 = vunpack.c.l.b16 %v353
        %v2633 = vunpack.c.h.b16 %v353
        %v2634 = vunpack.c.l.b16 %v354
        %v2635 = vunpack.c.h.b16 %v354
        %v2636 = vunpack.c.l.b16 %v355
        %v2637 = vunpack.c.h.b16 %v355
        %v2638 = vunpack.c.l.b16 %v356
        %v2639 = vunpack.c.h.b16 %v356
        %v2640 = vunpack.c.l.b16 %v357
        %v2641 = vunpack.c.h.b16 %v357
        %v2642 = vunpack.c.l.b16 %v358
        %v2643 = vunpack.c.h.b16 %v358
        %v2644 = vunpack.c.l.b16 %v359
        %v2645 = vunpack.c.h.b16 %v359
        %v2646 = vunpack.c.l.b16 %v360
        %v2647 = vunpack.c.h.b16 %v360
        %v2648 = vunpack.c.l.b16 %v361
        %v2649 = vunpack.c.h.b16 %v361
        %v2650 = vunpack.c.l.b16 %v362
        %v2651 = vunpack.c.h.b16 %v362
        %v2652 = vunpack.c.l.b16 %v363
        %v2653 = vunpack.c.h.b16 %v363
        %v2654 = vunpack.c.l.b16 %v364
        %v2655 = vunpack.c.h.b16 %v364
        %v2656 = vunpack.c.l.b16 %v365
        %v2657 = vunpack.c.h.b16 %v365
        %v2658 = vunpack.c.l.b16 %v366
        %v2659 = vunpack.c.h.b16 %v366
        %v2660 = vunpack.c.l.b16 %v367
        %v2661 = vunpack.c.h.b16 %v367
        %v2662 = vunpack.c.l.b16 %v368
        %v2663 = vunpack.c.h.b16 %v368
        %v2664 = vunpack.c.l.b16 %v369
        %v2665 = vunpack.c.h.b16 %v369
        %v2666 = vunpack.c.l.b16 %v370
        %v2667 = vunpack.c.h.b16 %v370
        %v2668 = vunpack.c.l.b16 %v371
        %v2669 = vunpack.c.h.b16 %v371
        %v2670 = vunpack.c.l.b16 %v372
        %v2671 = vunpack.c.h.b16 %v372
        %v2672 = vunpack.c.l.b16 %v373
        %v2673 = vunpack.c.h.b16 %v373
        %v2674 = vunpack.c.l.b16 %v374
        %v2675 = vunpack.c.h.b16 %v374
        %v2676 = vunpack.c.l.b16 %v375
        %v2677 = vunpack.c.h.b16 %v375
        %v2678 = vunpack.c.l.b16 %v376
        %v2679 = vunpack.c.h.b16 %v376
        %v2680 = vunpack.c.l.b16 %v377
        %v2681 = vunpack.c.h.b16 %v377
        %v2682 = vunpack.c.l.b16 %v378
        %v2683 = vunpack.c.h.b16 %v378
        %v2684 = vunpack.c.l.b16 %v379
        %v2685 = vunpack.c.h.b16 %v379
        %v2686 = vunpack.c.l.b16 %v380
        %v2687 = vunpack.c.h.b16 %v380
        %v2688 = vunpack.c.l.b16 %v381
        %v2689 = vunpack.c.h.b16 %v381
        %v2690 = vunpack.c.l.b16 %v382
        %v2691 = vunpack.c.h.b16 %v382
        %v2692 = vunpack.c.l.b16 %v383
        %v2693 = vunpack.c.h.b16 %v383
        %v2694 = vunpack.c.l.b16 %v384
        %v2695 = vunpack.c.h.b16 %v384
        %v2696 = vunpack.c.l.b16 %v385
        %v2697 = vunpack.c.h.b16 %v385
        %v2698 = vunpack.c.l.b16 %v386
        %v2699 = vunpack.c.h.b16 %v386
        %v2700 = vunpack.c.l.b16 %v387
        %v2701 = vunpack.c.h.b16 %v387
        %v2702 = vunpack.c.l.b16 %v388
        %v2703 = vunpack.c.h.b16 %v388
        %v2704 = vunpack.c.l.b16 %v389
        %v2705 = vunpack.c.h.b16 %v389
        %v2706 = vunpack.c.l.b16 %v390
        %v2707 = vunpack.c.h.b16 %v390
        %v2708 = vunpack.c.l.b16 %v391
        %v2709 = vunpack.c.h.b16 %v391
        %v2710 = vunpack.c.l.b16 %v392
        %v2711 = vunpack.c.h.b16 %v392
        %v2712 = vunpack.c.l.b16 %v393
        %v2713 = vunpack.c.h.b16 %v393
        %v2714 = vunpack.c.l.b16 %v394
        %v2715 = vunpack.c.h.b16 %v394
        %v2716 = vunpack.c.l.b16 %v395
        %v2717 = vunpack.c.h.b16 %v395
        %v2718 = vunpack.c.l.b16 %v396
        %v2719 = vunpack.c.h.b16 %v396
        %v2720 = vunpack.c.l.b16 %v397
        %v2721 = vunpack.c.h.b16 %v397
        %v2722 = vunpack.c.l.b16 %v398
        %v2723 = vunpack.c.h.b16 %v398
        %v2724 = vunpack.c.l.b16 %v399
        %v2725 = vunpack.c.h.b16 %v399
        %v2726 = vunpack.c.l.b16 %v400
        %v2727 = vunpack.c.h.b16 %v400
        %v2728 = vunpack.c.l.b16 %v401
        %v2729 = vunpack.c.h.b16 %v401
        %v2730 = vunpack.c.l.b16 %v402
        %v2731 = vunpack.c.h.b16 %v402
        %v2732 = vunpack.c.l.b16 %v403
        %v2733 = vunpack.c.h.b16 %v403
        %v2734 = vunpack.c.l.b16 %v404
        %v2735 = vunpack.c.h.b16 %v404
        %v2736 = vunpack.c.l.b16 %v405
        %v2737 = vunpack.c.h.b16 %v405
        %v2738 = vunpack.c.l.b16 %v406
        %v2739 = vunpack.c.h.b16 %v406
        %v2740 = vunpack.c.l.b16 %v407
        %v2741 = vunpack.c.h.b16 %v407
        %v2742 = vunpack.c.l.b16 %v408
        %v2743 = vunpack.c.h.b16 %v408
        %v2744 = vunpack.c.l.b16 %v409
        %v2745 = vunpack.c.h.b16 %v409
        %v2746 = vunpack.c.l.b16 %v410
        %v2747 = vunpack.c.h.b16 %v410
        %v2748 = vunpack.c.l.b16 %v411
        %v2749 = vunpack.c.h.b16 %v411
        %v2750 = vunpack.c.l.b16 %v412
        %v2751 = vunpack.c.h.b16 %v412
        %v2752 = vunpack.c.l.b16 %v413
        %v2753 = vunpack.c.h.b16 %v413
        %v2754 = vunpack.c.l.b16 %v414
        %v2755 = vunpack.c.h.b16 %v414
        %v2756 = vunpack.c.l.b16 %v415
        %v2757 = vunpack.c.h.b16 %v415
        %v2758 = vunpack.c.l.b16 %v416
        %v2759 = vunpack.c.h.b16 %v416
        %v2760 = vunpack.c.l.b16 %v417
        %v2761 = vunpack.c.h.b16 %v417
        %v2762 = vunpack.c.l.b16 %v418
        %v2763 = vunpack.c.h.b16 %v418
        %v2764 = vunpack.c.l.b16 %v419
        %v2765 = vunpack.c.h.b16 %v419
        %v2766 = vunpack.c.l.b16 %v420
        %v2767 = vunpack.c.h.b16 %v420
        %v2768 = vunpack.c.l.b16 %v421
        %v2769 = vunpack.c.h.b16 %v421
        %v2770 = vunpack.c.l.b16 %v422
        %v2771 = vunpack.c.h.b16 %v422
        %v2772 = vunpack.c.l.b16 %v423
        %v2773 = vunpack.c.h.b16 %v423
        %v2774 = vunpack.c.l.b16 %v424
        %v2775 = vunpack.c.h.b16 %v424
        %v2776 = vunpack.c.l.b16 %v425
        %v2777 = vunpack.c.h.b16 %v425
        %v2778 = vunpack.c.l.b16 %v426
        %v2779 = vunpack.c.h.b16 %v426
        %v2780 = vunpack.c.l.b16 %v427
        %v2781 = vunpack.c.h.b16 %v427
        %v2782 = vunpack.c.l.b16 %v428
        %v2783 = vunpack.c.h.b16 %v428
        %v2784 = vunpack.c.l.b16 %v429
        %v2785 = vunpack.c.h.b16 %v429
        %v2786 = vunpack.c.l.b16 %v430
        %v2787 = vunpack.c.h.b16 %v430
        %v2788 = vunpack.c.l.b16 %v431
        %v2789 = vunpack.c.h.b16 %v431
        %v2790 = vunpack.c.l.b16 %v432
        %v2791 = vunpack.c.h.b16 %v432
        %v2792 = vunpack.c.l.b16 %v433
        %v2793 = vunpack.c.h.b16 %v433
        %v2794 = vunpack.c.l.b16 %v434
        %v2795 = vunpack.c.h.b16 %v434
        %v2796 = vunpack.c.l.b16 %v435
        %v2797 = vunpack.c.h.b16 %v435
        %v2798 = vunpack.c.l.b16 %v436
        %v2799 = vunpack.c.h.b16 %v436
        %v2800 = vunpack.c.l.b16 %v437
        %v2801 = vunpack.c.h.b16 %v437
        %v2802 = vunpack.c.l.b16 %v438
        %v2803 = vunpack.c.h.b16 %v438
        %v2804 = vunpack.c.l.b16 %v439
        %v2805 = vunpack.c.h.b16 %v439
        %v2806 = vunpack.c.l.b16 %v440
        %v2807 = vunpack.c.h.b16 %v440
        %v2808 = vunpack.c.l.b16 %v441
        %v2809 = vunpack.c.h.b16 %v441
        %v2810 = vunpack.c.l.b16 %v442
        %v2811 = vunpack.c.h.b16 %v442
        %v2812 = vunpack.c.l.b16 %v443
        %v2813 = vunpack.c.h.b16 %v443
        %v2814 = vunpack.c.l.b16 %v444
        %v2815 = vunpack.c.h.b16 %v444
        %v2816 = vunpack.c.l.b16 %v445
        %v2817 = vunpack.c.h.b16 %v445
        %v2818 = vunpack.c.l.b16 %v446
        %v2819 = vunpack.c.h.b16 %v446
        %v2820 = vunpack.c.l.b16 %v447
        %v2821 = vunpack.c.h.b16 %v447
        %v2822 = vunpack.c.l.b16 %v448
        %v2823 = vunpack.c.h.b16 %v448
        %v2824 = vunpack.c.l.b16 %v449
        %v2825 = vunpack.c.h.b16 %v449
        %v2826 = vunpack.c.l.b16 %v450
        %v2827 = vunpack.c.h.b16 %v450
        %v2828 = vunpack.c.l.b16 %v451
        %v2829 = vunpack.c.h.b16 %v451
        %v2830 = vunpack.c.l.b16 %v452
        %v2831 = vunpack.c.h.b16 %v452
        %v2832 = vunpack.c.l.b16 %v453
        %v2833 = vunpack.c.h.b16 %v453
        %v2834 = vunpack.c.l.b16 %v454
        %v2835 = vunpack.c.h.b16 %v454
        %v2836 = vunpack.c.l.b16 %v455
        %v2837 = vunpack.c.h.b16 %v455
        %v2838 = vunpack.c.l.b16 %v456
        %v2839 = vunpack.c.h.b16 %v456
        %v2840 = vunpack.c.l.b16 %v457
        %v2841 = vunpack.c.h.b16 %v457
        %v2842 = vunpack.c.l.b16 %v458
        %v2843 = vunpack.c.h.b16 %v458
        %v2844 = vunpack.c.l.b16 %v459
        %v2845 = vunpack.c.h.b16 %v459
        %v2846 = vunpack.c.l.b16 %v460
        %v2847 = vunpack.c.h.b16 %v460
        %v2848 = vunpack.c.l.b16 %v461
        %v2849 = vunpack.c.h.b16 %v461
        %v2850 = vunpack.c.l.b16 %v462
        %v2851 = vunpack.c.h.b16 %v462
        %v2852 = vunpack.c.l.b16 %v463
        %v2853 = vunpack.c.h.b16 %v463
        %v2854 = vunpack.c.l.b16 %v464
        %v2855 = vunpack.c.h.b16 %v464
        %v2856 = vunpack.c.l.b16 %v465
        %v2857 = vunpack.c.h.b16 %v465
        %v2858 = vunpack.c.l.b16 %v466
        %v2859 = vunpack.c.h.b16 %v466
        %v2860 = vunpack.c.l.b16 %v467
        %v2861 = vunpack.c.h.b16 %v467
        %v2862 = vunpack.c.l.b16 %v468
        %v2863 = vunpack.c.h.b16 %v468
        %v2864 = vunpack.c.l.b16 %v469
        %v2865 = vunpack.c.h.b16 %v469
        %v2866 = vunpack.c.l.b16 %v470
        %v2867 = vunpack.c.h.b16 %v470
        %v2868 = vunpack.c.l.b16 %v471
        %v2869 = vunpack.c.h.b16 %v471
        %v2870 = vunpack.c.l.b16 %v472
        %v2871 = vunpack.c.h.b16 %v472
        %v2872 = vunpack.c.l.b16 %v473
        %v2873 = vunpack.c.h.b16 %v473
        %v2874 = vunpack.c.l.b16 %v474
        %v2875 = vunpack.c.h.b16 %v474
        %v2876 = vunpack.c.l.b16 %v475
        %v2877 = vunpack.c.h.b16 %v475
        %v2878 = vunpack.c.l.b16 %v476
        %v2879 = vunpack.c.h.b16 %v476
        %v2880 = vunpack.c.l.b16 %v477
        %v2881 = vunpack.c.h.b16 %v477
        %v2882 = vunpack.c.l.b16 %v478
        %v2883 = vunpack.c.h.b16 %v478
        %v2884 = vunpack.c.l.b16 %v479
        %v2885 = vunpack.c.h.b16 %v479
        %v2886 = vunpack.c.l.b16 %v480
        %v2887 = vunpack.c.h.b16 %v480
        %v2888 = vunpack.c.l.b16 %v481
        %v2889 = vunpack.c.h.b16 %v481
        %v2890 = vunpack.c.l.b16 %v482
        %v2891 = vunpack.c.h.b16 %v482
        %v2892 = vunpack.c.l.b16 %v483
        %v2893 = vunpack.c.h.b16 %v483
        %v2894 = vunpack.c.l.b16 %v484
        %v2895 = vunpack.c.h.b16 %v484
        %v2896 = vunpack.c.l.b16 %v485
        %v2897 = vunpack.c.h.b16 %v485
        %v2898 = vunpack.c.l.b16 %v486
        %v2899 = vunpack.c.h.b16 %v486
        %v2900 = vunpack.c.l.b16 %v487
        %v2901 = vunpack.c.h.b16 %v487
        %v2902 = vunpack.c.l.b16 %v488
        %v2903 = vunpack.c.h.b16 %v488
        %v2904 = vunpack.c.l.b16 %v489
        %v2905 = vunpack.c.h.b16 %v489
        %v2906 = vunpack.c.l.b16 %v490
        %v2907 = vunpack.c.h.b16 %v490
        %v2908 = vunpack.c.l.b16 %v491
        %v2909 = vunpack.c.h.b16 %v491
        %v2910 = vunpack.c.l.b16 %v492
        %v2911 = vunpack.c.h.b16 %v492
        %v2912 = vunpack.c.l.b16 %v493
        %v2913 = vunpack.c.h.b16 %v493
        %v2914 = vunpack.c.l.b16 %v494
        %v2915 = vunpack.c.h.b16 %v494
        %v2916 = vunpack.c.l.b16 %v495
        %v2917 = vunpack.c.h.b16 %v495
        %v2918 = vunpack.c.l.b16 %v496
        %v2919 = vunpack.c.h.b16 %v496
        %v2920 = vunpack.c.l.b16 %v497
        %v2921 = vunpack.c.h.b16 %v497
        %v2922 = vunpack.c.l.b16 %v498
        %v2923 = vunpack.c.h.b16 %v498
        %v2924 = vunpack.c.l.b16 %v499
        %v2925 = vunpack.c.h.b16 %v499
        %v2926 = vunpack.c.l.b16 %v500
        %v2927 = vunpack.c.h.b16 %v500
        %v2928 = vunpack.c.l.b16 %v501
        %v2929 = vunpack.c.h.b16 %v501
        %v2930 = vunpack.c.l.b16 %v502
        %v2931 = vunpack.c.h.b16 %v502
        %v2932 = vunpack.c.l.b16 %v503
        %v2933 = vunpack.c.h.b16 %v503
        %v2934 = vunpack.c.l.b16 %v504
        %v2935 = vunpack.c.h.b16 %v504
        %v2936 = vunpack.c.l.b16 %v505
        %v2937 = vunpack.c.h.b16 %v505
        %v2938 = vunpack.c.l.b16 %v506
        %v2939 = vunpack.c.h.b16 %v506
        %v2940 = vunpack.c.l.b16 %v507
        %v2941 = vunpack.c.h.b16 %v507
        %v2942 = vunpack.c.l.b16 %v508
        %v2943 = vunpack.c.h.b16 %v508
        %v2944 = vunpack.c.l.b16 %v509
        %v2945 = vunpack.c.h.b16 %v509
        %v2946 = vunpack.c.l.b16 %v510
        %v2947 = vunpack.c.h.b16 %v510
        %v2948 = vunpack.c.l.b16 %v511
        %v2949 = vunpack.c.h.b16 %v511
        %v2950 = vunpack.c.l.b16 %v512
        %v2951 = vunpack.c.h.b16 %v512
        %v2952 = vunpack.c.l.b16 %v513
        %v2953 = vunpack.c.h.b16 %v513
        %v2954 = vunpack.c.l.b16 %v514
        %v2955 = vunpack.c.h.b16 %v514
        %v2956 = vunpack.c.l.b16 %v515
        %v2957 = vunpack.c.h.b16 %v515
        %v2958 = vunpack.c.l.b16 %v516
        %v2959 = vunpack.c.h.b16 %v516
        %v2960 = vunpack.c.l.b16 %v517
        %v2961 = vunpack.c.h.b16 %v517
        %v2962 = vunpack.c.l.b16 %v518
        %v2963 = vunpack.c.h.b16 %v518
        %v2964 = vunpack.c.l.b16 %v519
        %v2965 = vunpack.c.h.b16 %v519
        %v2966 = vunpack.c.l.b16 %v520
        %v2967 = vunpack.c.h.b16 %v520
        %v2968 = vunpack.c.l.b16 %v521
        %v2969 = vunpack.c.h.b16 %v521
        %v2970 = vunpack.c.l.b16 %v522
        %v2971 = vunpack.c.h.b16 %v522
        %v2972 = vunpack.c.l.b16 %v523
        %v2973 = vunpack.c.h.b16 %v523
        %v2974 = vunpack.c.l.b16 %v524
        %v2975 = vunpack.c.h.b16 %v524
        %v2976 = vunpack.c.l.b16 %v525
        %v2977 = vunpack.c.h.b16 %v525
        %v2978 = vunpack.c.l.b16 %v526
        %v2979 = vunpack.c.h.b16 %v526
        %v2980 = vunpack.c.l.b16 %v527
        %v2981 = vunpack.c.h.b16 %v527
        %v2982 = vunpack.c.l.b16 %v528
        %v2983 = vunpack.c.h.b16 %v528
        %v2984 = vunpack.c.l.b16 %v529
        %v2985 = vunpack.c.h.b16 %v529
        %v2986 = vunpack.c.l.b16 %v530
        %v2987 = vunpack.c.h.b16 %v530
        %v2988 = vunpack.c.l.b16 %v531
        %v2989 = vunpack.c.h.b16 %v531
        %v2990 = vunpack.c.l.b16 %v532
        %v2991 = vunpack.c.h.b16 %v532
        %v2992 = vunpack.c.l.b16 %v533
        %v2993 = vunpack.c.h.b16 %v533
        %v2994 = vunpack.c.l.b16 %v534
        %v2995 = vunpack.c.h.b16 %v534
        %v2996 = vunpack.c.l.b16 %v535
        %v2997 = vunpack.c.h.b16 %v535
        %v2998 = vunpack.c.l.b16 %v536
        %v2999 = vunpack.c.h.b16 %v536
        %v3000 = vunpack.c.l.b16 %v537
        %v3001 = vunpack.c.h.b16 %v537
        %v3002 = vunpack.c.l.b16 %v538
        %v3003 = vunpack.c.h.b16 %v538
        %v3004 = vunpack.c.l.b16 %v539
        %v3005 = vunpack.c.h.b16 %v539
        %v3006 = vunpack.c.l.b16 %v540
        %v3007 = vunpack.c.h.b16 %v540
        %v3008 = vunpack.c.l.b16 %v541
        %v3009 = vunpack.c.h.b16 %v541
        %v3010 = vunpack.c.l.b16 %v542
        %v3011 = vunpack.c.h.b16 %v542
        %v3012 = vunpack.c.l.b16 %v543
        %v3013 = vunpack.c.h.b16 %v543
        %v3014 = vunpack.c.l.b16 %v544
        %v3015 = vunpack.c.h.b16 %v544
        %v3016 = vunpack.c.l.b16 %v545
        %v3017 = vunpack.c.h.b16 %v545
        %v3018 = vunpack.c.l.b16 %v546
        %v3019 = vunpack.c.h.b16 %v546
        %v3020 = vunpack.c.l.b16 %v547
        %v3021 = vunpack.c.h.b16 %v547
        %v3022 = vunpack.c.l.b16 %v548
        %v3023 = vunpack.c.h.b16 %v548
        %v3024 = vunpack.c.l.b16 %v549
        %v3025 = vunpack.c.h.b16 %v549
        %v3026 = vunpack.c.l.b16 %v550
        %v3027 = vunpack.c.h.b16 %v550
        %v3028 = vunpack.c.l.b16 %v551
        %v3029 = vunpack.c.h.b16 %v551
        %v3030 = vunpack.c.l.b16 %v552
        %v3031 = vunpack.c.h.b16 %v552
        %v3032 = vunpack.c.l.b16 %v553
        %v3033 = vunpack.c.h.b16 %v553
        %v3034 = vunpack.c.l.b16 %v554
        %v3035 = vunpack.c.h.b16 %v554
        %v3036 = vunpack.c.l.b16 %v555
        %v3037 = vunpack.c.h.b16 %v555
        %v3038 = vunpack.c.l.b16 %v556
        %v3039 = vunpack.c.h.b16 %v556
        %v3040 = vunpack.c.l.b16 %v557
        %v3041 = vunpack.c.h.b16 %v557
        %v3042 = vunpack.c.l.b16 %v558
        %v3043 = vunpack.c.h.b16 %v558
        %v3044 = vunpack.c.l.b16 %v559
        %v3045 = vunpack.c.h.b16 %v559
        %v3046 = vunpack.c.l.b16 %v560
        %v3047 = vunpack.c.h.b16 %v560
        %v3048 = vunpack.c.l.b16 %v561
        %v3049 = vunpack.c.h.b16 %v561
        %v3050 = vunpack.c.l.b16 %v562
        %v3051 = vunpack.c.h.b16 %v562
        %v3052 = vunpack.c.l.b16 %v563
        %v3053 = vunpack.c.h.b16 %v563
        %v3054 = vunpack.c.l.b16 %v564
        %v3055 = vunpack.c.h.b16 %v564
        %v3056 = vunpack.c.l.b16 %v565
        %v3057 = vunpack.c.h.b16 %v565
        %v3058 = vunpack.c.l.b16 %v566
        %v3059 = vunpack.c.h.b16 %v566
        %v3060 = vunpack.c.l.b16 %v567
        %v3061 = vunpack.c.h.b16 %v567
        %v3062 = vunpack.c.l.b16 %v568
        %v3063 = vunpack.c.h.b16 %v568
        %v3064 = vunpack.c.l.b16 %v569
        %v3065 = vunpack.c.h.b16 %v569
        %v3066 = vunpack.c.l.b16 %v570
        %v3067 = vunpack.c.h.b16 %v570
        %v3068 = vunpack.c.l.b16 %v571
        %v3069 = vunpack.c.h.b16 %v571
        %v3070 = vunpack.c.l.b16 %v572
        %v3071 = vunpack.c.h.b16 %v572
        %v3072 = vunpack.c.l.b16 %v573
        %v3073 = vunpack.c.h.b16 %v573
        %v3074 = vunpack.c.l.b16 %v574
        %v3075 = vunpack.c.h.b16 %v574
        %v3076 = vunpack.c.l.b16 %v575
        %v3077 = vunpack.c.h.b16 %v575
        %v3078 = vunpack.c.l.b16 %v576
        %v3079 = vunpack.c.h.b16 %v576
        %v3080 = vunpack.c.l.b16 %v577
        %v3081 = vunpack.c.h.b16 %v577
        %v3082 = vunpack.c.l.b16 %v578
        %v3083 = vunpack.c.h.b16 %v578
        %v3084 = vunpack.c.l.b16 %v579
        %v3085 = vunpack.c.h.b16 %v579
        %v3086 = vunpack.c.l.b16 %v580
        %v3087 = vunpack.c.h.b16 %v580
        %v3088 = vunpack.c.l.b16 %v581
        %v3089 = vunpack.c.h.b16 %v581
        %v3090 = vunpack.c.l.b16 %v582
        %v3091 = vunpack.c.h.b16 %v582
        %v3092 = vunpack.c.l.b16 %v583
        %v3093 = vunpack.c.h.b16 %v583
        %v3094 = vunpack.c.l.b16 %v584
        %v3095 = vunpack.c.h.b16 %v584
        %v3096 = vunpack.c.l.b16 %v585
        %v3097 = vunpack.c.h.b16 %v585
        %v3098 = vunpack.c.l.b16 %v586
        %v3099 = vunpack.c.h.b16 %v586
        %v3100 = vunpack.c.l.b16 %v587
        %v3101 = vunpack.c.h.b16 %v587
        %v3102 = vunpack.c.l.b16 %v588
        %v3103 = vunpack.c.h.b16 %v588
        %v3104 = vunpack.c.l.b16 %v589
        %v3105 = vunpack.c.h.b16 %v589
        %v3106 = vunpack.c.l.b16 %v590
        %v3107 = vunpack.c.h.b16 %v590
        %v3108 = vunpack.c.l.b16 %v591
        %v3109 = vunpack.c.h.b16 %v591
        %v3110 = vunpack.c.l.b16 %v592
        %v3111 = vunpack.c.h.b16 %v592
        %v3112 = vunpack.c.l.b16 %v593
        %v3113 = vunpack.c.h.b16 %v593
        %v3114 = vunpack.c.l.b16 %v594
        %v3115 = vunpack.c.h.b16 %v594
        %v3116 = vunpack.c.l.b16 %v595
        %v3117 = vunpack.c.h.b16 %v595
        %v3118 = vunpack.c.l.b16 %v596
        %v3119 = vunpack.c.h.b16 %v596
        %v3120 = vunpack.c.l.b16 %v597
        %v3121 = vunpack.c.h.b16 %v597
        %v3122 = vunpack.c.l.b16 %v598
        %v3123 = vunpack.c.h.b16 %v598
        %v3124 = vunpack.c.l.b16 %v599
        %v3125 = vunpack.c.h.b16 %v599
        %v3126 = vunpack.c.l.b16 %v600
        %v3127 = vunpack.c.h.b16 %v600
        %v3128 = vunpack.c.l.b16 %v601
        %v3129 = vunpack.c.h.b16 %v601
        %v3130 = vunpack.c.l.b16 %v602
        %v3131 = vunpack.c.h.b16 %v602
        %v3132 = vunpack.c.l.b16 %v603
        %v3133 = vunpack.c.h.b16 %v603
        %v3134 = vunpack.c.l.b16 %v604
        %v3135 = vunpack.c.h.b16 %v604
        %v3136 = vunpack.c.l.b16 %v605
        %v3137 = vunpack.c.h.b16 %v605
        %v3138 = vunpack.c.l.b16 %v606
        %v3139 = vunpack.c.h.b16 %v606
        %v3140 = vunpack.c.l.b16 %v607
        %v3141 = vunpack.c.h.b16 %v607
        %v3142 = vunpack.c.l.b16 %v608
        %v3143 = vunpack.c.h.b16 %v608
        %v3144 = vunpack.c.l.b16 %v609
        %v3145 = vunpack.c.h.b16 %v609
        %v3146 = vunpack.c.l.b16 %v610
        %v3147 = vunpack.c.h.b16 %v610
        %v3148 = vunpack.c.l.b16 %v611
        %v3149 = vunpack.c.h.b16 %v611
        %v3150 = vunpack.c.l.b16 %v612
        %v3151 = vunpack.c.h.b16 %v612
        %v3152 = vunpack.c.l.b16 %v613
        %v3153 = vunpack.c.h.b16 %v613
        %v3154 = vunpack.c.l.b16 %v614
        %v3155 = vunpack.c.h.b16 %v614
        %v3156 = vunpack.c.l.b16 %v615
        %v3157 = vunpack.c.h.b16 %v615
        %v3158 = vunpack.c.l.b16 %v616
        %v3159 = vunpack.c.h.b16 %v616
        %v3160 = vunpack.c.l.b16 %v617
        %v3161 = vunpack.c.h.b16 %v617
        %v3162 = vunpack.c.l.b16 %v618
        %v3163 = vunpack.c.h.b16 %v618
        %v3164 = vunpack.c.l.b16 %v619
        %v3165 = vunpack.c.h.b16 %v619
        %v3166 = vunpack.c.l.b16 %v620
        %v3167 = vunpack.c.h.b16 %v620
        %v3168 = vunpack.c.l.b16 %v621
        %v3169 = vunpack.c.h.b16 %v621
        %v3170 = vunpack.c.l.b16 %v622
        %v3171 = vunpack.c.h.b16 %v622
        %v3172 = vunpack.c.l.b16 %v623
        %v3173 = vunpack.c.h.b16 %v623
        %v3174 = vunpack.c.l.b16 %v624
        %v3175 = vunpack.c.h.b16 %v624
        %v3176 = vunpack.c.l.b16 %v625
        %v3177 = vunpack.c.h.b16 %v625
        %v3178 = vunpack.c.l.b16 %v626
        %v3179 = vunpack.c.h.b16 %v626
        %v3180 = vunpack.c.l.b16 %v627
        %v3181 = vunpack.c.h.b16 %v627
        %v3182 = vunpack.c.l.b16 %v628
        %v3183 = vunpack.c.h.b16 %v628
        %v3184 = vunpack.c.l.b16 %v629
        %v3185 = vunpack.c.h.b16 %v629
        %v3186 = vunpack.c.l.b16 %v630
        %v3187 = vunpack.c.h.b16 %v630
        %v3188 = vunpack.c.l.b16 %v631
        %v3189 = vunpack.c.h.b16 %v631
        %v3190 = vunpack.c.l.b16 %v632
        %v3191 = vunpack.c.h.b16 %v632
        %v3192 = vunpack.c.l.b16 %v633
        %v3193 = vunpack.c.h.b16 %v633
        %v3194 = vunpack.c.l.b16 %v634
        %v3195 = vunpack.c.h.b16 %v634
        %v3196 = vunpack.c.l.b16 %v635
        %v3197 = vunpack.c.h.b16 %v635
        %v3198 = vunpack.c.l.b16 %v636
        %v3199 = vunpack.c.h.b16 %v636
        %v3200 = vunpack.c.l.b16 %v637
        %v3201 = vunpack.c.h.b16 %v637
        %v3202 = vunpack.c.l.b16 %v638
        %v3203 = vunpack.c.h.b16 %v638
        %v3204 = vunpack.c.l.b16 %v639
        %v3205 = vunpack.c.h.b16 %v639
        %v3206 = vunpack.c.l.b16 %v640
        %v3207 = vunpack.c.h.b16 %v640
        %v3208 = vunpack.c.l.b16 %v641
        %v3209 = vunpack.c.h.b16 %v641
        %v3210 = vunpack.c.l.b16 %v642
        %v3211 = vunpack.c.h.b16 %v642
        %v3212 = vunpack.c.l.b16 %v643
        %v3213 = vunpack.c.h.b16 %v643
        %v3214 = vunpack.c.l.b16 %v644
        %v3215 = vunpack.c.h.b16 %v644
        %v3216 = vunpack.c.l.b16 %v645
        %v3217 = vunpack.c.h.b16 %v645
        %v3218 = vunpack.c.l.b16 %v646
        %v3219 = vunpack.c.h.b16 %v646
        %v3220 = vunpack.c.l.b16 %v647
        %v3221 = vunpack.c.h.b16 %v647
        %v3222 = vunpack.c.l.b16 %v648
        %v3223 = vunpack.c.h.b16 %v648
        %v3224 = vunpack.c.l.b16 %v649
        %v3225 = vunpack.c.h.b16 %v649
        %v3226 = vunpack.c.l.b16 %v650
        %v3227 = vunpack.c.h.b16 %v650
        %v3228 = vunpack.c.l.b16 %v651
        %v3229 = vunpack.c.h.b16 %v651
        %v3230 = vunpack.c.l.b16 %v652
        %v3231 = vunpack.c.h.b16 %v652
        %v3232 = vunpack.c.l.b16 %v653
        %v3233 = vunpack.c.h.b16 %v653
        %v3234 = vunpack.c.l.b16 %v654
        %v3235 = vunpack.c.h.b16 %v654
        %v3236 = vunpack.c.l.b16 %v655
        %v3237 = vunpack.c.h.b16 %v655
        %v3238 = vunpack.c.l.b16 %v656
        %v3239 = vunpack.c.h.b16 %v656
        %v3240 = vunpack.c.l.b16 %v657
        %v3241 = vunpack.c.h.b16 %v657
        %v3242 = vunpack.c.l.b16 %v658
        %v3243 = vunpack.c.h.b16 %v658
        %v3244 = vunpack.c.l.b16 %v659
        %v3245 = vunpack.c.h.b16 %v659
        %v3246 = vunpack.c.l.b16 %v660
        %v3247 = vunpack.c.h.b16 %v660
        %v3248 = vunpack.c.l.b16 %v661
        %v3249 = vunpack.c.h.b16 %v661
        %v3250 = vunpack.c.l.b16 %v662
        %v3251 = vunpack.c.h.b16 %v662
        %v3252 = vunpack.c.l.b16 %v663
        %v3253 = vunpack.c.h.b16 %v663
        %v3254 = vunpack.c.l.b16 %v664
        %v3255 = vunpack.c.h.b16 %v664
        %v3256 = vunpack.c.l.b16 %v665
        %v3257 = vunpack.c.h.b16 %v665
        %v3258 = vunpack.c.l.b16 %v666
        %v3259 = vunpack.c.h.b16 %v666
        %v3260 = vunpack.c.l.b16 %v667
        %v3261 = vunpack.c.h.b16 %v667
        %v3262 = vunpack.c.l.b16 %v668
        %v3263 = vunpack.c.h.b16 %v668
        %v3264 = vunpack.c.l.b16 %v669
        %v3265 = vunpack.c.h.b16 %v669
        %v3266 = vunpack.c.l.b16 %v670
        %v3267 = vunpack.c.h.b16 %v670
        %v3268 = vunpack.c.l.b16 %v671
        %v3269 = vunpack.c.h.b16 %v671
        %v3270 = vunpack.c.l.b16 %v672
        %v3271 = vunpack.c.h.b16 %v672
        %v3272 = vunpack.c.l.b16 %v673
        %v3273 = vunpack.c.h.b16 %v673
        %v3274 = vunpack.c.l.b16 %v674
        %v3275 = vunpack.c.h.b16 %v674
        %v3276 = vunpack.c.l.b16 %v675
        %v3277 = vunpack.c.h.b16 %v675
        %v3278 = vunpack.c.l.b16 %v676
        %v3279 = vunpack.c.h.b16 %v676
        %v3280 = vunpack.c.l.b16 %v677
        %v3281 = vunpack.c.h.b16 %v677
        %v3282 = vunpack.c.l.b16 %v678
        %v3283 = vunpack.c.h.b16 %v678
        %v3284 = vunpack.c.l.b16 %v679
        %v3285 = vunpack.c.h.b16 %v679
        %v3286 = vunpack.c.l.b16 %v680
        %v3287 = vunpack.c.h.b16 %v680
        %v3288 = vunpack.c.l.b16 %v681
        %v3289 = vunpack.c.h.b16 %v681
        %v3290 = vunpack.c.l.b16 %v682
        %v3291 = vunpack.c.h.b16 %v682
        %v3292 = vunpack.c.l.b16 %v683
        %v3293 = vunpack.c.h.b16 %v683
        %v3294 = vunpack.c.l.b16 %v684
        %v3295 = vunpack.c.h.b16 %v684
        %v3296 = vunpack.c.l.b16 %v685
        %v3297 = vunpack.c.h.b16 %v685
        %v3298 = vunpack.c.l.b16 %v686
        %v3299 = vunpack.c.h.b16 %v686
        %v3300 = vunpack.c.l.b16 %v687
        %v3301 = vunpack.c.h.b16 %v687
        %v3302 = vunpack.c.l.b16 %v688
        %v3303 = vunpack.c.h.b16 %v688
        %v3304 = vunpack.c.l.b16 %v689
        %v3305 = vunpack.c.h.b16 %v689
        %v3306 = vunpack.c.l.b16 %v690
        %v3307 = vunpack.c.h.b16 %v690
        %v3308 = vunpack.c.l.b16 %v691
        %v3309 = vunpack.c.h.b16 %v691
        %v3310 = vunpack.c.l.b16 %v692
        %v3311 = vunpack.c.h.b16 %v692
        %v3312 = vunpack.c.l.b16 %v693
        %v3313 = vunpack.c.h.b16 %v693
        %v3314 = vunpack.c.l.b16 %v694
        %v3315 = vunpack.c.h.b16 %v694
        %v3316 = vunpack.c.l.b16 %v695
        %v3317 = vunpack.c.h.b16 %v695
        %v3318 = vunpack.c.l.b16 %v696
        %v3319 = vunpack.c.h.b16 %v696
        %v3320 = vunpack.c.l.b16 %v697
        %v3321 = vunpack.c.h.b16 %v697
        %v3322 = vunpack.c.l.b16 %v698
        %v3323 = vunpack.c.h.b16 %v698
        %v3324 = vunpack.c.l.b16 %v699
        %v3325 = vunpack.c.h.b16 %v699
        %v3326 = vunpack.c.l.b16 %v700
        %v3327 = vunpack.c.h.b16 %v700
        %v3328 = vunpack.c.l.b16 %v701
        %v3329 = vunpack.c.h.b16 %v701
        %v3330 = vunpack.c.l.b16 %v702
        %v3331 = vunpack.c.h.b16 %v702
        %v3332 = vunpack.c.l.b16 %v703
        %v3333 = vunpack.c.h.b16 %v703
        %v3334 = vunpack.c.l.b16 %v704
        %v3335 = vunpack.c.h.b16 %v704
        %v3336 = vunpack.c.l.b16 %v705
        %v3337 = vunpack.c.h.b16 %v705
        %v3338 = vunpack.c.l.b16 %v706
        %v3339 = vunpack.c.h.b16 %v706
        %v3340 = vunpack.c.l.b16 %v707
        %v3341 = vunpack.c.h.b16 %v707
        %v3342 = vunpack.c.l.b16 %v708
        %v3343 = vunpack.c.h.b16 %v708
        %v3344 = vunpack.c.l.b16 %v709
        %v3345 = vunpack.c.h.b16 %v709
        %v3346 = vunpack.c.l.b16 %v710
        %v3347 = vunpack.c.h.b16 %v710
        %v3348 = vunpack.c.l.b16 %v711
        %v3349 = vunpack.c.h.b16 %v711
        %v3350 = vunpack.c.l.b16 %v712
        %v3351 = vunpack.c.h.b16 %v712
        %v3352 = vunpack.c.l.b16 %v713
        %v3353 = vunpack.c.h.b16 %v713
        %v3354 = vunpack.c.l.b16 %v714
        %v3355 = vunpack.c.h.b16 %v714
        %v3356 = vunpack.c.l.b16 %v715
        %v3357 = vunpack.c.h.b16 %v715
        %v3358 = vunpack.c.l.b16 %v716
        %v3359 = vunpack.c.h.b16 %v716
        %v3360 = vunpack.c.l.b16 %v717
        %v3361 = vunpack.c.h.b16 %v717
        %v3362 = vunpack.c.l.b16 %v718
        %v3363 = vunpack.c.h.b16 %v718
        %v3364 = vunpack.c.l.b16 %v719
        %v3365 = vunpack.c.h.b16 %v719
        %v3366 = vunpack.c.l.b16 %v720
        %v3367 = vunpack.c.h.b16 %v720
        %v3368 = vunpack.c.l.b16 %v721
        %v3369 = vunpack.c.h.b16 %v721
        %v3370 = vunpack.c.l.b16 %v722
        %v3371 = vunpack.c.h.b16 %v722
        %v3372 = vunpack.c.l.b16 %v723
        %v3373 = vunpack.c.h.b16 %v723
        %v3374 = vunpack.c.l.b16 %v724
        %v3375 = vunpack.c.h.b16 %v724
        %v3376 = vunpack.c.l.b16 %v725
        %v3377 = vunpack.c.h.b16 %v725
        %v3378 = vunpack.c.l.b16 %v726
        %v3379 = vunpack.c.h.b16 %v726
        %v3380 = vunpack.c.l.b16 %v727
        %v3381 = vunpack.c.h.b16 %v727
        %v3382 = vunpack.c.l.b16 %v728
        %v3383 = vunpack.c.h.b16 %v728
        %v3384 = vunpack.c.l.b16 %v729
        %v3385 = vunpack.c.h.b16 %v729
        %v3386 = vunpack.c.l.b16 %v730
        %v3387 = vunpack.c.h.b16 %v730
        %v3388 = vunpack.c.l.b16 %v731
        %v3389 = vunpack.c.h.b16 %v731
        %v3390 = vunpack.c.l.b16 %v732
        %v3391 = vunpack.c.h.b16 %v732
        %v3392 = vunpack.c.l.b16 %v733
        %v3393 = vunpack.c.h.b16 %v733
        %v3394 = vunpack.c.l.b16 %v734
        %v3395 = vunpack.c.h.b16 %v734
        %v3396 = vunpack.c.l.b16 %v735
        %v3397 = vunpack.c.h.b16 %v735
        %v3398 = vunpack.c.l.b16 %v736
        %v3399 = vunpack.c.h.b16 %v736
        %v3400 = vunpack.c.l.b16 %v737
        %v3401 = vunpack.c.h.b16 %v737
        %v3402 = vunpack.c.l.b16 %v738
        %v3403 = vunpack.c.h.b16 %v738
        %v3404 = vunpack.c.l.b16 %v739
        %v3405 = vunpack.c.h.b16 %v739
        %v3406 = vunpack.c.l.b16 %v740
        %v3407 = vunpack.c.h.b16 %v740
        %v3408 = vunpack.c.l.b16 %v741
        %v3409 = vunpack.c.h.b16 %v741
        %v3410 = vunpack.c.l.b16 %v742
        %v3411 = vunpack.c.h.b16 %v742
        %v3412 = vunpack.c.l.b16 %v743
        %v3413 = vunpack.c.h.b16 %v743
        %v3414 = vunpack.c.l.b16 %v744
        %v3415 = vunpack.c.h.b16 %v744
        %v3416 = vunpack.c.l.b16 %v745
        %v3417 = vunpack.c.h.b16 %v745
        %v3418 = vunpack.c.l.b16 %v746
        %v3419 = vunpack.c.h.b16 %v746
        %v3420 = vunpack.c.l.b16 %v747
        %v3421 = vunpack.c.h.b16 %v747
        %v3422 = vunpack.c.l.b16 %v748
        %v3423 = vunpack.c.h.b16 %v748
        %v3424 = vunpack.c.l.b16 %v749
        %v3425 = vunpack.c.h.b16 %v749
        %v3426 = vunpack.c.l.b16 %v750
        %v3427 = vunpack.c.h.b16 %v750
        %v3428 = vunpack.c.l.b16 %v751
        %v3429 = vunpack.c.h.b16 %v751
        %v3430 = vunpack.c.l.b16 %v752
        %v3431 = vunpack.c.h.b16 %v752
        %v3432 = vunpack.c.l.b16 %v753
        %v3433 = vunpack.c.h.b16 %v753
        %v3434 = vunpack.c.l.b16 %v754
        %v3435 = vunpack.c.h.b16 %v754
        %v3436 = vunpack.c.l.b16 %v755
        %v3437 = vunpack.c.h.b16 %v755
        %v3438 = vunpack.c.l.b16 %v756
        %v3439 = vunpack.c.h.b16 %v756
        %v3440 = vunpack.c.l.b16 %v757
        %v3441 = vunpack.c.h.b16 %v757
        %v3442 = vunpack.c.l.b16 %v758
        %v3443 = vunpack.c.h.b16 %v758
        %v3444 = vunpack.c.l.b16 %v759
        %v3445 = vunpack.c.h.b16 %v759
        %v3446 = vunpack.c.l.b16 %v760
        %v3447 = vunpack.c.h.b16 %v760
        %v3448 = vunpack.c.l.b16 %v761
        %v3449 = vunpack.c.h.b16 %v761
        %v3450 = vunpack.c.l.b16 %v762
        %v3451 = vunpack.c.h.b16 %v762
        %v3452 = vunpack.c.l.b16 %v763
        %v3453 = vunpack.c.h.b16 %v763
        %v3454 = vunpack.c.l.b16 %v764
        %v3455 = vunpack.c.h.b16 %v764
        %v3456 = vunpack.c.l.b16 %v765
        %v3457 = vunpack.c.h.b16 %v765
        %v3458 = vunpack.c.l.b16 %v766
        %v3459 = vunpack.c.h.b16 %v766
        %v3460 = vunpack.c.l.b16 %v767
        %v3461 = vunpack.c.h.b16 %v767
        %v3462 = vunpack.c.l.b16 %v768
        %v3463 = vunpack.c.h.b16 %v768
        %v3464 = vunpack.c.l.b16 %v769
        %v3465 = vunpack.c.h.b16 %v769
        %v3466 = vunpack.c.l.b16 %v770
        %v3467 = vunpack.c.h.b16 %v770
        %v3468 = vunpack.c.l.b16 %v771
        %v3469 = vunpack.c.h.b16 %v771
        %v3470 = vunpack.c.l.b16 %v772
        %v3471 = vunpack.c.h.b16 %v772
        %v3472 = vunpack.c.l.b16 %v773
        %v3473 = vunpack.c.h.b16 %v773
        %v3474 = vunpack.c.l.b16 %v774
        %v3475 = vunpack.c.h.b16 %v774
        %v3476 = vunpack.c.l.b16 %v775
        %v3477 = vunpack.c.h.b16 %v775
        %v3478 = vunpack.c.l.b16 %v776
        %v3479 = vunpack.c.h.b16 %v776
        %v3480 = vunpack.c.l.b16 %v777
        %v3481 = vunpack.c.h.b16 %v777
        %v3482 = vunpack.c.l.b16 %v778
        %v3483 = vunpack.c.h.b16 %v778
        %v3484 = vunpack.c.l.b16 %v779
        %v3485 = vunpack.c.h.b16 %v779
        %v3486 = vunpack.c.l.b16 %v780
        %v3487 = vunpack.c.h.b16 %v780
        %v3488 = vunpack.c.l.b16 %v781
        %v3489 = vunpack.c.h.b16 %v781
        %v3490 = vunpack.c.l.b16 %v782
        %v3491 = vunpack.c.h.b16 %v782
        %v3492 = vunpack.c.l.b16 %v783
        %v3493 = vunpack.c.h.b16 %v783
        %v3494 = vunpack.c.l.b16 %v784
        %v3495 = vunpack.c.h.b16 %v784
        %v3496 = vunpack.c.l.b16 %v785
        %v3497 = vunpack.c.h.b16 %v785
        %v3498 = vunpack.c.l.b16 %v786
        %v3499 = vunpack.c.h.b16 %v786
        %v3500 = vunpack.c.l.b16 %v787
        %v3501 = vunpack.c.h.b16 %v787
        %v3502 = vunpack.c.l.b16 %v788
        %v3503 = vunpack.c.h.b16 %v788
        %v3504 = vunpack.c.l.b16 %v789
        %v3505 = vunpack.c.h.b16 %v789
        %v3506 = vunpack.c.l.b16 %v790
        %v3507 = vunpack.c.h.b16 %v790
        %v3508 = vunpack.c.l.b16 %v791
        %v3509 = vunpack.c.h.b16 %v791
        %v3510 = vunpack.c.l.b16 %v792
        %v3511 = vunpack.c.h.b16 %v792
        %v3512 = vunpack.c.l.b16 %v793
        %v3513 = vunpack.c.h.b16 %v793
        %v3514 = vunpack.c.l.b16 %v794
        %v3515 = vunpack.c.h.b16 %v794
        %v3516 = vunpack.c.l.b16 %v795
        %v3517 = vunpack.c.h.b16 %v795
        %v3518 = vunpack.c.l.b16 %v796
        %v3519 = vunpack.c.h.b16 %v796
        %v3520 = vunpack.c.l.b16 %v797
        %v3521 = vunpack.c.h.b16 %v797
        %v3522 = vunpack.c.l.b16 %v798
        %v3523 = vunpack.c.h.b16 %v798
        %v3524 = vunpack.c.l.b16 %v799
        %v3525 = vunpack.c.h.b16 %v799
        %v3526 = vunpack.c.l.b16 %v800
        %v3527 = vunpack.c.h.b16 %v800
        %v3528 = vunpack.c.l.b16 %v801
        %v3529 = vunpack.c.h.b16 %v801
        %v3530 = vunpack.c.l.b16 %v802
        %v3531 = vunpack.c.h.b16 %v802
        %v3532 = vunpack.c.l.b16 %v803
        %v3533 = vunpack.c.h.b16 %v803
        %v3534 = vunpack.c.l.b16 %v804
        %v3535 = vunpack.c.h.b16 %v804
        %v3536 = vunpack.c.l.b16 %v805
        %v3537 = vunpack.c.h.b16 %v805
        %v3538 = vunpack.c.l.b16 %v806
        %v3539 = vunpack.c.h.b16 %v806
        %v3540 = vunpack.c.l.b16 %v807
        %v3541 = vunpack.c.h.b16 %v807
        %v3542 = vunpack.c.l.b16 %v808
        %v3543 = vunpack.c.h.b16 %v808
        %v3544 = vunpack.c.l.b16 %v809
        %v3545 = vunpack.c.h.b16 %v809
        %v3546 = vunpack.c.l.b16 %v810
        %v3547 = vunpack.c.h.b16 %v810
        %v3548 = vunpack.c.l.b16 %v811
        %v3549 = vunpack.c.h.b16 %v811
        %v3550 = vunpack.c.l.b16 %v812
        %v3551 = vunpack.c.h.b16 %v812
        %v3552 = vunpack.c.l.b16 %v813
        %v3553 = vunpack.c.h.b16 %v813
        %v3554 = vunpack.c.l.b16 %v814
        %v3555 = vunpack.c.h.b16 %v814
        %v3556 = vunpack.c.l.b16 %v815
        %v3557 = vunpack.c.h.b16 %v815
        %v3558 = vunpack.c.l.b16 %v816
        %v3559 = vunpack.c.h.b16 %v816
        %v3560 = vunpack.c.l.b16 %v817
        %v3561 = vunpack.c.h.b16 %v817
        %v3562 = vunpack.c.l.b16 %v818
        %v3563 = vunpack.c.h.b16 %v818
        %v3564 = vunpack.c.l.b16 %v819
        %v3565 = vunpack.c.h.b16 %v819
        %v3566 = vunpack.c.l.b16 %v820
        %v3567 = vunpack.c.h.b16 %v820
        %v3568 = vunpack.c.l.b16 %v821
        %v3569 = vunpack.c.h.b16 %v821
        %v3570 = vunpack.c.l.b16 %v822
        %v3571 = vunpack.c.h.b16 %v822
        %v3572 = vunpack.c.l.b16 %v823
        %v3573 = vunpack.c.h.b16 %v823
        %v3574 = vunpack.c.l.b16 %v824
        %v3575 = vunpack.c.h.b16 %v824
        %v3576 = vunpack.c.l.b16 %v825
        %v3577 = vunpack.c.h.b16 %v825
        %v3578 = vunpack.c.l.b16 %v826
        %v3579 = vunpack.c.h.b16 %v826
        %v3580 = vunpack.c.l.b16 %v827
        %v3581 = vunpack.c.h.b16 %v827
        %v3582 = vunpack.c.l.b16 %v828
        %v3583 = vunpack.c.h.b16 %v828
        %v3584 = vunpack.c.l.b16 %v829
        %v3585 = vunpack.c.h.b16 %v829
        %v3586 = vunpack.c.l.b16 %v830
        %v3587 = vunpack.c.h.b16 %v830
        %v3588 = vunpack.c.l.b16 %v831
        %v3589 = vunpack.c.h.b16 %v831
        %v3590 = vunpack.c.l.b16 %v832
        %v3591 = vunpack.c.h.b16 %v832
        %v3592 = vunpack.c.l.b16 %v833
        %v3593 = vunpack.c.h.b16 %v833
        %v3594 = vunpack.c.l.b16 %v834
        %v3595 = vunpack.c.h.b16 %v834
        %v3596 = vunpack.c.l.b16 %v835
        %v3597 = vunpack.c.h.b16 %v835
        %v3598 = vunpack.c.l.b16 %v836
        %v3599 = vunpack.c.h.b16 %v836
        %v3600 = vunpack.c.l.b16 %v837
        %v3601 = vunpack.c.h.b16 %v837
        %v3602 = vunpack.c.l.b16 %v838
        %v3603 = vunpack.c.h.b16 %v838
        %v3604 = vunpack.c.l.b16 %v839
        %v3605 = vunpack.c.h.b16 %v839
        %v3606 = vunpack.c.l.b16 %v840
        %v3607 = vunpack.c.h.b16 %v840
        %v3608 = vunpack.c.l.b16 %v841
        %v3609 = vunpack.c.h.b16 %v841
        %v3610 = vunpack.c.l.b16 %v842
        %v3611 = vunpack.c.h.b16 %v842
        %v3612 = vunpack.c.l.b16 %v843
        %v3613 = vunpack.c.h.b16 %v843
        %v3614 = vunpack.c.l.b16 %v844
        %v3615 = vunpack.c.h.b16 %v844
        %v3616 = vunpack.c.l.b16 %v845
        %v3617 = vunpack.c.h.b16 %v845
        %v3618 = vunpack.c.l.b16 %v846
        %v3619 = vunpack.c.h.b16 %v846
        %v3620 = vunpack.c.l.b16 %v847
        %v3621 = vunpack.c.h.b16 %v847
        %v3622 = vunpack.c.l.b16 %v848
        %v3623 = vunpack.c.h.b16 %v848
        %v3624 = vunpack.c.l.b16 %v849
        %v3625 = vunpack.c.h.b16 %v849
        %v3626 = vunpack.c.l.b16 %v850
        %v3627 = vunpack.c.h.b16 %v850
        %v3628 = vunpack.c.l.b16 %v851
        %v3629 = vunpack.c.h.b16 %v851
        %v3630 = vunpack.c.l.b16 %v852
        %v3631 = vunpack.c.h.b16 %v852
        %v3632 = vunpack.c.l.b16 %v853
        %v3633 = vunpack.c.h.b16 %v853
        %v3634 = vunpack.c.l.b16 %v854
        %v3635 = vunpack.c.h.b16 %v854
        %v3636 = vunpack.c.l.b16 %v855
        %v3637 = vunpack.c.h.b16 %v855
        %v3638 = vunpack.c.l.b16 %v856
        %v3639 = vunpack.c.h.b16 %v856
        %v3640 = vunpack.c.l.b16 %v857
        %v3641 = vunpack.c.h.b16 %v857
        %v3642 = vunpack.c.l.b16 %v858
        %v3643 = vunpack.c.h.b16 %v858
        %v3644 = vunpack.c.l.b16 %v859
        %v3645 = vunpack.c.h.b16 %v859
        %v3646 = vunpack.c.l.b16 %v860
        %v3647 = vunpack.c.h.b16 %v860
        %v3648 = vunpack.c.l.b16 %v861
        %v3649 = vunpack.c.h.b16 %v861
        %v3650 = vunpack.c.l.b16 %v862
        %v3651 = vunpack.c.h.b16 %v862
        %v3652 = vunpack.c.l.b16 %v863
        %v3653 = vunpack.c.h.b16 %v863
        %v3654 = vunpack.c.l.b16 %v864
        %v3655 = vunpack.c.h.b16 %v864
        %v3656 = vunpack.c.l.b16 %v865
        %v3657 = vunpack.c.h.b16 %v865
        %v3658 = vunpack.c.l.b16 %v866
        %v3659 = vunpack.c.h.b16 %v866
        %v3660 = vunpack.c.l.b16 %v867
        %v3661 = vunpack.c.h.b16 %v867
        %v3662 = vunpack.c.l.b16 %v868
        %v3663 = vunpack.c.h.b16 %v868
        %v3664 = vunpack.c.l.b16 %v869
        %v3665 = vunpack.c.h.b16 %v869
        %v3666 = vunpack.c.l.b16 %v870
        %v3667 = vunpack.c.h.b16 %v870
        %v3668 = vunpack.c.l.b16 %v871
        %v3669 = vunpack.c.h.b16 %v871
        %v3670 = vunpack.c.l.b16 %v872
        %v3671 = vunpack.c.h.b16 %v872
        %v3672 = vunpack.c.l.b16 %v873
        %v3673 = vunpack.c.h.b16 %v873
        %v3674 = vunpack.c.l.b16 %v874
        %v3675 = vunpack.c.h.b16 %v874
        %v3676 = vunpack.c.l.b16 %v875
        %v3677 = vunpack.c.h.b16 %v875
        %v3678 = vunpack.c.l.b16 %v876
        %v3679 = vunpack.c.h.b16 %v876
        %v3680 = vunpack.c.l.b16 %v877
        %v3681 = vunpack.c.h.b16 %v877
        %v3682 = vunpack.c.l.b16 %v878
        %v3683 = vunpack.c.h.b16 %v878
        %v3684 = vunpack.c.l.b16 %v879
        %v3685 = vunpack.c.h.b16 %v879
        %v3686 = vunpack.c.l.b16 %v880
        %v3687 = vunpack.c.h.b16 %v880
        %v3688 = vunpack.c.l.b16 %v881
        %v3689 = vunpack.c.h.b16 %v881
        %v3690 = vunpack.c.l.b16 %v882
        %v3691 = vunpack.c.h.b16 %v882
        %v3692 = vunpack.c.l.b16 %v883
        %v3693 = vunpack.c.h.b16 %v883
        %v3694 = vunpack.c.l.b16 %v884
        %v3695 = vunpack.c.h.b16 %v884
        %v3696 = vunpack.c.l.b16 %v885
        %v3697 = vunpack.c.h.b16 %v885
        %v3698 = vunpack.c.l.b16 %v886
        %v3699 = vunpack.c.h.b16 %v886
        %v3700 = vunpack.c.l.b16 %v887
        %v3701 = vunpack.c.h.b16 %v887
        %v3702 = vunpack.c.l.b16 %v888
        %v3703 = vunpack.c.h.b16 %v888
        %v3704 = vunpack.c.l.b16 %v889
        %v3705 = vunpack.c.h.b16 %v889
        %v3706 = vunpack.c.l.b16 %v890
        %v3707 = vunpack.c.h.b16 %v890
        %v3708 = vunpack.c.l.b16 %v891
        %v3709 = vunpack.c.h.b16 %v891
        %v3710 = vunpack.c.l.b16 %v892
        %v3711 = vunpack.c.h.b16 %v892
        %v3712 = vunpack.c.l.b16 %v893
        %v3713 = vunpack.c.h.b16 %v893
        %v3714 = vunpack.c.l.b16 %v894
        %v3715 = vunpack.c.h.b16 %v894
        %v3716 = vunpack.c.l.b16 %v895
        %v3717 = vunpack.c.h.b16 %v895
        %v3718 = vunpack.c.l.b16 %v896
        %v3719 = vunpack.c.h.b16 %v896
        %v3720 = vunpack.c.l.b16 %v897
        %v3721 = vunpack.c.h.b16 %v897
        %v3722 = vunpack.c.l.b16 %v898
        %v3723 = vunpack.c.h.b16 %v898
        %v3724 = vunpack.c.l.b16 %v899
        %v3725 = vunpack.c.h.b16 %v899
        %v3726 = vunpack.c.l.b16 %v900
        %v3727 = vunpack.c.h.b16 %v900
        %v3728 = vunpack.c.l.b16 %v901
        %v3729 = vunpack.c.h.b16 %v901
        %v3730 = vunpack.c.l.b16 %v902
        %v3731 = vunpack.c.h.b16 %v902
        %v3732 = vunpack.c.l.b16 %v903
        %v3733 = vunpack.c.h.b16 %v903
        %v3734 = vunpack.c.l.b16 %v904
        %v3735 = vunpack.c.h.b16 %v904
        %v3736 = vunpack.c.l.b16 %v905
        %v3737 = vunpack.c.h.b16 %v905
        %v3738 = vunpack.c.l.b16 %v906
        %v3739 = vunpack.c.h.b16 %v906
        %v3740 = vunpack.c.l.b16 %v907
        %v3741 = vunpack.c.h.b16 %v907
        %v3742 = vunpack.c.l.b16 %v908
        %v3743 = vunpack.c.h.b16 %v908
        %v3744 = vunpack.c.l.b16 %v909
        %v3745 = vunpack.c.h.b16 %v909
        %v3746 = vunpack.c.l.b16 %v910
        %v3747 = vunpack.c.h.b16 %v910
        %v3748 = vunpack.c.l.b16 %v911
        %v3749 = vunpack.c.h.b16 %v911
        %v3750 = vunpack.c.l.b16 %v912
        %v3751 = vunpack.c.h.b16 %v912
        %v3752 = vunpack.c.l.b16 %v913
        %v3753 = vunpack.c.h.b16 %v913
        %v3754 = vunpack.c.l.b16 %v914
        %v3755 = vunpack.c.h.b16 %v914
        %v3756 = vunpack.c.l.b16 %v915
        %v3757 = vunpack.c.h.b16 %v915
        %v3758 = vunpack.c.l.b16 %v916
        %v3759 = vunpack.c.h.b16 %v916
        %v3760 = vunpack.c.l.b16 %v917
        %v3761 = vunpack.c.h.b16 %v917
        %v3762 = vunpack.c.l.b16 %v918
        %v3763 = vunpack.c.h.b16 %v918
        %v3764 = vunpack.c.l.b16 %v919
        %v3765 = vunpack.c.h.b16 %v919
        %v3766 = vunpack.c.l.b16 %v920
        %v3767 = vunpack.c.h.b16 %v920
        %v3768 = vunpack.c.l.b16 %v921
        %v3769 = vunpack.c.h.b16 %v921
        %v3770 = vunpack.c.l.b16 %v922
        %v3771 = vunpack.c.h.b16 %v922
        %v3772 = vunpack.c.l.b16 %v923
        %v3773 = vunpack.c.h.b16 %v923
        %v3774 = vunpack.c.l.b16 %v924
        %v3775 = vunpack.c.h.b16 %v924
        %v3776 = vunpack.c.l.b16 %v925
        %v3777 = vunpack.c.h.b16 %v925
        %v3778 = vunpack.c.l.b16 %v926
        %v3779 = vunpack.c.h.b16 %v926
        %v3780 = vunpack.c.l.b16 %v927
        %v3781 = vunpack.c.h.b16 %v927
        %v3782 = vunpack.c.l.b16 %v928
        %v3783 = vunpack.c.h.b16 %v928
        %v3784 = vunpack.c.l.b16 %v929
        %v3785 = vunpack.c.h.b16 %v929
        %v3786 = vunpack.c.l.b16 %v930
        %v3787 = vunpack.c.h.b16 %v930
        %v3788 = vunpack.c.l.b16 %v931
        %v3789 = vunpack.c.h.b16 %v931
        %v3790 = vunpack.c.l.b16 %v932
        %v3791 = vunpack.c.h.b16 %v932
        %v3792 = vunpack.c.l.b16 %v933
        %v3793 = vunpack.c.h.b16 %v933
        %v3794 = vunpack.c.l.b16 %v934
        %v3795 = vunpack.c.h.b16 %v934
        %v3796 = vunpack.c.l.b16 %v935
        %v3797 = vunpack.c.h.b16 %v935
        %v3798 = vunpack.c.l.b16 %v936
        %v3799 = vunpack.c.h.b16 %v936
        %v3800 = vunpack.c.l.b16 %v937
        %v3801 = vunpack.c.h.b16 %v937
        %v3802 = vunpack.c.l.b16 %v938
        %v3803 = vunpack.c.h.b16 %v938
        %v3804 = vunpack.c.l.b16 %v939
        %v3805 = vunpack.c.h.b16 %v939
        %v3806 = vunpack.c.l.b16 %v940
        %v3807 = vunpack.c.h.b16 %v940
        %v3808 = vunpack.c.l.b16 %v941
        %v3809 = vunpack.c.h.b16 %v941
        %v3810 = vunpack.c.l.b16 %v942
        %v3811 = vunpack.c.h.b16 %v942
        %v3812 = vunpack.c.l.b16 %v943
        %v3813 = vunpack.c.h.b16 %v943
        %v3814 = vunpack.c.l.b16 %v944
        %v3815 = vunpack.c.h.b16 %v944
        %v3816 = vunpack.c.l.b16 %v945
        %v3817 = vunpack.c.h.b16 %v945
        %v3818 = vunpack.c.l.b16 %v946
        %v3819 = vunpack.c.h.b16 %v946
        %v3820 = vunpack.c.l.b16 %v947
        %v3821 = vunpack.c.h.b16 %v947
        %v3822 = vunpack.c.l.b16 %v948
        %v3823 = vunpack.c.h.b16 %v948
        %v3824 = vunpack.c.l.b16 %v949
        %v3825 = vunpack.c.h.b16 %v949
        %v3826 = vunpack.c.l.b16 %v950
        %v3827 = vunpack.c.h.b16 %v950
        %v3828 = vunpack.c.l.b16 %v951
        %v3829 = vunpack.c.h.b16 %v951
        %v3830 = vunpack.c.l.b16 %v952
        %v3831 = vunpack.c.h.b16 %v952
        %v3832 = vunpack.c.l.b16 %v953
        %v3833 = vunpack.c.h.b16 %v953
        %v3834 = vunpack.c.l.b16 %v954
        %v3835 = vunpack.c.h.b16 %v954
        %v3836 = vunpack.c.l.b16 %v955
        %v3837 = vunpack.c.h.b16 %v955
        %v3838 = vunpack.c.l.b16 %v956
        %v3839 = vunpack.c.h.b16 %v956
        %v3840 = vunpack.c.l.b16 %v957
        %v3841 = vunpack.c.h.b16 %v957
        %v3842 = vunpack.c.l.b16 %v958
        %v3843 = vunpack.c.h.b16 %v958
        %v3844 = vunpack.c.l.b16 %v959
        %v3845 = vunpack.c.h.b16 %v959
        %v3846 = vunpack.c.l.b16 %v960
        %v3847 = vunpack.c.h.b16 %v960
        %v3848 = vunpack.c.l.b16 %v961
        %v3849 = vunpack.c.h.b16 %v961
        %v3850 = vunpack.c.l.b16 %v962
        %v3851 = vunpack.c.h.b16 %v962
        %v3852 = vunpack.c.l.b16 %v963
        %v3853 = vunpack.c.h.b16 %v963
        %v3854 = vunpack.c.l.b16 %v964
        %v3855 = vunpack.c.h.b16 %v964
        %v3856 = vunpack.c.l.b16 %v965
        %v3857 = vunpack.c.h.b16 %v965
        %v3858 = vunpack.c.l.b16 %v966
        %v3859 = vunpack.c.h.b16 %v966
        %v3860 = vunpack.c.l.b16 %v967
        %v3861 = vunpack.c.h.b16 %v967
        %v3862 = vunpack.c.l.b16 %v968
        %v3863 = vunpack.c.h.b16 %v968
        %v3864 = vunpack.c.l.b16 %v969
        %v3865 = vunpack.c.h.b16 %v969
        %v3866 = vunpack.c.l.b16 %v970
        %v3867 = vunpack.c.h.b16 %v970
        %v3868 = vunpack.c.l.b16 %v971
        %v3869 = vunpack.c.h.b16 %v971
        %v3870 = vunpack.c.l.b16 %v972
        %v3871 = vunpack.c.h.b16 %v972
        %v3872 = vunpack.c.l.b16 %v973
        %v3873 = vunpack.c.h.b16 %v973
        %v3874 = vunpack.c.l.b16 %v974
        %v3875 = vunpack.c.h.b16 %v974
        %v3876 = vunpack.c.l.b16 %v975
        %v3877 = vunpack.c.h.b16 %v975
        %v3878 = vunpack.c.l.b16 %v976
        %v3879 = vunpack.c.h.b16 %v976
        %v3880 = vunpack.c.l.b16 %v977
        %v3881 = vunpack.c.h.b16 %v977
        %v3882 = vunpack.c.l.b16 %v978
        %v3883 = vunpack.c.h.b16 %v978
        %v3884 = vunpack.c.l.b16 %v979
        %v3885 = vunpack.c.h.b16 %v979
        %v3886 = vunpack.c.l.b16 %v980
        %v3887 = vunpack.c.h.b16 %v980
        %v3888 = vunpack.c.l.b16 %v981
        %v3889 = vunpack.c.h.b16 %v981
        %v3890 = vunpack.c.l.b16 %v982
        %v3891 = vunpack.c.h.b16 %v982
        %v3892 = vunpack.c.l.b16 %v983
        %v3893 = vunpack.c.h.b16 %v983
        %v3894 = vunpack.c.l.b16 %v984
        %v3895 = vunpack.c.h.b16 %v984
        %v3896 = vunpack.c.l.b16 %v985
        %v3897 = vunpack.c.h.b16 %v985
        %v3898 = vunpack.c.l.b16 %v986
        %v3899 = vunpack.c.h.b16 %v986
        %v3900 = vunpack.c.l.b16 %v987
        %v3901 = vunpack.c.h.b16 %v987
        %v3902 = vunpack.c.l.b16 %v988
        %v3903 = vunpack.c.h.b16 %v988
        %v3904 = vunpack.c.l.b16 %v989
        %v3905 = vunpack.c.h.b16 %v989
        %v3906 = vunpack.c.l.b16 %v990
        %v3907 = vunpack.c.h.b16 %v990
        %v3908 = vunpack.c.l.b16 %v991
        %v3909 = vunpack.c.h.b16 %v991
        %v3910 = vunpack.c.l.b16 %v992
        %v3911 = vunpack.c.h.b16 %v992
        %v3912 = vunpack.c.l.b16 %v993
        %v3913 = vunpack.c.h.b16 %v993
        %v3914 = vunpack.c.l.b16 %v994
        %v3915 = vunpack.c.h.b16 %v994
        %v3916 = vunpack.c.l.b16 %v995
        %v3917 = vunpack.c.h.b16 %v995
        %v3918 = vunpack.c.l.b16 %v996
        %v3919 = vunpack.c.h.b16 %v996
        %v3920 = vunpack.c.l.b16 %v997
        %v3921 = vunpack.c.h.b16 %v997
        %v3922 = vunpack.c.l.b16 %v998
        %v3923 = vunpack.c.h.b16 %v998
        %v3924 = vunpack.c.l.b16 %v999
        %v3925 = vunpack.c.h.b16 %v999
        %v3926 = vunpack.c.l.b16 %v1000
        %v3927 = vunpack.c.h.b16 %v1000
        %v3928 = vunpack.c.l.b16 %v1001
        %v3929 = vunpack.c.h.b16 %v1001
        %v3930 = vunpack.c.l.b16 %v1002
        %v3931 = vunpack.c.h.b16 %v1002
        %v3932 = vunpack.c.l.b16 %v1003
        %v3933 = vunpack.c.h.b16 %v1003
        %v3934 = vunpack.c.l.b16 %v1004
        %v3935 = vunpack.c.h.b16 %v1004
        %v3936 = vunpack.c.l.b16 %v1005
        %v3937 = vunpack.c.h.b16 %v1005
        %v3938 = vunpack.c.l.b16 %v1006
        %v3939 = vunpack.c.h.b16 %v1006
        %v3940 = vunpack.c.l.b16 %v1007
        %v3941 = vunpack.c.h.b16 %v1007
        %v3942 = vunpack.c.l.b16 %v1008
        %v3943 = vunpack.c.h.b16 %v1008
        %v3944 = vunpack.c.l.b16 %v1009
        %v3945 = vunpack.c.h.b16 %v1009
        %v3946 = vunpack.c.l.b16 %v1010
        %v3947 = vunpack.c.h.b16 %v1010
        %v3948 = vunpack.c.l.b16 %v1011
        %v3949 = vunpack.c.h.b16 %v1011
        %v3950 = vunpack.c.l.b16 %v1012
        %v3951 = vunpack.c.h.b16 %v1012
        %v3952 = vunpack.c.l.b16 %v1013
        %v3953 = vunpack.c.h.b16 %v1013
        %v3954 = vunpack.c.l.b16 %v1014
        %v3955 = vunpack.c.h.b16 %v1014
        %v3956 = vunpack.c.l.b16 %v1015
        %v3957 = vunpack.c.h.b16 %v1015
        %v3958 = vunpack.c.l.b16 %v1016
        %v3959 = vunpack.c.h.b16 %v1016
        %v3960 = vunpack.c.l.b16 %v1017
        %v3961 = vunpack.c.h.b16 %v1017
        %v3962 = vunpack.c.l.b16 %v1018
        %v3963 = vunpack.c.h.b16 %v1018
        %v3964 = vunpack.c.l.b16 %v1019
        %v3965 = vunpack.c.h.b16 %v1019
        %v3966 = vunpack.c.l.b16 %v1020
        %v3967 = vunpack.c.h.b16 %v1020
        %v3968 = vunpack.c.l.b16 %v1021
        %v3969 = vunpack.c.h.b16 %v1021
        %v3970 = vunpack.c.l.b16 %v1022
        %v3971 = vunpack.c.h.b16 %v1022
        %v3972 = vunpack.c.l.b16 %v1023
        %v3973 = vunpack.c.h.b16 %v1023
        %v3974 = vunpack.c.l.b16 %v1024
        %v3975 = vunpack.c.h.b16 %v1024
        %v3976 = vunpack.c.l.b16 %v1025
        %v3977 = vunpack.c.h.b16 %v1025
        %v3978 = vunpack.c.l.b16 %v1026
        %v3979 = vunpack.c.h.b16 %v1026
        %v3980 = vunpack.c.l.b16 %v1027
        %v3981 = vunpack.c.h.b16 %v1027
        %v3982 = vunpack.c.l.b16 %v1028
        %v3983 = vunpack.c.h.b16 %v1028
        %v3984 = vunpack.c.l.b16 %v1029
        %v3985 = vunpack.c.h.b16 %v1029
        %v3986 = vunpack.c.l.b16 %v1030
        %v3987 = vunpack.c.h.b16 %v1030
        %v3988 = vunpack.c.l.b16 %v1031
        %v3989 = vunpack.c.h.b16 %v1031
        %v3990 = vunpack.c.l.b16 %v1032
        %v3991 = vunpack.c.h.b16 %v1032
        %v3992 = vunpack.c.l.b16 %v1033
        %v3993 = vunpack.c.h.b16 %v1033
        %v3994 = vunpack.c.l.b16 %v1034
        %v3995 = vunpack.c.h.b16 %v1034
        %v3996 = vunpack.c.l.b16 %v1035
        %v3997 = vunpack.c.h.b16 %v1035
        %v3998 = vunpack.c.l.b16 %v1036
        %v3999 = vunpack.c.h.b16 %v1036
        %v4000 = vunpack.c.l.b16 %v1037
        %v4001 = vunpack.c.h.b16 %v1037
        %v4002 = vunpack.c.l.b16 %v1038
        %v4003 = vunpack.c.h.b16 %v1038
        %v4004 = vunpack.c.l.b16 %v1039
        %v4005 = vunpack.c.h.b16 %v1039
        %v4006 = vunpack.c.l.b16 %v1040
        %v4007 = vunpack.c.h.b16 %v1040
        %v4008 = vunpack.c.l.b16 %v1041
        %v4009 = vunpack.c.h.b16 %v1041
        %v4010 = vunpack.c.l.b16 %v1042
        %v4011 = vunpack.c.h.b16 %v1042
        %v4012 = vunpack.c.l.b16 %v1043
        %v4013 = vunpack.c.h.b16 %v1043
        %v4014 = vunpack.c.l.b16 %v1044
        %v4015 = vunpack.c.h.b16 %v1044
        %v4016 = vunpack.c.l.b16 %v1045
        %v4017 = vunpack.c.h.b16 %v1045
        %v4018 = vunpack.c.l.b16 %v1046
        %v4019 = vunpack.c.h.b16 %v1046
        %v4020 = vunpack.c.l.b16 %v1047
        %v4021 = vunpack.c.h.b16 %v1047
        %v4022 = vunpack.c.l.b16 %v1048
        %v4023 = vunpack.c.h.b16 %v1048
        %v4024 = vunpack.c.l.b16 %v1049
        %v4025 = vunpack.c.h.b16 %v1049
        %v4026 = vunpack.c.l.b16 %v1050
        %v4027 = vunpack.c.h.b16 %v1050
        %v4028 = vunpack.c.l.b16 %v1051
        %v4029 = vunpack.c.h.b16 %v1051
        %v4030 = vunpack.c.l.b16 %v1052
        %v4031 = vunpack.c.h.b16 %v1052
        %v4032 = vunpack.c.l.b16 %v1053
        %v4033 = vunpack.c.h.b16 %v1053
        %v4034 = vunpack.c.l.b16 %v1054
        %v4035 = vunpack.c.h.b16 %v1054
        %v4036 = vunpack.c.l.b16 %v1055
        %v4037 = vunpack.c.h.b16 %v1055
        %v4038 = vunpack.c.l.b16 %v1056
        %v4039 = vunpack.c.h.b16 %v1056
        %v4040 = vunpack.c.l.b16 %v1057
        %v4041 = vunpack.c.h.b16 %v1057
        %v4042 = vunpack.c.l.b16 %v1058
        %v4043 = vunpack.c.h.b16 %v1058
        %v4044 = vunpack.c.l.b16 %v1059
        %v4045 = vunpack.c.h.b16 %v1059
        %v4046 = vunpack.c.l.b16 %v1060
        %v4047 = vunpack.c.h.b16 %v1060
        %v4048 = vunpack.c.l.b16 %v1061
        %v4049 = vunpack.c.h.b16 %v1061
        %v4050 = vunpack.c.l.b16 %v1062
        %v4051 = vunpack.c.h.b16 %v1062
        %v4052 = vunpack.c.l.b16 %v1063
        %v4053 = vunpack.c.h.b16 %v1063
        %v4054 = vunpack.c.l.b16 %v1064
        %v4055 = vunpack.c.h.b16 %v1064
        %v4056 = vunpack.c.l.b16 %v1065
        %v4057 = vunpack.c.h.b16 %v1065
        %v4058 = vunpack.c.l.b16 %v1066
        %v4059 = vunpack.c.h.b16 %v1066
        %v4060 = vunpack.c.l.b16 %v1067
        %v4061 = vunpack.c.h.b16 %v1067
        %v4062 = vunpack.c.l.b16 %v1068
        %v4063 = vunpack.c.h.b16 %v1068
        %v4064 = vunpack.c.l.b16 %v1069
        %v4065 = vunpack.c.h.b16 %v1069
        %v4066 = vunpack.c.l.b16 %v1070
        %v4067 = vunpack.c.h.b16 %v1070
        %v4068 = vunpack.c.l.b16 %v1071
        %v4069 = vunpack.c.h.b16 %v1071
        %v4070 = vunpack.c.l.b16 %v1072
        %v4071 = vunpack.c.h.b16 %v1072
        %v4072 = vunpack.c.l.b16 %v1073
        %v4073 = vunpack.c.h.b16 %v1073
        %v4074 = vunpack.c.l.b16 %v1074
        %v4075 = vunpack.c.h.b16 %v1074
        %v4076 = vunpack.c.l.b16 %v1075
        %v4077 = vunpack.c.h.b16 %v1075
        %v4078 = vunpack.c.l.b16 %v1076
        %v4079 = vunpack.c.h.b16 %v1076
        %v4080 = vunpack.c.l.b16 %v1077
        %v4081 = vunpack.c.h.b16 %v1077
        %v4082 = vunpack.c.l.b16 %v1078
        %v4083 = vunpack.c.h.b16 %v1078
        %v4084 = vunpack.c.l.b16 %v1079
        %v4085 = vunpack.c.h.b16 %v1079
        %v4086 = vunpack.c.l.b16 %v1080
        %v4087 = vunpack.c.h.b16 %v1080
        %v4088 = vunpack.c.l.b16 %v1081
        %v4089 = vunpack.c.h.b16 %v1081
        %v4090 = vunpack.c.l.b16 %v1082
        %v4091 = vunpack.c.h.b16 %v1082
        %v4092 = vunpack.c.l.b16 %v1083
        %v4093 = vunpack.c.h.b16 %v1083
        %v4094 = vunpack.c.l.b16 %v1084
        %v4095 = vunpack.c.h.b16 %v1084
        %v4096 = vunpack.c.l.b16 %v1085
        %v4097 = vunpack.c.h.b16 %v1085
        %v4098 = vunpack.c.l.b16 %v1086
        %v4099 = vunpack.c.h.b16 %v1086
        %v4100 = vunpack.c.l.b16 %v1087
        %v4101 = vunpack.c.h.b16 %v1087
        %v4102 = vunpack.c.l.b16 %v1088
        %v4103 = vunpack.c.h.b16 %v1088
        %v4104 = vunpack.c.l.b16 %v1089
        %v4105 = vunpack.c.h.b16 %v1089
        %v4106 = vunpack.c.l.b16 %v1090
        %v4107 = vunpack.c.h.b16 %v1090
        %v4108 = vunpack.c.l.b16 %v1091
        %v4109 = vunpack.c.h.b16 %v1091
        %v4110 = vunpack.c.l.b16 %v1092
        %v4111 = vunpack.c.h.b16 %v1092
        %v4112 = vunpack.c.l.b16 %v1093
        %v4113 = vunpack.c.h.b16 %v1093
        %v4114 = vunpack.c.l.b16 %v1094
        %v4115 = vunpack.c.h.b16 %v1094
        %v4116 = vunpack.c.l.b16 %v1095
        %v4117 = vunpack.c.h.b16 %v1095
        %v4118 = vunpack.c.l.b16 %v1096
        %v4119 = vunpack.c.h.b16 %v1096
        %v4120 = vunpack.c.l.b16 %v1097
        %v4121 = vunpack.c.h.b16 %v1097
        %v4122 = vunpack.c.l.b16 %v1098
        %v4123 = vunpack.c.h.b16 %v1098
        %v4124 = vunpack.c.l.b16 %v1099
        %v4125 = vunpack.c.h.b16 %v1099
        %v4126 = vunpack.c.l.b16 %v1100
        %v4127 = vunpack.c.h.b16 %v1100
        %v4128 = vunpack.c.l.b16 %v1101
        %v4129 = vunpack.c.h.b16 %v1101
        %v4130 = vunpack.c.l.b16 %v1102
        %v4131 = vunpack.c.h.b16 %v1102
        %v4132 = vunpack.c.l.b16 %v1103
        %v4133 = vunpack.c.h.b16 %v1103
        %v4134 = vunpack.c.l.b16 %v1104
        %v4135 = vunpack.c.h.b16 %v1104
        %v4136 = vunpack.c.l.b16 %v1105
        %v4137 = vunpack.c.h.b16 %v1105
        %v4138 = vunpack.c.l.b16 %v1106
        %v4139 = vunpack.c.h.b16 %v1106
        %v4140 = vunpack.c.l.b16 %v1107
        %v4141 = vunpack.c.h.b16 %v1107
        %v4142 = vunpack.c.l.b16 %v1108
        %v4143 = vunpack.c.h.b16 %v1108
        %v4144 = vunpack.c.l.b16 %v1109
        %v4145 = vunpack.c.h.b16 %v1109
        %v4146 = vunpack.c.l.b16 %v1110
        %v4147 = vunpack.c.h.b16 %v1110
        %v4148 = vunpack.c.l.b16 %v1111
        %v4149 = vunpack.c.h.b16 %v1111
        %v4150 = vunpack.c.l.b16 %v1112
        %v4151 = vunpack.c.h.b16 %v1112
        %v4152 = vunpack.c.l.b16 %v1113
        %v4153 = vunpack.c.h.b16 %v1113
        %v4154 = vunpack.c.l.b16 %v1114
        %v4155 = vunpack.c.h.b16 %v1114
        %v4156 = vunpack.c.l.b16 %v1115
        %v4157 = vunpack.c.h.b16 %v1115
        %v4158 = vunpack.c.l.b16 %v1116
        %v4159 = vunpack.c.h.b16 %v1116
        %v4160 = vunpack.c.l.b16 %v1117
        %v4161 = vunpack.c.h.b16 %v1117
        %v4162 = vunpack.c.l.b16 %v1118
        %v4163 = vunpack.c.h.b16 %v1118
        %v4164 = vunpack.c.l.b16 %v1119
        %v4165 = vunpack.c.h.b16 %v1119
        %v4166 = vunpack.c.l.b16 %v1120
        %v4167 = vunpack.c.h.b16 %v1120
        %v4168 = vunpack.c.l.b16 %v1121
        %v4169 = vunpack.c.h.b16 %v1121
        %v4170 = vunpack.c.l.b16 %v1122
        %v4171 = vunpack.c.h.b16 %v1122
        %v4172 = vunpack.c.l.b16 %v1123
        %v4173 = vunpack.c.h.b16 %v1123
        %v4174 = vunpack.c.l.b16 %v1124
        %v4175 = vunpack.c.h.b16 %v1124
        %v4176 = vunpack.c.l.b16 %v1125
        %v4177 = vunpack.c.h.b16 %v1125
        %v4178 = vunpack.c.l.b16 %v1126
        %v4179 = vunpack.c.h.b16 %v1126
        %v4180 = vunpack.c.l.b16 %v1127
        %v4181 = vunpack.c.h.b16 %v1127
        %v4182 = vunpack.c.l.b16 %v1128
        %v4183 = vunpack.c.h.b16 %v1128
        %v4184 = vunpack.c.l.b16 %v1129
        %v4185 = vunpack.c.h.b16 %v1129
        %v4186 = vunpack.c.l.b16 %v1130
        %v4187 = vunpack.c.h.b16 %v1130
        %v4188 = vunpack.c.l.b16 %v1131
        %v4189 = vunpack.c.h.b16 %v1131
        %v4190 = vunpack.c.l.b16 %v1132
        %v4191 = vunpack.c.h.b16 %v1132
        %v4192 = vunpack.c.l.b16 %v1133
        %v4193 = vunpack.c.h.b16 %v1133
        %v4194 = vunpack.c.l.b16 %v1134
        %v4195 = vunpack.c.h.b16 %v1134
        %v4196 = vunpack.c.l.b16 %v1135
        %v4197 = vunpack.c.h.b16 %v1135
        %v4198 = vunpack.c.l.b16 %v1136
        %v4199 = vunpack.c.h.b16 %v1136
        %v4200 = vunpack.c.l.b16 %v1137
        %v4201 = vunpack.c.h.b16 %v1137
        %v4202 = vunpack.c.l.b16 %v1138
        %v4203 = vunpack.c.h.b16 %v1138
        %v4204 = vunpack.c.l.b16 %v1139
        %v4205 = vunpack.c.h.b16 %v1139
        %v4206 = vunpack.c.l.b16 %v1140
        %v4207 = vunpack.c.h.b16 %v1140
        %v4208 = vunpack.c.l.b16 %v1141
        %v4209 = vunpack.c.h.b16 %v1141
        %v4210 = vunpack.c.l.b16 %v1142
        %v4211 = vunpack.c.h.b16 %v1142
        %v4212 = vunpack.c.l.b16 %v1143
        %v4213 = vunpack.c.h.b16 %v1143
        %v4214 = vunpack.c.l.b16 %v1144
        %v4215 = vunpack.c.h.b16 %v1144
        %v4216 = vunpack.c.l.b16 %v1145
        %v4217 = vunpack.c.h.b16 %v1145
        %v4218 = vunpack.c.l.b16 %v1146
        %v4219 = vunpack.c.h.b16 %v1146
        %v4220 = vunpack.c.l.b16 %v1147
        %v4221 = vunpack.c.h.b16 %v1147
        %v4222 = vunpack.c.l.b16 %v1148
        %v4223 = vunpack.c.h.b16 %v1148
        %v4224 = vunpack.c.l.b16 %v1149
        %v4225 = vunpack.c.h.b16 %v1149
        %v4226 = vunpack.c.l.b16 %v1150
        %v4227 = vunpack.c.h.b16 %v1150
        %v4228 = vunpack.c.l.b16 %v1151
        %v4229 = vunpack.c.h.b16 %v1151
        %v4230 = vunpack.c.l.b16 %v1152
        %v4231 = vunpack.c.h.b16 %v1152
        %v4232 = vunpack.c.l.b16 %v1153
        %v4233 = vunpack.c.h.b16 %v1153
        %v4234 = vunpack.c.l.b16 %v1154
        %v4235 = vunpack.c.h.b16 %v1154
        %v4236 = vunpack.c.l.b16 %v1155
        %v4237 = vunpack.c.h.b16 %v1155
        %v4238 = vunpack.c.l.b16 %v1156
        %v4239 = vunpack.c.h.b16 %v1156
        %v4240 = vunpack.c.l.b16 %v1157
        %v4241 = vunpack.c.h.b16 %v1157
        %v4242 = vunpack.c.l.b16 %v1158
        %v4243 = vunpack.c.h.b16 %v1158
        %v4244 = vunpack.c.l.b16 %v1159
        %v4245 = vunpack.c.h.b16 %v1159
        %v4246 = vunpack.c.l.b16 %v1160
        %v4247 = vunpack.c.h.b16 %v1160
        %v4248 = vunpack.c.l.b16 %v1161
        %v4249 = vunpack.c.h.b16 %v1161
        %v4250 = vunpack.c.l.b16 %v1162
        %v4251 = vunpack.c.h.b16 %v1162
        %v4252 = vunpack.c.l.b16 %v1163
        %v4253 = vunpack.c.h.b16 %v1163
        %v4254 = vunpack.c.l.b16 %v1164
        %v4255 = vunpack.c.h.b16 %v1164
        %v4256 = vunpack.c.l.b16 %v1165
        %v4257 = vunpack.c.h.b16 %v1165
        %v4258 = vunpack.c.l.b16 %v1166
        %v4259 = vunpack.c.h.b16 %v1166
        %v4260 = vunpack.c.l.b16 %v1167
        %v4261 = vunpack.c.h.b16 %v1167
        %v4262 = vunpack.c.l.b16 %v1168
        %v4263 = vunpack.c.h.b16 %v1168
        %v4264 = vunpack.c.l.b16 %v1169
        %v4265 = vunpack.c.h.b16 %v1169
        %v4266 = vunpack.c.l.b16 %v1170
        %v4267 = vunpack.c.h.b16 %v1170
        %v4268 = vunpack.c.l.b16 %v1171
        %v4269 = vunpack.c.h.b16 %v1171
        %v4270 = vunpack.c.l.b16 %v1172
        %v4271 = vunpack.c.h.b16 %v1172
        %v4272 = vunpack.c.l.b16 %v1173
        %v4273 = vunpack.c.h.b16 %v1173
        %v4274 = vunpack.c.l.b16 %v1174
        %v4275 = vunpack.c.h.b16 %v1174
        %v4276 = vunpack.c.l.b16 %v1175
        %v4277 = vunpack.c.h.b16 %v1175
        %v4278 = vunpack.c.l.b16 %v1176
        %v4279 = vunpack.c.h.b16 %v1176
        %v4280 = vunpack.c.l.b16 %v1177
        %v4281 = vunpack.c.h.b16 %v1177
        %v4282 = vunpack.c.l.b16 %v1178
        %v4283 = vunpack.c.h.b16 %v1178
        %v4284 = vunpack.c.l.b16 %v1179
        %v4285 = vunpack.c.h.b16 %v1179
        %v4286 = vunpack.c.l.b16 %v1180
        %v4287 = vunpack.c.h.b16 %v1180
        %v4288 = vunpack.c.l.b16 %v1181
        %v4289 = vunpack.c.h.b16 %v1181
        %v4290 = vunpack.c.l.b16 %v1182
        %v4291 = vunpack.c.h.b16 %v1182
        %v4292 = vunpack.c.l.b16 %v1183
        %v4293 = vunpack.c.h.b16 %v1183
        %v4294 = vunpack.c.l.b16 %v1184
        %v4295 = vunpack.c.h.b16 %v1184
        %v4296 = vunpack.c.l.b16 %v1185
        %v4297 = vunpack.c.h.b16 %v1185
        %v4298 = vunpack.c.l.b16 %v1186
        %v4299 = vunpack.c.h.b16 %v1186
        %v4300 = vunpack.c.l.b16 %v1187
        %v4301 = vunpack.c.h.b16 %v1187
        %v4302 = vunpack.c.l.b16 %v1188
        %v4303 = vunpack.c.h.b16 %v1188
        %v4304 = vunpack.c.l.b16 %v1189
        %v4305 = vunpack.c.h.b16 %v1189
        %v4306 = vunpack.c.l.b16 %v1190
        %v4307 = vunpack.c.h.b16 %v1190
        %v4308 = vunpack.c.l.b16 %v1191
        %v4309 = vunpack.c.h.b16 %v1191
        %v4310 = vunpack.c.l.b16 %v1192
        %v4311 = vunpack.c.h.b16 %v1192
        %v4312 = vunpack.c.l.b16 %v1193
        %v4313 = vunpack.c.h.b16 %v1193
        %v4314 = vunpack.c.l.b16 %v1194
        %v4315 = vunpack.c.h.b16 %v1194
        %v4316 = vunpack.c.l.b16 %v1195
        %v4317 = vunpack.c.h.b16 %v1195
        %v4318 = vunpack.c.l.b16 %v1196
        %v4319 = vunpack.c.h.b16 %v1196
        %v4320 = vunpack.c.l.b16 %v1197
        %v4321 = vunpack.c.h.b16 %v1197
        %v4322 = vunpack.c.l.b16 %v1198
        %v4323 = vunpack.c.h.b16 %v1198
        %v4324 = vunpack.c.l.b16 %v1199
        %v4325 = vunpack.c.h.b16 %v1199
        %v4326 = vunpack.c.l.b16 %v1200
        %v4327 = vunpack.c.h.b16 %v1200
        %v4328 = vunpack.c.l.b16 %v1201
        %v4329 = vunpack.c.h.b16 %v1201
        %v4330 = vunpack.c.l.b16 %v1202
        %v4331 = vunpack.c.h.b16 %v1202
        %v4332 = vunpack.c.l.b16 %v1203
        %v4333 = vunpack.c.h.b16 %v1203
        %v4334 = vunpack.c.l.b16 %v1204
        %v4335 = vunpack.c.h.b16 %v1204
        %v4336 = vunpack.c.l.b16 %v1205
        %v4337 = vunpack.c.h.b16 %v1205
        %v4338 = vunpack.c.l.b16 %v1206
        %v4339 = vunpack.c.h.b16 %v1206
        %v4340 = vunpack.c.l.b16 %v1207
        %v4341 = vunpack.c.h.b16 %v1207
        %v4342 = vunpack.c.l.b16 %v1208
        %v4343 = vunpack.c.h.b16 %v1208
        %v4344 = vunpack.c.l.b16 %v1209
        %v4345 = vunpack.c.h.b16 %v1209
        %v4346 = vunpack.c.l.b16 %v1210
        %v4347 = vunpack.c.h.b16 %v1210
        %v4348 = vunpack.c.l.b16 %v1211
        %v4349 = vunpack.c.h.b16 %v1211
        %v4350 = vunpack.c.l.b16 %v1212
        %v4351 = vunpack.c.h.b16 %v1212
        %v4352 = vunpack.c.l.b16 %v1213
        %v4353 = vunpack.c.h.b16 %v1213
        %v4354 = vunpack.c.l.b16 %v1214
        %v4355 = vunpack.c.h.b16 %v1214
        %v4356 = vunpack.c.l.b16 %v1215
        %v4357 = vunpack.c.h.b16 %v1215
        %v4358 = vunpack.c.l.b16 %v1216
        %v4359 = vunpack.c.h.b16 %v1216
        %v4360 = vunpack.c.l.b16 %v1217
        %v4361 = vunpack.c.h.b16 %v1217
        %v4362 = vunpack.c.l.b16 %v1218
        %v4363 = vunpack.c.h.b16 %v1218
        %v4364 = vunpack.c.l.b16 %v1219
        %v4365 = vunpack.c.h.b16 %v1219
        %v4366 = vunpack.c.l.b16 %v1220
        %v4367 = vunpack.c.h.b16 %v1220
        %v4368 = vunpack.c.l.b16 %v1221
        %v4369 = vunpack.c.h.b16 %v1221
        %v4370 = vunpack.c.l.b16 %v1222
        %v4371 = vunpack.c.h.b16 %v1222
        %v4372 = vunpack.c.l.b16 %v1223
        %v4373 = vunpack.c.h.b16 %v1223
        %v4374 = vunpack.c.l.b16 %v1224
        %v4375 = vunpack.c.h.b16 %v1224
        %v4376 = vunpack.c.l.b16 %v1225
        %v4377 = vunpack.c.h.b16 %v1225
        %v4378 = vunpack.c.l.b16 %v1226
        %v4379 = vunpack.c.h.b16 %v1226
        %v4380 = vunpack.c.l.b16 %v1227
        %v4381 = vunpack.c.h.b16 %v1227
        %v4382 = vunpack.c.l.b16 %v1228
        %v4383 = vunpack.c.h.b16 %v1228
        %v4384 = vunpack.c.l.b16 %v1229
        %v4385 = vunpack.c.h.b16 %v1229
        %v4386 = vunpack.c.l.b16 %v1230
        %v4387 = vunpack.c.h.b16 %v1230
        %v4388 = vunpack.c.l.b16 %v1231
        %v4389 = vunpack.c.h.b16 %v1231
        %v4390 = vunpack.c.l.b16 %v1232
        %v4391 = vunpack.c.h.b16 %v1232
        %v4392 = vunpack.c.l.b16 %v1233
        %v4393 = vunpack.c.h.b16 %v1233
        %v4394 = vunpack.c.l.b16 %v1234
        %v4395 = vunpack.c.h.b16 %v1234
        %v4396 = vunpack.c.l.b16 %v1235
        %v4397 = vunpack.c.h.b16 %v1235
        %v4398 = vunpack.c.l.b16 %v1236
        %v4399 = vunpack.c.h.b16 %v1236
        %v4400 = vunpack.c.l.b16 %v1237
        %v4401 = vunpack.c.h.b16 %v1237
        %v4402 = vunpack.c.l.b16 %v1238
        %v4403 = vunpack.c.h.b16 %v1238
        %v4404 = vunpack.c.l.b16 %v1239
        %v4405 = vunpack.c.h.b16 %v1239
        %v4406 = vunpack.c.l.b16 %v1240
        %v4407 = vunpack.c.h.b16 %v1240
        %v4408 = vunpack.c.l.b16 %v1241
        %v4409 = vunpack.c.h.b16 %v1241
        %v4410 = vunpack.c.l.b16 %v1242
        %v4411 = vunpack.c.h.b16 %v1242
        %v4412 = vunpack.c.l.b16 %v1243
        %v4413 = vunpack.c.h.b16 %v1243
        %v4414 = vunpack.c.l.b16 %v1244
        %v4415 = vunpack.c.h.b16 %v1244
        %v4416 = vunpack.c.l.b16 %v1245
        %v4417 = vunpack.c.h.b16 %v1245
        %v4418 = vunpack.c.l.b16 %v1246
        %v4419 = vunpack.c.h.b16 %v1246
        %v4420 = vunpack.c.l.b16 %v1247
        %v4421 = vunpack.c.h.b16 %v1247
        %v4422 = vunpack.c.l.b16 %v1248
        %v4423 = vunpack.c.h.b16 %v1248
        %v4424 = vunpack.c.l.b16 %v1249
        %v4425 = vunpack.c.h.b16 %v1249
        %v4426 = vunpack.c.l.b16 %v1250
        %v4427 = vunpack.c.h.b16 %v1250
        %v4428 = vunpack.c.l.b16 %v1251
        %v4429 = vunpack.c.h.b16 %v1251
        %v4430 = vunpack.c.l.b16 %v1252
        %v4431 = vunpack.c.h.b16 %v1252
        %v4432 = vunpack.c.l.b16 %v1253
        %v4433 = vunpack.c.h.b16 %v1253
        %v4434 = vunpack.c.l.b16 %v1254
        %v4435 = vunpack.c.h.b16 %v1254
        %v4436 = vunpack.c.l.b16 %v1255
        %v4437 = vunpack.c.h.b16 %v1255
        %v4438 = vunpack.c.l.b16 %v1256
        %v4439 = vunpack.c.h.b16 %v1256
        %v4440 = vunpack.c.l.b16 %v1257
        %v4441 = vunpack.c.h.b16 %v1257
        %v4442 = vunpack.c.l.b16 %v1258
        %v4443 = vunpack.c.h.b16 %v1258
        %v4444 = vunpack.c.l.b16 %v1259
        %v4445 = vunpack.c.h.b16 %v1259
        %v4446 = vunpack.c.l.b16 %v1260
        %v4447 = vunpack.c.h.b16 %v1260
        %v4448 = vunpack.c.l.b16 %v1261
        %v4449 = vunpack.c.h.b16 %v1261
        %v4450 = vunpack.c.l.b16 %v1262
        %v4451 = vunpack.c.h.b16 %v1262
        %v4452 = vunpack.c.l.b16 %v1263
        %v4453 = vunpack.c.h.b16 %v1263
        %v4454 = vunpack.c.l.b16 %v1264
        %v4455 = vunpack.c.h.b16 %v1264
        %v4456 = vunpack.c.l.b16 %v1265
        %v4457 = vunpack.c.h.b16 %v1265
        %v4458 = vunpack.c.l.b16 %v1266
        %v4459 = vunpack.c.h.b16 %v1266
        %v4460 = vunpack.c.l.b16 %v1267
        %v4461 = vunpack.c.h.b16 %v1267
        %v4462 = vunpack.c.l.b16 %v1268
        %v4463 = vunpack.c.h.b16 %v1268
        %v4464 = vunpack.c.l.b16 %v1269
        %v4465 = vunpack.c.h.b16 %v1269
        %v4466 = vunpack.c.l.b16 %v1270
        %v4467 = vunpack.c.h.b16 %v1270
        %v4468 = vunpack.c.l.b16 %v1271
        %v4469 = vunpack.c.h.b16 %v1271
        %v4470 = vunpack.c.l.b16 %v1272
        %v4471 = vunpack.c.h.b16 %v1272
        %v4472 = vunpack.c.l.b16 %v1273
        %v4473 = vunpack.c.h.b16 %v1273
        %v4474 = vunpack.c.l.b16 %v1274
        %v4475 = vunpack.c.h.b16 %v1274
        %v4476 = vunpack.c.l.b16 %v1275
        %v4477 = vunpack.c.h.b16 %v1275
        %v4478 = vunpack.c.l.b16 %v1276
        %v4479 = vunpack.c.h.b16 %v1276
        %v4480 = vunpack.c.l.b16 %v1277
        %v4481 = vunpack.c.h.b16 %v1277
        %v4482 = vunpack.c.l.b16 %v1278
        %v4483 = vunpack.c.h.b16 %v1278
        %v4484 = vunpack.c.l.b16 %v1279
        %v4485 = vunpack.c.h.b16 %v1279
        %v4486 = vpack.c.b16 %v2442, %v2438
        %v4487 = vpack.c.b16 %v2443, %v2439
        %v4488 = vpack.c.b16 %v2444, %v2440
        %v4489 = vpack.c.b16 %v2445, %v2441
        %v4490 = vpack.c.b16 %v2450, %v2446
        %v4491 = vpack.c.b16 %v2451, %v2447
        %v4492 = vpack.c.b16 %v2452, %v2448
        %v4493 = vpack.c.b16 %v2453, %v2449
        %v4494 = vpack.c.b16 %v2458, %v2454
        %v4495 = vpack.c.b16 %v2459, %v2455
        %v4496 = vpack.c.b16 %v2460, %v2456
        %v4497 = vpack.c.b16 %v2461, %v2457
        %v4498 = vpack.c.b16 %v2466, %v2462
        %v4499 = vpack.c.b16 %v2467, %v2463
        %v4500 = vpack.c.b16 %v2468, %v2464
        %v4501 = vpack.c.b16 %v2469, %v2465
        %v4502 = vpack.c.b16 %v2474, %v2470
        %v4503 = vpack.c.b16 %v2475, %v2471
        %v4504 = vpack.c.b16 %v2476, %v2472
        %v4505 = vpack.c.b16 %v2477, %v2473
        %v4506 = vpack.c.b16 %v2482, %v2478
        %v4507 = vpack.c.b16 %v2483, %v2479
        %v4508 = vpack.c.b16 %v2484, %v2480
        %v4509 = vpack.c.b16 %v2485, %v2481
        %v4510 = vpack.c.b16 %v2490, %v2486
        %v4511 = vpack.c.b16 %v2491, %v2487
        %v4512 = vpack.c.b16 %v2492, %v2488
        %v4513 = vpack.c.b16 %v2493, %v2489
        %v4514 = vpack.c.b16 %v2498, %v2494
        %v4515 = vpack.c.b16 %v2499, %v2495
        %v4516 = vpack.c.b16 %v2500, %v2496
        %v4517 = vpack.c.b16 %v2501, %v2497
        %v4518 = vpack.c.b16 %v2506, %v2502
        %v4519 = vpack.c.b16 %v2507, %v2503
        %v4520 = vpack.c.b16 %v2508, %v2504
        %v4521 = vpack.c.b16 %v2509, %v2505
        %v4522 = vpack.c.b16 %v2514, %v2510
        %v4523 = vpack.c.b16 %v2515, %v2511
        %v4524 = vpack.c.b16 %v2516, %v2512
        %v4525 = vpack.c.b16 %v2517, %v2513
        %v4526 = vpack.c.b16 %v2522, %v2518
        %v4527 = vpack.c.b16 %v2523, %v2519
        %v4528 = vpack.c.b16 %v2524, %v2520
        %v4529 = vpack.c.b16 %v2525, %v2521
        %v4530 = vpack.c.b16 %v2530, %v2526
        %v4531 = vpack.c.b16 %v2531, %v2527
        %v4532 = vpack.c.b16 %v2532, %v2528
        %v4533 = vpack.c.b16 %v2533, %v2529
        %v4534 = vpack.c.b16 %v2538, %v2534
        %v4535 = vpack.c.b16 %v2539, %v2535
        %v4536 = vpack.c.b16 %v2540, %v2536
        %v4537 = vpack.c.b16 %v2541, %v2537
        %v4538 = vpack.c.b16 %v2546, %v2542
        %v4539 = vpack.c.b16 %v2547, %v2543
        %v4540 = vpack.c.b16 %v2548, %v2544
        %v4541 = vpack.c.b16 %v2549, %v2545
        %v4542 = vpack.c.b16 %v2554, %v2550
        %v4543 = vpack.c.b16 %v2555, %v2551
        %v4544 = vpack.c.b16 %v2556, %v2552
        %v4545 = vpack.c.b16 %v2557, %v2553
        %v4546 = vpack.c.b16 %v2562, %v2558
        %v4547 = vpack.c.b16 %v2563, %v2559
        %v4548 = vpack.c.b16 %v2564, %v2560
        %v4549 = vpack.c.b16 %v2565, %v2561
        %v4550 = vpack.c.b16 %v2570, %v2566
        %v4551 = vpack.c.b16 %v2571, %v2567
        %v4552 = vpack.c.b16 %v2572, %v2568
        %v4553 = vpack.c.b16 %v2573, %v2569
        %v4554 = vpack.c.b16 %v2578, %v2574
        %v4555 = vpack.c.b16 %v2579, %v2575
        %v4556 = vpack.c.b16 %v2580, %v2576
        %v4557 = vpack.c.b16 %v2581, %v2577
        %v4558 = vpack.c.b16 %v2586, %v2582
        %v4559 = vpack.c.b16 %v2587, %v2583
        %v4560 = vpack.c.b16 %v2588, %v2584
        %v4561 = vpack.c.b16 %v2589, %v2585
        %v4562 = vpack.c.b16 %v2594, %v2590
        %v4563 = vpack.c.b16 %v2595, %v2591
        %v4564 = vpack.c.b16 %v2596, %v2592
        %v4565 = vpack.c.b16 %v2597, %v2593
        %v4566 = vpack.c.b16 %v2602, %v2598
        %v4567 = vpack.c.b16 %v2603, %v2599
        %v4568 = vpack.c.b16 %v2604, %v2600
        %v4569 = vpack.c.b16 %v2605, %v2601
        %v4570 = vpack.c.b16 %v2610, %v2606
        %v4571 = vpack.c.b16 %v2611, %v2607
        %v4572 = vpack.c.b16 %v2612, %v2608
        %v4573 = vpack.c.b16 %v2613, %v2609
        %v4574 = vpack.c.b16 %v2618, %v2614
        %v4575 = vpack.c.b16 %v2619, %v2615
        %v4576 = vpack.c.b16 %v2620, %v2616
        %v4577 = vpack.c.b16 %v2621, %v2617
        %v4578 = vpack.c.b16 %v2626, %v2622
        %v4579 = vpack.c.b16 %v2627, %v2623
        %v4580 = vpack.c.b16 %v2628, %v2624
        %v4581 = vpack.c.b16 %v2629, %v2625
        %v4582 = vpack.c.b16 %v2634, %v2630
        %v4583 = vpack.c.b16 %v2635, %v2631
        %v4584 = vpack.c.b16 %v2636, %v2632
        %v4585 = vpack.c.b16 %v2637, %v2633
        %v4586 = vpack.c.b16 %v2642, %v2638
        %v4587 = vpack.c.b16 %v2643, %v2639
        %v4588 = vpack.c.b16 %v2644, %v2640
        %v4589 = vpack.c.b16 %v2645, %v2641
        %v4590 = vpack.c.b16 %v2650, %v2646
        %v4591 = vpack.c.b16 %v2651, %v2647
        %v4592 = vpack.c.b16 %v2652, %v2648
        %v4593 = vpack.c.b16 %v2653, %v2649
        %v4594 = vpack.c.b16 %v2658, %v2654
        %v4595 = vpack.c.b16 %v2659, %v2655
        %v4596 = vpack.c.b16 %v2660, %v2656
        %v4597 = vpack.c.b16 %v2661, %v2657
        %v4598 = vpack.c.b16 %v2666, %v2662
        %v4599 = vpack.c.b16 %v2667, %v2663
        %v4600 = vpack.c.b16 %v2668, %v2664
        %v4601 = vpack.c.b16 %v2669, %v2665
        %v4602 = vpack.c.b16 %v2674, %v2670
        %v4603 = vpack.c.b16 %v2675, %v2671
        %v4604 = vpack.c.b16 %v2676, %v2672
        %v4605 = vpack.c.b16 %v2677, %v2673
        %v4606 = vpack.c.b16 %v2682, %v2678
        %v4607 = vpack.c.b16 %v2683, %v2679
        %v4608 = vpack.c.b16 %v2684, %v2680
        %v4609 = vpack.c.b16 %v2685, %v2681
        %v4610 = vpack.c.b16 %v2690, %v2686
        %v4611 = vpack.c.b16 %v2691, %v2687
        %v4612 = vpack.c.b16 %v2692, %v2688
        %v4613 = vpack.c.b16 %v2693, %v2689
        %v4614 = vpack.c.b16 %v2698, %v2694
        %v4615 = vpack.c.b16 %v2699, %v2695
        %v4616 = vpack.c.b16 %v2700, %v2696
        %v4617 = vpack.c.b16 %v2701, %v2697
        %v4618 = vpack.c.b16 %v2706, %v2702
        %v4619 = vpack.c.b16 %v2707, %v2703
        %v4620 = vpack.c.b16 %v2708, %v2704
        %v4621 = vpack.c.b16 %v2709, %v2705
        %v4622 = vpack.c.b16 %v2714, %v2710
        %v4623 = vpack.c.b16 %v2715, %v2711
        %v4624 = vpack.c.b16 %v2716, %v2712
        %v4625 = vpack.c.b16 %v2717, %v2713
        %v4626 = vpack.c.b16 %v2722, %v2718
        %v4627 = vpack.c.b16 %v2723, %v2719
        %v4628 = vpack.c.b16 %v2724, %v2720
        %v4629 = vpack.c.b16 %v2725, %v2721
        %v4630 = vpack.c.b16 %v2730, %v2726
        %v4631 = vpack.c.b16 %v2731, %v2727
        %v4632 = vpack.c.b16 %v2732, %v2728
        %v4633 = vpack.c.b16 %v2733, %v2729
        %v4634 = vpack.c.b16 %v2738, %v2734
        %v4635 = vpack.c.b16 %v2739, %v2735
        %v4636 = vpack.c.b16 %v2740, %v2736
        %v4637 = vpack.c.b16 %v2741, %v2737
        %v4638 = vpack.c.b16 %v2746, %v2742
        %v4639 = vpack.c.b16 %v2747, %v2743
        %v4640 = vpack.c.b16 %v2748, %v2744
        %v4641 = vpack.c.b16 %v2749, %v2745
        %v4642 = vpack.c.b16 %v2754, %v2750
        %v4643 = vpack.c.b16 %v2755, %v2751
        %v4644 = vpack.c.b16 %v2756, %v2752
        %v4645 = vpack.c.b16 %v2757, %v2753
        %v4646 = vpack.c.b16 %v2762, %v2758
        %v4647 = vpack.c.b16 %v2763, %v2759
        %v4648 = vpack.c.b16 %v2764, %v2760
        %v4649 = vpack.c.b16 %v2765, %v2761
        %v4650 = vpack.c.b16 %v2770, %v2766
        %v4651 = vpack.c.b16 %v2771, %v2767
        %v4652 = vpack.c.b16 %v2772, %v2768
        %v4653 = vpack.c.b16 %v2773, %v2769
        %v4654 = vpack.c.b16 %v2778, %v2774
        %v4655 = vpack.c.b16 %v2779, %v2775
        %v4656 = vpack.c.b16 %v2780, %v2776
        %v4657 = vpack.c.b16 %v2781, %v2777
        %v4658 = vpack.c.b16 %v2786, %v2782
        %v4659 = vpack.c.b16 %v2787, %v2783
        %v4660 = vpack.c.b16 %v2788, %v2784
        %v4661 = vpack.c.b16 %v2789, %v2785
        %v4662 = vpack.c.b16 %v2794, %v2790
        %v4663 = vpack.c.b16 %v2795, %v2791
        %v4664 = vpack.c.b16 %v2796, %v2792
        %v4665 = vpack.c.b16 %v2797, %v2793
        %v4666 = vpack.c.b16 %v2802, %v2798
        %v4667 = vpack.c.b16 %v2803, %v2799
        %v4668 = vpack.c.b16 %v2804, %v2800
        %v4669 = vpack.c.b16 %v2805, %v2801
        %v4670 = vpack.c.b16 %v2810, %v2806
        %v4671 = vpack.c.b16 %v2811, %v2807
        %v4672 = vpack.c.b16 %v2812, %v2808
        %v4673 = vpack.c.b16 %v2813, %v2809
        %v4674 = vpack.c.b16 %v2818, %v2814
        %v4675 = vpack.c.b16 %v2819, %v2815
        %v4676 = vpack.c.b16 %v2820, %v2816
        %v4677 = vpack.c.b16 %v2821, %v2817
        %v4678 = vpack.c.b16 %v2826, %v2822
        %v4679 = vpack.c.b16 %v2827, %v2823
        %v4680 = vpack.c.b16 %v2828, %v2824
        %v4681 = vpack.c.b16 %v2829, %v2825
        %v4682 = vpack.c.b16 %v2834, %v2830
        %v4683 = vpack.c.b16 %v2835, %v2831
        %v4684 = vpack.c.b16 %v2836, %v2832
        %v4685 = vpack.c.b16 %v2837, %v2833
        %v4686 = vpack.c.b16 %v2842, %v2838
        %v4687 = vpack.c.b16 %v2843, %v2839
        %v4688 = vpack.c.b16 %v2844, %v2840
        %v4689 = vpack.c.b16 %v2845, %v2841
        %v4690 = vpack.c.b16 %v2850, %v2846
        %v4691 = vpack.c.b16 %v2851, %v2847
        %v4692 = vpack.c.b16 %v2852, %v2848
        %v4693 = vpack.c.b16 %v2853, %v2849
        %v4694 = vpack.c.b16 %v2858, %v2854
        %v4695 = vpack.c.b16 %v2859, %v2855
        %v4696 = vpack.c.b16 %v2860, %v2856
        %v4697 = vpack.c.b16 %v2861, %v2857
        %v4698 = vpack.c.b16 %v2866, %v2862
        %v4699 = vpack.c.b16 %v2867, %v2863
        %v4700 = vpack.c.b16 %v2868, %v2864
        %v4701 = vpack.c.b16 %v2869, %v2865
        %v4702 = vpack.c.b16 %v2874, %v2870
        %v4703 = vpack.c.b16 %v2875, %v2871
        %v4704 = vpack.c.b16 %v2876, %v2872
        %v4705 = vpack.c.b16 %v2877, %v2873
        %v4706 = vpack.c.b16 %v2882, %v2878
        %v4707 = vpack.c.b16 %v2883, %v2879
        %v4708 = vpack.c.b16 %v2884, %v2880
        %v4709 = vpack.c.b16 %v2885, %v2881
        %v4710 = vpack.c.b16 %v2890, %v2886
        %v4711 = vpack.c.b16 %v2891, %v2887
        %v4712 = vpack.c.b16 %v2892, %v2888
        %v4713 = vpack.c.b16 %v2893, %v2889
        %v4714 = vpack.c.b16 %v2898, %v2894
        %v4715 = vpack.c.b16 %v2899, %v2895
        %v4716 = vpack.c.b16 %v2900, %v2896
        %v4717 = vpack.c.b16 %v2901, %v2897
        %v4718 = vpack.c.b16 %v2906, %v2902
        %v4719 = vpack.c.b16 %v2907, %v2903
        %v4720 = vpack.c.b16 %v2908, %v2904
        %v4721 = vpack.c.b16 %v2909, %v2905
        %v4722 = vpack.c.b16 %v2914, %v2910
        %v4723 = vpack.c.b16 %v2915, %v2911
        %v4724 = vpack.c.b16 %v2916, %v2912
        %v4725 = vpack.c.b16 %v2917, %v2913
        %v4726 = vpack.c.b16 %v2922, %v2918
        %v4727 = vpack.c.b16 %v2923, %v2919
        %v4728 = vpack.c.b16 %v2924, %v2920
        %v4729 = vpack.c.b16 %v2925, %v2921
        %v4730 = vpack.c.b16 %v2930, %v2926
        %v4731 = vpack.c.b16 %v2931, %v2927
        %v4732 = vpack.c.b16 %v2932, %v2928
        %v4733 = vpack.c.b16 %v2933, %v2929
        %v4734 = vpack.c.b16 %v2938, %v2934
        %v4735 = vpack.c.b16 %v2939, %v2935
        %v4736 = vpack.c.b16 %v2940, %v2936
        %v4737 = vpack.c.b16 %v2941, %v2937
        %v4738 = vpack.c.b16 %v2946, %v2942
        %v4739 = vpack.c.b16 %v2947, %v2943
        %v4740 = vpack.c.b16 %v2948, %v2944
        %v4741 = vpack.c.b16 %v2949, %v2945
        %v4742 = vpack.c.b16 %v2954, %v2950
        %v4743 = vpack.c.b16 %v2955, %v2951
        %v4744 = vpack.c.b16 %v2956, %v2952
        %v4745 = vpack.c.b16 %v2957, %v2953
        %v4746 = vpack.c.b16 %v2962, %v2958
        %v4747 = vpack.c.b16 %v2963, %v2959
        %v4748 = vpack.c.b16 %v2964, %v2960
        %v4749 = vpack.c.b16 %v2965, %v2961
        %v4750 = vpack.c.b16 %v2970, %v2966
        %v4751 = vpack.c.b16 %v2971, %v2967
        %v4752 = vpack.c.b16 %v2972, %v2968
        %v4753 = vpack.c.b16 %v2973, %v2969
        %v4754 = vpack.c.b16 %v2978, %v2974
        %v4755 = vpack.c.b16 %v2979, %v2975
        %v4756 = vpack.c.b16 %v2980, %v2976
        %v4757 = vpack.c.b16 %v2981, %v2977
        %v4758 = vpack.c.b16 %v2986, %v2982
        %v4759 = vpack.c.b16 %v2987, %v2983
        %v4760 = vpack.c.b16 %v2988, %v2984
        %v4761 = vpack.c.b16 %v2989, %v2985
        %v4762 = vpack.c.b16 %v2994, %v2990
        %v4763 = vpack.c.b16 %v2995, %v2991
        %v4764 = vpack.c.b16 %v2996, %v2992
        %v4765 = vpack.c.b16 %v2997, %v2993
        %v4766 = vpack.c.b16 %v3002, %v2998
        %v4767 = vpack.c.b16 %v3003, %v2999
        %v4768 = vpack.c.b16 %v3004, %v3000
        %v4769 = vpack.c.b16 %v3005, %v3001
        %v4770 = vpack.c.b16 %v3010, %v3006
        %v4771 = vpack.c.b16 %v3011, %v3007
        %v4772 = vpack.c.b16 %v3012, %v3008
        %v4773 = vpack.c.b16 %v3013, %v3009
        %v4774 = vpack.c.b16 %v3018, %v3014
        %v4775 = vpack.c.b16 %v3019, %v3015
        %v4776 = vpack.c.b16 %v3020, %v3016
        %v4777 = vpack.c.b16 %v3021, %v3017
        %v4778 = vpack.c.b16 %v3026, %v3022
        %v4779 = vpack.c.b16 %v3027, %v3023
        %v4780 = vpack.c.b16 %v3028, %v3024
        %v4781 = vpack.c.b16 %v3029, %v3025
        %v4782 = vpack.c.b16 %v3034, %v3030
        %v4783 = vpack.c.b16 %v3035, %v3031
        %v4784 = vpack.c.b16 %v3036, %v3032
        %v4785 = vpack.c.b16 %v3037, %v3033
        %v4786 = vpack.c.b16 %v3042, %v3038
        %v4787 = vpack.c.b16 %v3043, %v3039
        %v4788 = vpack.c.b16 %v3044, %v3040
        %v4789 = vpack.c.b16 %v3045, %v3041
        %v4790 = vpack.c.b16 %v3050, %v3046
        %v4791 = vpack.c.b16 %v3051, %v3047
        %v4792 = vpack.c.b16 %v3052, %v3048
        %v4793 = vpack.c.b16 %v3053, %v3049
        %v4794 = vpack.c.b16 %v3058, %v3054
        %v4795 = vpack.c.b16 %v3059, %v3055
        %v4796 = vpack.c.b16 %v3060, %v3056
        %v4797 = vpack.c.b16 %v3061, %v3057
        %v4798 = vpack.c.b16 %v3066, %v3062
        %v4799 = vpack.c.b16 %v3067, %v3063
        %v4800 = vpack.c.b16 %v3068, %v3064
        %v4801 = vpack.c.b16 %v3069, %v3065
        %v4802 = vpack.c.b16 %v3074, %v3070
        %v4803 = vpack.c.b16 %v3075, %v3071
        %v4804 = vpack.c.b16 %v3076, %v3072
        %v4805 = vpack.c.b16 %v3077, %v3073
        %v4806 = vpack.c.b16 %v3082, %v3078
        %v4807 = vpack.c.b16 %v3083, %v3079
        %v4808 = vpack.c.b16 %v3084, %v3080
        %v4809 = vpack.c.b16 %v3085, %v3081
        %v4810 = vpack.c.b16 %v3090, %v3086
        %v4811 = vpack.c.b16 %v3091, %v3087
        %v4812 = vpack.c.b16 %v3092, %v3088
        %v4813 = vpack.c.b16 %v3093, %v3089
        %v4814 = vpack.c.b16 %v3098, %v3094
        %v4815 = vpack.c.b16 %v3099, %v3095
        %v4816 = vpack.c.b16 %v3100, %v3096
        %v4817 = vpack.c.b16 %v3101, %v3097
        %v4818 = vpack.c.b16 %v3106, %v3102
        %v4819 = vpack.c.b16 %v3107, %v3103
        %v4820 = vpack.c.b16 %v3108, %v3104
        %v4821 = vpack.c.b16 %v3109, %v3105
        %v4822 = vpack.c.b16 %v3114, %v3110
        %v4823 = vpack.c.b16 %v3115, %v3111
        %v4824 = vpack.c.b16 %v3116, %v3112
        %v4825 = vpack.c.b16 %v3117, %v3113
        %v4826 = vpack.c.b16 %v3122, %v3118
        %v4827 = vpack.c.b16 %v3123, %v3119
        %v4828 = vpack.c.b16 %v3124, %v3120
        %v4829 = vpack.c.b16 %v3125, %v3121
        %v4830 = vpack.c.b16 %v3130, %v3126
        %v4831 = vpack.c.b16 %v3131, %v3127
        %v4832 = vpack.c.b16 %v3132, %v3128
        %v4833 = vpack.c.b16 %v3133, %v3129
        %v4834 = vpack.c.b16 %v3138, %v3134
        %v4835 = vpack.c.b16 %v3139, %v3135
        %v4836 = vpack.c.b16 %v3140, %v3136
        %v4837 = vpack.c.b16 %v3141, %v3137
        %v4838 = vpack.c.b16 %v3146, %v3142
        %v4839 = vpack.c.b16 %v3147, %v3143
        %v4840 = vpack.c.b16 %v3148, %v3144
        %v4841 = vpack.c.b16 %v3149, %v3145
        %v4842 = vpack.c.b16 %v3154, %v3150
        %v4843 = vpack.c.b16 %v3155, %v3151
        %v4844 = vpack.c.b16 %v3156, %v3152
        %v4845 = vpack.c.b16 %v3157, %v3153
        %v4846 = vpack.c.b16 %v3162, %v3158
        %v4847 = vpack.c.b16 %v3163, %v3159
        %v4848 = vpack.c.b16 %v3164, %v3160
        %v4849 = vpack.c.b16 %v3165, %v3161
        %v4850 = vpack.c.b16 %v3170, %v3166
        %v4851 = vpack.c.b16 %v3171, %v3167
        %v4852 = vpack.c.b16 %v3172, %v3168
        %v4853 = vpack.c.b16 %v3173, %v3169
        %v4854 = vpack.c.b16 %v3178, %v3174
        %v4855 = vpack.c.b16 %v3179, %v3175
        %v4856 = vpack.c.b16 %v3180, %v3176
        %v4857 = vpack.c.b16 %v3181, %v3177
        %v4858 = vpack.c.b16 %v3186, %v3182
        %v4859 = vpack.c.b16 %v3187, %v3183
        %v4860 = vpack.c.b16 %v3188, %v3184
        %v4861 = vpack.c.b16 %v3189, %v3185
        %v4862 = vpack.c.b16 %v3194, %v3190
        %v4863 = vpack.c.b16 %v3195, %v3191
        %v4864 = vpack.c.b16 %v3196, %v3192
        %v4865 = vpack.c.b16 %v3197, %v3193
        %v4866 = vpack.c.b16 %v3202, %v3198
        %v4867 = vpack.c.b16 %v3203, %v3199
        %v4868 = vpack.c.b16 %v3204, %v3200
        %v4869 = vpack.c.b16 %v3205, %v3201
        %v4870 = vpack.c.b16 %v3210, %v3206
        %v4871 = vpack.c.b16 %v3211, %v3207
        %v4872 = vpack.c.b16 %v3212, %v3208
        %v4873 = vpack.c.b16 %v3213, %v3209
        %v4874 = vpack.c.b16 %v3218, %v3214
        %v4875 = vpack.c.b16 %v3219, %v3215
        %v4876 = vpack.c.b16 %v3220, %v3216
        %v4877 = vpack.c.b16 %v3221, %v3217
        %v4878 = vpack.c.b16 %v3226, %v3222
        %v4879 = vpack.c.b16 %v3227, %v3223
        %v4880 = vpack.c.b16 %v3228, %v3224
        %v4881 = vpack.c.b16 %v3229, %v3225
        %v4882 = vpack.c.b16 %v3234, %v3230
        %v4883 = vpack.c.b16 %v3235, %v3231
        %v4884 = vpack.c.b16 %v3236, %v3232
        %v4885 = vpack.c.b16 %v3237, %v3233
        %v4886 = vpack.c.b16 %v3242, %v3238
        %v4887 = vpack.c.b16 %v3243, %v3239
        %v4888 = vpack.c.b16 %v3244, %v3240
        %v4889 = vpack.c.b16 %v3245, %v3241
        %v4890 = vpack.c.b16 %v3250, %v3246
        %v4891 = vpack.c.b16 %v3251, %v3247
        %v4892 = vpack.c.b16 %v3252, %v3248
        %v4893 = vpack.c.b16 %v3253, %v3249
        %v4894 = vpack.c.b16 %v3258, %v3254
        %v4895 = vpack.c.b16 %v3259, %v3255
        %v4896 = vpack.c.b16 %v3260, %v3256
        %v4897 = vpack.c.b16 %v3261, %v3257
        %v4898 = vpack.c.b16 %v3266, %v3262
        %v4899 = vpack.c.b16 %v3267, %v3263
        %v4900 = vpack.c.b16 %v3268, %v3264
        %v4901 = vpack.c.b16 %v3269, %v3265
        %v4902 = vpack.c.b16 %v3274, %v3270
        %v4903 = vpack.c.b16 %v3275, %v3271
        %v4904 = vpack.c.b16 %v3276, %v3272
        %v4905 = vpack.c.b16 %v3277, %v3273
        %v4906 = vpack.c.b16 %v3282, %v3278
        %v4907 = vpack.c.b16 %v3283, %v3279
        %v4908 = vpack.c.b16 %v3284, %v3280
        %v4909 = vpack.c.b16 %v3285, %v3281
        %v4910 = vpack.c.b16 %v3290, %v3286
        %v4911 = vpack.c.b16 %v3291, %v3287
        %v4912 = vpack.c.b16 %v3292, %v3288
        %v4913 = vpack.c.b16 %v3293, %v3289
        %v4914 = vpack.c.b16 %v3298, %v3294
        %v4915 = vpack.c.b16 %v3299, %v3295
        %v4916 = vpack.c.b16 %v3300, %v3296
        %v4917 = vpack.c.b16 %v3301, %v3297
        %v4918 = vpack.c.b16 %v3306, %v3302
        %v4919 = vpack.c.b16 %v3307, %v3303
        %v4920 = vpack.c.b16 %v3308, %v3304
        %v4921 = vpack.c.b16 %v3309, %v3305
        %v4922 = vpack.c.b16 %v3314, %v3310
        %v4923 = vpack.c.b16 %v3315, %v3311
        %v4924 = vpack.c.b16 %v3316, %v3312
        %v4925 = vpack.c.b16 %v3317, %v3313
        %v4926 = vpack.c.b16 %v3322, %v3318
        %v4927 = vpack.c.b16 %v3323, %v3319
        %v4928 = vpack.c.b16 %v3324, %v3320
        %v4929 = vpack.c.b16 %v3325, %v3321
        %v4930 = vpack.c.b16 %v3330, %v3326
        %v4931 = vpack.c.b16 %v3331, %v3327
        %v4932 = vpack.c.b16 %v3332, %v3328
        %v4933 = vpack.c.b16 %v3333, %v3329
        %v4934 = vpack.c.b16 %v3338, %v3334
        %v4935 = vpack.c.b16 %v3339, %v3335
        %v4936 = vpack.c.b16 %v3340, %v3336
        %v4937 = vpack.c.b16 %v3341, %v3337
        %v4938 = vpack.c.b16 %v3346, %v3342
        %v4939 = vpack.c.b16 %v3347, %v3343
        %v4940 = vpack.c.b16 %v3348, %v3344
        %v4941 = vpack.c.b16 %v3349, %v3345
        %v4942 = vpack.c.b16 %v3354, %v3350
        %v4943 = vpack.c.b16 %v3355, %v3351
        %v4944 = vpack.c.b16 %v3356, %v3352
        %v4945 = vpack.c.b16 %v3357, %v3353
        %v4946 = vpack.c.b16 %v3362, %v3358
        %v4947 = vpack.c.b16 %v3363, %v3359
        %v4948 = vpack.c.b16 %v3364, %v3360
        %v4949 = vpack.c.b16 %v3365, %v3361
        %v4950 = vpack.c.b16 %v3370, %v3366
        %v4951 = vpack.c.b16 %v3371, %v3367
        %v4952 = vpack.c.b16 %v3372, %v3368
        %v4953 = vpack.c.b16 %v3373, %v3369
        %v4954 = vpack.c.b16 %v3378, %v3374
        %v4955 = vpack.c.b16 %v3379, %v3375
        %v4956 = vpack.c.b16 %v3380, %v3376
        %v4957 = vpack.c.b16 %v3381, %v3377
        %v4958 = vpack.c.b16 %v3386, %v3382
        %v4959 = vpack.c.b16 %v3387, %v3383
        %v4960 = vpack.c.b16 %v3388, %v3384
        %v4961 = vpack.c.b16 %v3389, %v3385
        %v4962 = vpack.c.b16 %v3394, %v3390
        %v4963 = vpack.c.b16 %v3395, %v3391
        %v4964 = vpack.c.b16 %v3396, %v3392
        %v4965 = vpack.c.b16 %v3397, %v3393
        %v4966 = vpack.c.b16 %v3402, %v3398
        %v4967 = vpack.c.b16 %v3403, %v3399
        %v4968 = vpack.c.b16 %v3404, %v3400
        %v4969 = vpack.c.b16 %v3405, %v3401
        %v4970 = vpack.c.b16 %v3410, %v3406
        %v4971 = vpack.c.b16 %v3411, %v3407
        %v4972 = vpack.c.b16 %v3412, %v3408
        %v4973 = vpack.c.b16 %v3413, %v3409
        %v4974 = vpack.c.b16 %v3418, %v3414
        %v4975 = vpack.c.b16 %v3419, %v3415
        %v4976 = vpack.c.b16 %v3420, %v3416
        %v4977 = vpack.c.b16 %v3421, %v3417
        %v4978 = vpack.c.b16 %v3426, %v3422
        %v4979 = vpack.c.b16 %v3427, %v3423
        %v4980 = vpack.c.b16 %v3428, %v3424
        %v4981 = vpack.c.b16 %v3429, %v3425
        %v4982 = vpack.c.b16 %v3434, %v3430
        %v4983 = vpack.c.b16 %v3435, %v3431
        %v4984 = vpack.c.b16 %v3436, %v3432
        %v4985 = vpack.c.b16 %v3437, %v3433
        %v4986 = vpack.c.b16 %v3442, %v3438
        %v4987 = vpack.c.b16 %v3443, %v3439
        %v4988 = vpack.c.b16 %v3444, %v3440
        %v4989 = vpack.c.b16 %v3445, %v3441
        %v4990 = vpack.c.b16 %v3450, %v3446
        %v4991 = vpack.c.b16 %v3451, %v3447
        %v4992 = vpack.c.b16 %v3452, %v3448
        %v4993 = vpack.c.b16 %v3453, %v3449
        %v4994 = vpack.c.b16 %v3458, %v3454
        %v4995 = vpack.c.b16 %v3459, %v3455
        %v4996 = vpack.c.b16 %v3460, %v3456
        %v4997 = vpack.c.b16 %v3461, %v3457
        %v4998 = vpack.c.b16 %v3466, %v3462
        %v4999 = vpack.c.b16 %v3467, %v3463
        %v5000 = vpack.c.b16 %v3468, %v3464
        %v5001 = vpack.c.b16 %v3469, %v3465
        %v5002 = vpack.c.b16 %v3474, %v3470
        %v5003 = vpack.c.b16 %v3475, %v3471
        %v5004 = vpack.c.b16 %v3476, %v3472
        %v5005 = vpack.c.b16 %v3477, %v3473
        %v5006 = vpack.c.b16 %v3482, %v3478
        %v5007 = vpack.c.b16 %v3483, %v3479
        %v5008 = vpack.c.b16 %v3484, %v3480
        %v5009 = vpack.c.b16 %v3485, %v3481
        %v5010 = vpack.c.b16 %v3490, %v3486
        %v5011 = vpack.c.b16 %v3491, %v3487
        %v5012 = vpack.c.b16 %v3492, %v3488
        %v5013 = vpack.c.b16 %v3493, %v3489
        %v5014 = vpack.c.b16 %v3498, %v3494
        %v5015 = vpack.c.b16 %v3499, %v3495
        %v5016 = vpack.c.b16 %v3500, %v3496
        %v5017 = vpack.c.b16 %v3501, %v3497
        %v5018 = vpack.c.b16 %v3506, %v3502
        %v5019 = vpack.c.b16 %v3507, %v3503
        %v5020 = vpack.c.b16 %v3508, %v3504
        %v5021 = vpack.c.b16 %v3509, %v3505
        %v5022 = vpack.c.b16 %v3514, %v3510
        %v5023 = vpack.c.b16 %v3515, %v3511
        %v5024 = vpack.c.b16 %v3516, %v3512
        %v5025 = vpack.c.b16 %v3517, %v3513
        %v5026 = vpack.c.b16 %v3522, %v3518
        %v5027 = vpack.c.b16 %v3523, %v3519
        %v5028 = vpack.c.b16 %v3524, %v3520
        %v5029 = vpack.c.b16 %v3525, %v3521
        %v5030 = vpack.c.b16 %v3530, %v3526
        %v5031 = vpack.c.b16 %v3531, %v3527
        %v5032 = vpack.c.b16 %v3532, %v3528
        %v5033 = vpack.c.b16 %v3533, %v3529
        %v5034 = vpack.c.b16 %v3538, %v3534
        %v5035 = vpack.c.b16 %v3539, %v3535
        %v5036 = vpack.c.b16 %v3540, %v3536
        %v5037 = vpack.c.b16 %v3541, %v3537
        %v5038 = vpack.c.b16 %v3546, %v3542
        %v5039 = vpack.c.b16 %v3547, %v3543
        %v5040 = vpack.c.b16 %v3548, %v3544
        %v5041 = vpack.c.b16 %v3549, %v3545
        %v5042 = vpack.c.b16 %v3554, %v3550
        %v5043 = vpack.c.b16 %v3555, %v3551
        %v5044 = vpack.c.b16 %v3556, %v3552
        %v5045 = vpack.c.b16 %v3557, %v3553
        %v5046 = vpack.c.b16 %v3562, %v3558
        %v5047 = vpack.c.b16 %v3563, %v3559
        %v5048 = vpack.c.b16 %v3564, %v3560
        %v5049 = vpack.c.b16 %v3565, %v3561
        %v5050 = vpack.c.b16 %v3570, %v3566
        %v5051 = vpack.c.b16 %v3571, %v3567
        %v5052 = vpack.c.b16 %v3572, %v3568
        %v5053 = vpack.c.b16 %v3573, %v3569
        %v5054 = vpack.c.b16 %v3578, %v3574
        %v5055 = vpack.c.b16 %v3579, %v3575
        %v5056 = vpack.c.b16 %v3580, %v3576
        %v5057 = vpack.c.b16 %v3581, %v3577
        %v5058 = vpack.c.b16 %v3586, %v3582
        %v5059 = vpack.c.b16 %v3587, %v3583
        %v5060 = vpack.c.b16 %v3588, %v3584
        %v5061 = vpack.c.b16 %v3589, %v3585
        %v5062 = vpack.c.b16 %v3594, %v3590
        %v5063 = vpack.c.b16 %v3595, %v3591
        %v5064 = vpack.c.b16 %v3596, %v3592
        %v5065 = vpack.c.b16 %v3597, %v3593
        %v5066 = vpack.c.b16 %v3602, %v3598
        %v5067 = vpack.c.b16 %v3603, %v3599
        %v5068 = vpack.c.b16 %v3604, %v3600
        %v5069 = vpack.c.b16 %v3605, %v3601
        %v5070 = vpack.c.b16 %v3610, %v3606
        %v5071 = vpack.c.b16 %v3611, %v3607
        %v5072 = vpack.c.b16 %v3612, %v3608
        %v5073 = vpack.c.b16 %v3613, %v3609
        %v5074 = vpack.c.b16 %v3618, %v3614
        %v5075 = vpack.c.b16 %v3619, %v3615
        %v5076 = vpack.c.b16 %v3620, %v3616
        %v5077 = vpack.c.b16 %v3621, %v3617
        %v5078 = vpack.c.b16 %v3626, %v3622
        %v5079 = vpack.c.b16 %v3627, %v3623
        %v5080 = vpack.c.b16 %v3628, %v3624
        %v5081 = vpack.c.b16 %v3629, %v3625
        %v5082 = vpack.c.b16 %v3634, %v3630
        %v5083 = vpack.c.b16 %v3635, %v3631
        %v5084 = vpack.c.b16 %v3636, %v3632
        %v5085 = vpack.c.b16 %v3637, %v3633
        %v5086 = vpack.c.b16 %v3642, %v3638
        %v5087 = vpack.c.b16 %v3643, %v3639
        %v5088 = vpack.c.b16 %v3644, %v3640
        %v5089 = vpack.c.b16 %v3645, %v3641
        %v5090 = vpack.c.b16 %v3650, %v3646
        %v5091 = vpack.c.b16 %v3651, %v3647
        %v5092 = vpack.c.b16 %v3652, %v3648
        %v5093 = vpack.c.b16 %v3653, %v3649
        %v5094 = vpack.c.b16 %v3658, %v3654
        %v5095 = vpack.c.b16 %v3659, %v3655
        %v5096 = vpack.c.b16 %v3660, %v3656
        %v5097 = vpack.c.b16 %v3661, %v3657
        %v5098 = vpack.c.b16 %v3666, %v3662
        %v5099 = vpack.c.b16 %v3667, %v3663
        %v5100 = vpack.c.b16 %v3668, %v3664
        %v5101 = vpack.c.b16 %v3669, %v3665
        %v5102 = vpack.c.b16 %v3674, %v3670
        %v5103 = vpack.c.b16 %v3675, %v3671
        %v5104 = vpack.c.b16 %v3676, %v3672
        %v5105 = vpack.c.b16 %v3677, %v3673
        %v5106 = vpack.c.b16 %v3682, %v3678
        %v5107 = vpack.c.b16 %v3683, %v3679
        %v5108 = vpack.c.b16 %v3684, %v3680
        %v5109 = vpack.c.b16 %v3685, %v3681
        %v5110 = vpack.c.b16 %v3690, %v3686
        %v5111 = vpack.c.b16 %v3691, %v3687
        %v5112 = vpack.c.b16 %v3692, %v3688
        %v5113 = vpack.c.b16 %v3693, %v3689
        %v5114 = vpack.c.b16 %v3698, %v3694
        %v5115 = vpack.c.b16 %v3699, %v3695
        %v5116 = vpack.c.b16 %v3700, %v3696
        %v5117 = vpack.c.b16 %v3701, %v3697
        %v5118 = vpack.c.b16 %v3706, %v3702
        %v5119 = vpack.c.b16 %v3707, %v3703
        %v5120 = vpack.c.b16 %v3708, %v3704
        %v5121 = vpack.c.b16 %v3709, %v3705
        %v5122 = vpack.c.b16 %v3714, %v3710
        %v5123 = vpack.c.b16 %v3715, %v3711
        %v5124 = vpack.c.b16 %v3716, %v3712
        %v5125 = vpack.c.b16 %v3717, %v3713
        %v5126 = vpack.c.b16 %v3722, %v3718
        %v5127 = vpack.c.b16 %v3723, %v3719
        %v5128 = vpack.c.b16 %v3724, %v3720
        %v5129 = vpack.c.b16 %v3725, %v3721
        %v5130 = vpack.c.b16 %v3730, %v3726
        %v5131 = vpack.c.b16 %v3731, %v3727
        %v5132 = vpack.c.b16 %v3732, %v3728
        %v5133 = vpack.c.b16 %v3733, %v3729
        %v5134 = vpack.c.b16 %v3738, %v3734
        %v5135 = vpack.c.b16 %v3739, %v3735
        %v5136 = vpack.c.b16 %v3740, %v3736
        %v5137 = vpack.c.b16 %v3741, %v3737
        %v5138 = vpack.c.b16 %v3746, %v3742
        %v5139 = vpack.c.b16 %v3747, %v3743
        %v5140 = vpack.c.b16 %v3748, %v3744
        %v5141 = vpack.c.b16 %v3749, %v3745
        %v5142 = vpack.c.b16 %v3754, %v3750
        %v5143 = vpack.c.b16 %v3755, %v3751
        %v5144 = vpack.c.b16 %v3756, %v3752
        %v5145 = vpack.c.b16 %v3757, %v3753
        %v5146 = vpack.c.b16 %v3762, %v3758
        %v5147 = vpack.c.b16 %v3763, %v3759
        %v5148 = vpack.c.b16 %v3764, %v3760
        %v5149 = vpack.c.b16 %v3765, %v3761
        %v5150 = vpack.c.b16 %v3770, %v3766
        %v5151 = vpack.c.b16 %v3771, %v3767
        %v5152 = vpack.c.b16 %v3772, %v3768
        %v5153 = vpack.c.b16 %v3773, %v3769
        %v5154 = vpack.c.b16 %v3778, %v3774
        %v5155 = vpack.c.b16 %v3779, %v3775
        %v5156 = vpack.c.b16 %v3780, %v3776
        %v5157 = vpack.c.b16 %v3781, %v3777
        %v5158 = vpack.c.b16 %v3786, %v3782
        %v5159 = vpack.c.b16 %v3787, %v3783
        %v5160 = vpack.c.b16 %v3788, %v3784
        %v5161 = vpack.c.b16 %v3789, %v3785
        %v5162 = vpack.c.b16 %v3794, %v3790
        %v5163 = vpack.c.b16 %v3795, %v3791
        %v5164 = vpack.c.b16 %v3796, %v3792
        %v5165 = vpack.c.b16 %v3797, %v3793
        %v5166 = vpack.c.b16 %v3802, %v3798
        %v5167 = vpack.c.b16 %v3803, %v3799
        %v5168 = vpack.c.b16 %v3804, %v3800
        %v5169 = vpack.c.b16 %v3805, %v3801
        %v5170 = vpack.c.b16 %v3810, %v3806
        %v5171 = vpack.c.b16 %v3811, %v3807
        %v5172 = vpack.c.b16 %v3812, %v3808
        %v5173 = vpack.c.b16 %v3813, %v3809
        %v5174 = vpack.c.b16 %v3818, %v3814
        %v5175 = vpack.c.b16 %v3819, %v3815
        %v5176 = vpack.c.b16 %v3820, %v3816
        %v5177 = vpack.c.b16 %v3821, %v3817
        %v5178 = vpack.c.b16 %v3826, %v3822
        %v5179 = vpack.c.b16 %v3827, %v3823
        %v5180 = vpack.c.b16 %v3828, %v3824
        %v5181 = vpack.c.b16 %v3829, %v3825
        %v5182 = vpack.c.b16 %v3834, %v3830
        %v5183 = vpack.c.b16 %v3835, %v3831
        %v5184 = vpack.c.b16 %v3836, %v3832
        %v5185 = vpack.c.b16 %v3837, %v3833
        %v5186 = vpack.c.b16 %v3842, %v3838
        %v5187 = vpack.c.b16 %v3843, %v3839
        %v5188 = vpack.c.b16 %v3844, %v3840
        %v5189 = vpack.c.b16 %v3845, %v3841
        %v5190 = vpack.c.b16 %v3850, %v3846
        %v5191 = vpack.c.b16 %v3851, %v3847
        %v5192 = vpack.c.b16 %v3852, %v3848
        %v5193 = vpack.c.b16 %v3853, %v3849
        %v5194 = vpack.c.b16 %v3858, %v3854
        %v5195 = vpack.c.b16 %v3859, %v3855
        %v5196 = vpack.c.b16 %v3860, %v3856
        %v5197 = vpack.c.b16 %v3861, %v3857
        %v5198 = vpack.c.b16 %v3866, %v3862
        %v5199 = vpack.c.b16 %v3867, %v3863
        %v5200 = vpack.c.b16 %v3868, %v3864
        %v5201 = vpack.c.b16 %v3869, %v3865
        %v5202 = vpack.c.b16 %v3874, %v3870
        %v5203 = vpack.c.b16 %v3875, %v3871
        %v5204 = vpack.c.b16 %v3876, %v3872
        %v5205 = vpack.c.b16 %v3877, %v3873
        %v5206 = vpack.c.b16 %v3882, %v3878
        %v5207 = vpack.c.b16 %v3883, %v3879
        %v5208 = vpack.c.b16 %v3884, %v3880
        %v5209 = vpack.c.b16 %v3885, %v3881
        %v5210 = vpack.c.b16 %v3890, %v3886
        %v5211 = vpack.c.b16 %v3891, %v3887
        %v5212 = vpack.c.b16 %v3892, %v3888
        %v5213 = vpack.c.b16 %v3893, %v3889
        %v5214 = vpack.c.b16 %v3898, %v3894
        %v5215 = vpack.c.b16 %v3899, %v3895
        %v5216 = vpack.c.b16 %v3900, %v3896
        %v5217 = vpack.c.b16 %v3901, %v3897
        %v5218 = vpack.c.b16 %v3906, %v3902
        %v5219 = vpack.c.b16 %v3907, %v3903
        %v5220 = vpack.c.b16 %v3908, %v3904
        %v5221 = vpack.c.b16 %v3909, %v3905
        %v5222 = vpack.c.b16 %v3914, %v3910
        %v5223 = vpack.c.b16 %v3915, %v3911
        %v5224 = vpack.c.b16 %v3916, %v3912
        %v5225 = vpack.c.b16 %v3917, %v3913
        %v5226 = vpack.c.b16 %v3922, %v3918
        %v5227 = vpack.c.b16 %v3923, %v3919
        %v5228 = vpack.c.b16 %v3924, %v3920
        %v5229 = vpack.c.b16 %v3925, %v3921
        %v5230 = vpack.c.b16 %v3930, %v3926
        %v5231 = vpack.c.b16 %v3931, %v3927
        %v5232 = vpack.c.b16 %v3932, %v3928
        %v5233 = vpack.c.b16 %v3933, %v3929
        %v5234 = vpack.c.b16 %v3938, %v3934
        %v5235 = vpack.c.b16 %v3939, %v3935
        %v5236 = vpack.c.b16 %v3940, %v3936
        %v5237 = vpack.c.b16 %v3941, %v3937
        %v5238 = vpack.c.b16 %v3946, %v3942
        %v5239 = vpack.c.b16 %v3947, %v3943
        %v5240 = vpack.c.b16 %v3948, %v3944
        %v5241 = vpack.c.b16 %v3949, %v3945
        %v5242 = vpack.c.b16 %v3954, %v3950
        %v5243 = vpack.c.b16 %v3955, %v3951
        %v5244 = vpack.c.b16 %v3956, %v3952
        %v5245 = vpack.c.b16 %v3957, %v3953
        %v5246 = vpack.c.b16 %v3962, %v3958
        %v5247 = vpack.c.b16 %v3963, %v3959
        %v5248 = vpack.c.b16 %v3964, %v3960
        %v5249 = vpack.c.b16 %v3965, %v3961
        %v5250 = vpack.c.b16 %v3970, %v3966
        %v5251 = vpack.c.b16 %v3971, %v3967
        %v5252 = vpack.c.b16 %v3972, %v3968
        %v5253 = vpack.c.b16 %v3973, %v3969
        %v5254 = vpack.c.b16 %v3978, %v3974
        %v5255 = vpack.c.b16 %v3979, %v3975
        %v5256 = vpack.c.b16 %v3980, %v3976
        %v5257 = vpack.c.b16 %v3981, %v3977
        %v5258 = vpack.c.b16 %v3986, %v3982
        %v5259 = vpack.c.b16 %v3987, %v3983
        %v5260 = vpack.c.b16 %v3988, %v3984
        %v5261 = vpack.c.b16 %v3989, %v3985
        %v5262 = vpack.c.b16 %v3994, %v3990
        %v5263 = vpack.c.b16 %v3995, %v3991
        %v5264 = vpack.c.b16 %v3996, %v3992
        %v5265 = vpack.c.b16 %v3997, %v3993
        %v5266 = vpack.c.b16 %v4002, %v3998
        %v5267 = vpack.c.b16 %v4003, %v3999
        %v5268 = vpack.c.b16 %v4004, %v4000
        %v5269 = vpack.c.b16 %v4005, %v4001
        %v5270 = vpack.c.b16 %v4010, %v4006
        %v5271 = vpack.c.b16 %v4011, %v4007
        %v5272 = vpack.c.b16 %v4012, %v4008
        %v5273 = vpack.c.b16 %v4013, %v4009
        %v5274 = vpack.c.b16 %v4018, %v4014
        %v5275 = vpack.c.b16 %v4019, %v4015
        %v5276 = vpack.c.b16 %v4020, %v4016
        %v5277 = vpack.c.b16 %v4021, %v4017
        %v5278 = vpack.c.b16 %v4026, %v4022
        %v5279 = vpack.c.b16 %v4027, %v4023
        %v5280 = vpack.c.b16 %v4028, %v4024
        %v5281 = vpack.c.b16 %v4029, %v4025
        %v5282 = vpack.c.b16 %v4034, %v4030
        %v5283 = vpack.c.b16 %v4035, %v4031
        %v5284 = vpack.c.b16 %v4036, %v4032
        %v5285 = vpack.c.b16 %v4037, %v4033
        %v5286 = vpack.c.b16 %v4042, %v4038
        %v5287 = vpack.c.b16 %v4043, %v4039
        %v5288 = vpack.c.b16 %v4044, %v4040
        %v5289 = vpack.c.b16 %v4045, %v4041
        %v5290 = vpack.c.b16 %v4050, %v4046
        %v5291 = vpack.c.b16 %v4051, %v4047
        %v5292 = vpack.c.b16 %v4052, %v4048
        %v5293 = vpack.c.b16 %v4053, %v4049
        %v5294 = vpack.c.b16 %v4058, %v4054
        %v5295 = vpack.c.b16 %v4059, %v4055
        %v5296 = vpack.c.b16 %v4060, %v4056
        %v5297 = vpack.c.b16 %v4061, %v4057
        %v5298 = vpack.c.b16 %v4066, %v4062
        %v5299 = vpack.c.b16 %v4067, %v4063
        %v5300 = vpack.c.b16 %v4068, %v4064
        %v5301 = vpack.c.b16 %v4069, %v4065
        %v5302 = vpack.c.b16 %v4074, %v4070
        %v5303 = vpack.c.b16 %v4075, %v4071
        %v5304 = vpack.c.b16 %v4076, %v4072
        %v5305 = vpack.c.b16 %v4077, %v4073
        %v5306 = vpack.c.b16 %v4082, %v4078
        %v5307 = vpack.c.b16 %v4083, %v4079
        %v5308 = vpack.c.b16 %v4084, %v4080
        %v5309 = vpack.c.b16 %v4085, %v4081
        %v5310 = vpack.c.b16 %v4090, %v4086
        %v5311 = vpack.c.b16 %v4091, %v4087
        %v5312 = vpack.c.b16 %v4092, %v4088
        %v5313 = vpack.c.b16 %v4093, %v4089
        %v5314 = vpack.c.b16 %v4098, %v4094
        %v5315 = vpack.c.b16 %v4099, %v4095
        %v5316 = vpack.c.b16 %v4100, %v4096
        %v5317 = vpack.c.b16 %v4101, %v4097
        %v5318 = vpack.c.b16 %v4106, %v4102
        %v5319 = vpack.c.b16 %v4107, %v4103
        %v5320 = vpack.c.b16 %v4108, %v4104
        %v5321 = vpack.c.b16 %v4109, %v4105
        %v5322 = vpack.c.b16 %v4114, %v4110
        %v5323 = vpack.c.b16 %v4115, %v4111
        %v5324 = vpack.c.b16 %v4116, %v4112
        %v5325 = vpack.c.b16 %v4117, %v4113
        %v5326 = vpack.c.b16 %v4122, %v4118
        %v5327 = vpack.c.b16 %v4123, %v4119
        %v5328 = vpack.c.b16 %v4124, %v4120
        %v5329 = vpack.c.b16 %v4125, %v4121
        %v5330 = vpack.c.b16 %v4130, %v4126
        %v5331 = vpack.c.b16 %v4131, %v4127
        %v5332 = vpack.c.b16 %v4132, %v4128
        %v5333 = vpack.c.b16 %v4133, %v4129
        %v5334 = vpack.c.b16 %v4138, %v4134
        %v5335 = vpack.c.b16 %v4139, %v4135
        %v5336 = vpack.c.b16 %v4140, %v4136
        %v5337 = vpack.c.b16 %v4141, %v4137
        %v5338 = vpack.c.b16 %v4146, %v4142
        %v5339 = vpack.c.b16 %v4147, %v4143
        %v5340 = vpack.c.b16 %v4148, %v4144
        %v5341 = vpack.c.b16 %v4149, %v4145
        %v5342 = vpack.c.b16 %v4154, %v4150
        %v5343 = vpack.c.b16 %v4155, %v4151
        %v5344 = vpack.c.b16 %v4156, %v4152
        %v5345 = vpack.c.b16 %v4157, %v4153
        %v5346 = vpack.c.b16 %v4162, %v4158
        %v5347 = vpack.c.b16 %v4163, %v4159
        %v5348 = vpack.c.b16 %v4164, %v4160
        %v5349 = vpack.c.b16 %v4165, %v4161
        %v5350 = vpack.c.b16 %v4170, %v4166
        %v5351 = vpack.c.b16 %v4171, %v4167
        %v5352 = vpack.c.b16 %v4172, %v4168
        %v5353 = vpack.c.b16 %v4173, %v4169
        %v5354 = vpack.c.b16 %v4178, %v4174
        %v5355 = vpack.c.b16 %v4179, %v4175
        %v5356 = vpack.c.b16 %v4180, %v4176
        %v5357 = vpack.c.b16 %v4181, %v4177
        %v5358 = vpack.c.b16 %v4186, %v4182
        %v5359 = vpack.c.b16 %v4187, %v4183
        %v5360 = vpack.c.b16 %v4188, %v4184
        %v5361 = vpack.c.b16 %v4189, %v4185
        %v5362 = vpack.c.b16 %v4194, %v4190
        %v5363 = vpack.c.b16 %v4195, %v4191
        %v5364 = vpack.c.b16 %v4196, %v4192
        %v5365 = vpack.c.b16 %v4197, %v4193
        %v5366 = vpack.c.b16 %v4202, %v4198
        %v5367 = vpack.c.b16 %v4203, %v4199
        %v5368 = vpack.c.b16 %v4204, %v4200
        %v5369 = vpack.c.b16 %v4205, %v4201
        %v5370 = vpack.c.b16 %v4210, %v4206
        %v5371 = vpack.c.b16 %v4211, %v4207
        %v5372 = vpack.c.b16 %v4212, %v4208
        %v5373 = vpack.c.b16 %v4213, %v4209
        %v5374 = vpack.c.b16 %v4218, %v4214
        %v5375 = vpack.c.b16 %v4219, %v4215
        %v5376 = vpack.c.b16 %v4220, %v4216
        %v5377 = vpack.c.b16 %v4221, %v4217
        %v5378 = vpack.c.b16 %v4226, %v4222
        %v5379 = vpack.c.b16 %v4227, %v4223
        %v5380 = vpack.c.b16 %v4228, %v4224
        %v5381 = vpack.c.b16 %v4229, %v4225
        %v5382 = vpack.c.b16 %v4234, %v4230
        %v5383 = vpack.c.b16 %v4235, %v4231
        %v5384 = vpack.c.b16 %v4236, %v4232
        %v5385 = vpack.c.b16 %v4237, %v4233
        %v5386 = vpack.c.b16 %v4242, %v4238
        %v5387 = vpack.c.b16 %v4243, %v4239
        %v5388 = vpack.c.b16 %v4244, %v4240
        %v5389 = vpack.c.b16 %v4245, %v4241
        %v5390 = vpack.c.b16 %v4250, %v4246
        %v5391 = vpack.c.b16 %v4251, %v4247
        %v5392 = vpack.c.b16 %v4252, %v4248
        %v5393 = vpack.c.b16 %v4253, %v4249
        %v5394 = vpack.c.b16 %v4258, %v4254
        %v5395 = vpack.c.b16 %v4259, %v4255
        %v5396 = vpack.c.b16 %v4260, %v4256
        %v5397 = vpack.c.b16 %v4261, %v4257
        %v5398 = vpack.c.b16 %v4266, %v4262
        %v5399 = vpack.c.b16 %v4267, %v4263
        %v5400 = vpack.c.b16 %v4268, %v4264
        %v5401 = vpack.c.b16 %v4269, %v4265
        %v5402 = vpack.c.b16 %v4274, %v4270
        %v5403 = vpack.c.b16 %v4275, %v4271
        %v5404 = vpack.c.b16 %v4276, %v4272
        %v5405 = vpack.c.b16 %v4277, %v4273
        %v5406 = vpack.c.b16 %v4282, %v4278
        %v5407 = vpack.c.b16 %v4283, %v4279
        %v5408 = vpack.c.b16 %v4284, %v4280
        %v5409 = vpack.c.b16 %v4285, %v4281
        %v5410 = vpack.c.b16 %v4290, %v4286
        %v5411 = vpack.c.b16 %v4291, %v4287
        %v5412 = vpack.c.b16 %v4292, %v4288
        %v5413 = vpack.c.b16 %v4293, %v4289
        %v5414 = vpack.c.b16 %v4298, %v4294
        %v5415 = vpack.c.b16 %v4299, %v4295
        %v5416 = vpack.c.b16 %v4300, %v4296
        %v5417 = vpack.c.b16 %v4301, %v4297
        %v5418 = vpack.c.b16 %v4306, %v4302
        %v5419 = vpack.c.b16 %v4307, %v4303
        %v5420 = vpack.c.b16 %v4308, %v4304
        %v5421 = vpack.c.b16 %v4309, %v4305
        %v5422 = vpack.c.b16 %v4314, %v4310
        %v5423 = vpack.c.b16 %v4315, %v4311
        %v5424 = vpack.c.b16 %v4316, %v4312
        %v5425 = vpack.c.b16 %v4317, %v4313
        %v5426 = vpack.c.b16 %v4322, %v4318
        %v5427 = vpack.c.b16 %v4323, %v4319
        %v5428 = vpack.c.b16 %v4324, %v4320
        %v5429 = vpack.c.b16 %v4325, %v4321
        %v5430 = vpack.c.b16 %v4330, %v4326
        %v5431 = vpack.c.b16 %v4331, %v4327
        %v5432 = vpack.c.b16 %v4332, %v4328
        %v5433 = vpack.c.b16 %v4333, %v4329
        %v5434 = vpack.c.b16 %v4338, %v4334
        %v5435 = vpack.c.b16 %v4339, %v4335
        %v5436 = vpack.c.b16 %v4340, %v4336
        %v5437 = vpack.c.b16 %v4341, %v4337
        %v5438 = vpack.c.b16 %v4346, %v4342
        %v5439 = vpack.c.b16 %v4347, %v4343
        %v5440 = vpack.c.b16 %v4348, %v4344
        %v5441 = vpack.c.b16 %v4349, %v4345
        %v5442 = vpack.c.b16 %v4354, %v4350
        %v5443 = vpack.c.b16 %v4355, %v4351
        %v5444 = vpack.c.b16 %v4356, %v4352
        %v5445 = vpack.c.b16 %v4357, %v4353
        %v5446 = vpack.c.b16 %v4362, %v4358
        %v5447 = vpack.c.b16 %v4363, %v4359
        %v5448 = vpack.c.b16 %v4364, %v4360
        %v5449 = vpack.c.b16 %v4365, %v4361
        %v5450 = vpack.c.b16 %v4370, %v4366
        %v5451 = vpack.c.b16 %v4371, %v4367
        %v5452 = vpack.c.b16 %v4372, %v4368
        %v5453 = vpack.c.b16 %v4373, %v4369
        %v5454 = vpack.c.b16 %v4378, %v4374
        %v5455 = vpack.c.b16 %v4379, %v4375
        %v5456 = vpack.c.b16 %v4380, %v4376
        %v5457 = vpack.c.b16 %v4381, %v4377
        %v5458 = vpack.c.b16 %v4386, %v4382
        %v5459 = vpack.c.b16 %v4387, %v4383
        %v5460 = vpack.c.b16 %v4388, %v4384
        %v5461 = vpack.c.b16 %v4389, %v4385
        %v5462 = vpack.c.b16 %v4394, %v4390
        %v5463 = vpack.c.b16 %v4395, %v4391
        %v5464 = vpack.c.b16 %v4396, %v4392
        %v5465 = vpack.c.b16 %v4397, %v4393
        %v5466 = vpack.c.b16 %v4402, %v4398
        %v5467 = vpack.c.b16 %v4403, %v4399
        %v5468 = vpack.c.b16 %v4404, %v4400
        %v5469 = vpack.c.b16 %v4405, %v4401
        %v5470 = vpack.c.b16 %v4410, %v4406
        %v5471 = vpack.c.b16 %v4411, %v4407
        %v5472 = vpack.c.b16 %v4412, %v4408
        %v5473 = vpack.c.b16 %v4413, %v4409
        %v5474 = vpack.c.b16 %v4418, %v4414
        %v5475 = vpack.c.b16 %v4419, %v4415
        %v5476 = vpack.c.b16 %v4420, %v4416
        %v5477 = vpack.c.b16 %v4421, %v4417
        %v5478 = vpack.c.b16 %v4426, %v4422
        %v5479 = vpack.c.b16 %v4427, %v4423
        %v5480 = vpack.c.b16 %v4428, %v4424
        %v5481 = vpack.c.b16 %v4429, %v4425
        %v5482 = vpack.c.b16 %v4434, %v4430
        %v5483 = vpack.c.b16 %v4435, %v4431
        %v5484 = vpack.c.b16 %v4436, %v4432
        %v5485 = vpack.c.b16 %v4437, %v4433
        %v5486 = vpack.c.b16 %v4442, %v4438
        %v5487 = vpack.c.b16 %v4443, %v4439
        %v5488 = vpack.c.b16 %v4444, %v4440
        %v5489 = vpack.c.b16 %v4445, %v4441
        %v5490 = vpack.c.b16 %v4450, %v4446
        %v5491 = vpack.c.b16 %v4451, %v4447
        %v5492 = vpack.c.b16 %v4452, %v4448
        %v5493 = vpack.c.b16 %v4453, %v4449
        %v5494 = vpack.c.b16 %v4458, %v4454
        %v5495 = vpack.c.b16 %v4459, %v4455
        %v5496 = vpack.c.b16 %v4460, %v4456
        %v5497 = vpack.c.b16 %v4461, %v4457
        %v5498 = vpack.c.b16 %v4466, %v4462
        %v5499 = vpack.c.b16 %v4467, %v4463
        %v5500 = vpack.c.b16 %v4468, %v4464
        %v5501 = vpack.c.b16 %v4469, %v4465
        %v5502 = vpack.c.b16 %v4474, %v4470
        %v5503 = vpack.c.b16 %v4475, %v4471
        %v5504 = vpack.c.b16 %v4476, %v4472
        %v5505 = vpack.c.b16 %v4477, %v4473
        %v5506 = vpack.c.b16 %v4482, %v4478
        %v5507 = vpack.c.b16 %v4483, %v4479
        %v5508 = vpack.c.b16 %v4484, %v4480
        %v5509 = vpack.c.b16 %v4485, %v4481
        %6534 = vmatprep.subr.bf16.mxu0 %v4487
        %6535 = vmatpush1.bf16.msra.mxu0 %v4486
        %6536 = vmatprep.subr.bf16.mxu0 %v4491
        %6537 = vmatpush1.bf16.msra.mxu0 %v4490
        %6538 = vmatprep.subr.bf16.mxu0 %v4495
        %6539 = vmatpush1.bf16.msra.mxu0 %v4494
        %6540 = vmatprep.subr.bf16.mxu0 %v4499
        %6541 = vmatpush1.bf16.msra.mxu0 %v4498
        %6542 = vmatprep.subr.bf16.mxu0 %v4503
        %6543 = vmatpush1.bf16.msra.mxu0 %v4502
        %6544 = vmatprep.subr.bf16.mxu0 %v4507
        %6545 = vmatpush1.bf16.msra.mxu0 %v4506
        %6546 = vmatprep.subr.bf16.mxu0 %v4511
        %6547 = vmatpush1.bf16.msra.mxu0 %v4510
        %6548 = vmatprep.subr.bf16.mxu0 %v4515
        %6549 = vmatpush1.bf16.msra.mxu0 %v4514
        %6550 = vmatprep.subr.bf16.mxu0 %v4519
        %6551 = vmatpush1.bf16.msra.mxu0 %v4518
        %6552 = vmatprep.subr.bf16.mxu0 %v4523
        %6553 = vmatpush1.bf16.msra.mxu0 %v4522
        %6554 = vmatprep.subr.bf16.mxu0 %v4527
        %6555 = vmatpush1.bf16.msra.mxu0 %v4526
        %6556 = vmatprep.subr.bf16.mxu0 %v4531
        %6557 = vmatpush1.bf16.msra.mxu0 %v4530
        %6558 = vmatprep.subr.bf16.mxu0 %v4535
        %6559 = vmatpush1.bf16.msra.mxu0 %v4534
        %6560 = vmatprep.subr.bf16.mxu0 %v4539
        %6561 = vmatpush1.bf16.msra.mxu0 %v4538
        %6562 = vmatprep.subr.bf16.mxu0 %v4543
        %6563 = vmatpush1.bf16.msra.mxu0 %v4542
        %6564 = vmatprep.subr.bf16.mxu0 %v4547
        %6565 = vmatpush1.bf16.msra.mxu0 %v4546
        %6566 = vmatprep.mubr.bf16.mxu0 %v1351
        %6567 = vmatmul.mubr.bf16.gmra.mrb[0].mxu0 %v1350
        %v6568 = vpop.f32.mrb[0].mxu0
        %v6569 = vadd.f32 %v1285, %v6568
        %v6570 = vpop.f32.mrb[0].mxu0
        %v6571 = vadd.f32 %v1289, %v6570
        %v6572 = vpop.f32.mrb[0].mxu0
        %v6573 = vpop.f32.mrb[0].mxu0
        %6574 = vdwg.mxu0
        %6575 = vmatprep.subr.bf16.mxu0 %v4551
        %6576 = vmatpush1.bf16.msra.mxu0 %v4550
        %6577 = vmatprep.subr.bf16.mxu0 %v4555
        %6578 = vmatpush1.bf16.msra.mxu0 %v4554
        %6579 = vmatprep.subr.bf16.mxu0 %v4559
        %6580 = vmatpush1.bf16.msra.mxu0 %v4558
        %6581 = vmatprep.subr.bf16.mxu0 %v4563
        %6582 = vmatpush1.bf16.msra.mxu0 %v4562
        %6583 = vmatprep.subr.bf16.mxu0 %v4567
        %6584 = vmatpush1.bf16.msra.mxu0 %v4566
        %6585 = vmatprep.subr.bf16.mxu0 %v4571
        %6586 = vmatpush1.bf16.msra.mxu0 %v4570
        %6587 = vmatprep.subr.bf16.mxu0 %v4575
        %6588 = vmatpush1.bf16.msra.mxu0 %v4574
        %6589 = vmatprep.subr.bf16.mxu0 %v4579
        %6590 = vmatpush1.bf16.msra.mxu0 %v4578
        %6591 = vmatprep.subr.bf16.mxu0 %v4583
        %6592 = vmatpush1.bf16.msra.mxu0 %v4582
        %6593 = vmatprep.subr.bf16.mxu0 %v4587
        %6594 = vmatpush1.bf16.msra.mxu0 %v4586
        %6595 = vmatprep.subr.bf16.mxu0 %v4591
        %6596 = vmatpush1.bf16.msra.mxu0 %v4590
        %6597 = vmatprep.subr.bf16.mxu0 %v4595
        %6598 = vmatpush1.bf16.msra.mxu0 %v4594
        %6599 = vmatprep.subr.bf16.mxu0 %v4599
        %6600 = vmatpush1.bf16.msra.mxu0 %v4598
        %6601 = vmatprep.subr.bf16.mxu0 %v4603
        %6602 = vmatpush1.bf16.msra.mxu0 %v4602
        %6603 = vmatprep.subr.bf16.mxu0 %v4607
        %6604 = vmatpush1.bf16.msra.mxu0 %v4606
        %6605 = vmatprep.subr.bf16.mxu0 %v4611
        %6606 = vmatpush1.bf16.msra.mxu0 %v4610
        %6607 = vmatprep.mubr.bf16.mxu0 %v1353
        %6608 = vmatmul.mubr.bf16.gmra.mrb[0].mxu0 %v1352
        %v6609 = vpop.f32.mrb[0].mxu0
        %v6610 = vadd.f32 %v6569, %v6609
        %v6611 = vpop.f32.mrb[0].mxu0
        %v6612 = vadd.f32 %v6571, %v6611
        %v6613 = vpop.f32.mrb[0].mxu0
        %v6614 = vpop.f32.mrb[0].mxu0
        %6615 = vdwg.mxu0
        %6616 = vmatprep.subr.bf16.mxu0 %v4615
        %6617 = vmatpush1.bf16.msra.mxu0 %v4614
        %6618 = vmatprep.subr.bf16.mxu0 %v4619
        %6619 = vmatpush1.bf16.msra.mxu0 %v4618
        %6620 = vmatprep.subr.bf16.mxu0 %v4623
        %6621 = vmatpush1.bf16.msra.mxu0 %v4622
        %6622 = vmatprep.subr.bf16.mxu0 %v4627
        %6623 = vmatpush1.bf16.msra.mxu0 %v4626
        %6624 = vmatprep.subr.bf16.mxu0 %v4631
        %6625 = vmatpush1.bf16.msra.mxu0 %v4630
        %6626 = vmatprep.subr.bf16.mxu0 %v4635
        %6627 = vmatpush1.bf16.msra.mxu0 %v4634
        %6628 = vmatprep.subr.bf16.mxu0 %v4639
        %6629 = vmatpush1.bf16.msra.mxu0 %v4638
        %6630 = vmatprep.subr.bf16.mxu0 %v4643
        %6631 = vmatpush1.bf16.msra.mxu0 %v4642
        %6632 = vmatprep.subr.bf16.mxu0 %v4647
        %6633 = vmatpush1.bf16.msra.mxu0 %v4646
        %6634 = vmatprep.subr.bf16.mxu0 %v4651
        %6635 = vmatpush1.bf16.msra.mxu0 %v4650
        %6636 = vmatprep.subr.bf16.mxu0 %v4655
        %6637 = vmatpush1.bf16.msra.mxu0 %v4654
        %6638 = vmatprep.subr.bf16.mxu0 %v4659
        %6639 = vmatpush1.bf16.msra.mxu0 %v4658
        %6640 = vmatprep.subr.bf16.mxu0 %v4663
        %6641 = vmatpush1.bf16.msra.mxu0 %v4662
        %6642 = vmatprep.subr.bf16.mxu0 %v4667
        %6643 = vmatpush1.bf16.msra.mxu0 %v4666
        %6644 = vmatprep.subr.bf16.mxu0 %v4671
        %6645 = vmatpush1.bf16.msra.mxu0 %v4670
        %6646 = vmatprep.subr.bf16.mxu0 %v4675
        %6647 = vmatpush1.bf16.msra.mxu0 %v4674
        %6648 = vmatprep.mubr.bf16.mxu0 %v1355
        %6649 = vmatmul.mubr.bf16.gmra.mrb[0].mxu0 %v1354
        %v6650 = vpop.f32.mrb[0].mxu0
        %v6651 = vadd.f32 %v6610, %v6650
        %v6652 = vpop.f32.mrb[0].mxu0
        %v6653 = vadd.f32 %v6612, %v6652
        %v6654 = vpop.f32.mrb[0].mxu0
        %v6655 = vpop.f32.mrb[0].mxu0
        %6656 = vdwg.mxu0
        %6657 = vmatprep.subr.bf16.mxu0 %v4679
        %6658 = vmatpush1.bf16.msra.mxu0 %v4678
        %6659 = vmatprep.subr.bf16.mxu0 %v4683
        %6660 = vmatpush1.bf16.msra.mxu0 %v4682
        %6661 = vmatprep.subr.bf16.mxu0 %v4687
        %6662 = vmatpush1.bf16.msra.mxu0 %v4686
        %6663 = vmatprep.subr.bf16.mxu0 %v4691
        %6664 = vmatpush1.bf16.msra.mxu0 %v4690
        %6665 = vmatprep.subr.bf16.mxu0 %v4695
        %6666 = vmatpush1.bf16.msra.mxu0 %v4694
        %6667 = vmatprep.subr.bf16.mxu0 %v4699
        %6668 = vmatpush1.bf16.msra.mxu0 %v4698
        %6669 = vmatprep.subr.bf16.mxu0 %v4703
        %6670 = vmatpush1.bf16.msra.mxu0 %v4702
        %6671 = vmatprep.subr.bf16.mxu0 %v4707
        %6672 = vmatpush1.bf16.msra.mxu0 %v4706
        %6673 = vmatprep.subr.bf16.mxu0 %v4711
        %6674 = vmatpush1.bf16.msra.mxu0 %v4710
        %6675 = vmatprep.subr.bf16.mxu0 %v4715
        %6676 = vmatpush1.bf16.msra.mxu0 %v4714
        %6677 = vmatprep.subr.bf16.mxu0 %v4719
        %6678 = vmatpush1.bf16.msra.mxu0 %v4718
        %6679 = vmatprep.subr.bf16.mxu0 %v4723
        %6680 = vmatpush1.bf16.msra.mxu0 %v4722
        %6681 = vmatprep.subr.bf16.mxu0 %v4727
        %6682 = vmatpush1.bf16.msra.mxu0 %v4726
        %6683 = vmatprep.subr.bf16.mxu0 %v4731
        %6684 = vmatpush1.bf16.msra.mxu0 %v4730
        %6685 = vmatprep.subr.bf16.mxu0 %v4735
        %6686 = vmatpush1.bf16.msra.mxu0 %v4734
        %6687 = vmatprep.subr.bf16.mxu0 %v4739
        %6688 = vmatpush1.bf16.msra.mxu0 %v4738
        %6689 = vmatprep.mubr.bf16.mxu0 %v1357
        %6690 = vmatmul.mubr.bf16.gmra.mrb[0].mxu0 %v1356
        %v6691 = vpop.f32.mrb[0].mxu0
        %v6692 = vadd.f32 %v6651, %v6691
        %v6693 = vpop.f32.mrb[0].mxu0
        %v6694 = vadd.f32 %v6653, %v6693
        %v6695 = vpop.f32.mrb[0].mxu0
        %v6696 = vpop.f32.mrb[0].mxu0
        %6697 = vdwg.mxu0
        %6698 = vmatprep.subr.bf16.mxu0 %v4743
        %6699 = vmatpush1.bf16.msra.mxu0 %v4742
        %6700 = vmatprep.subr.bf16.mxu0 %v4747
        %6701 = vmatpush1.bf16.msra.mxu0 %v4746
        %6702 = vmatprep.subr.bf16.mxu0 %v4751
        %6703 = vmatpush1.bf16.msra.mxu0 %v4750
        %6704 = vmatprep.subr.bf16.mxu0 %v4755
        %6705 = vmatpush1.bf16.msra.mxu0 %v4754
        %6706 = vmatprep.subr.bf16.mxu0 %v4759
        %6707 = vmatpush1.bf16.msra.mxu0 %v4758
        %6708 = vmatprep.subr.bf16.mxu0 %v4763
        %6709 = vmatpush1.bf16.msra.mxu0 %v4762
        %6710 = vmatprep.subr.bf16.mxu0 %v4767
        %6711 = vmatpush1.bf16.msra.mxu0 %v4766
        %6712 = vmatprep.subr.bf16.mxu0 %v4771
        %6713 = vmatpush1.bf16.msra.mxu0 %v4770
        %6714 = vmatprep.subr.bf16.mxu0 %v4775
        %6715 = vmatpush1.bf16.msra.mxu0 %v4774
        %6716 = vmatprep.subr.bf16.mxu0 %v4779
        %6717 = vmatpush1.bf16.msra.mxu0 %v4778
        %6718 = vmatprep.subr.bf16.mxu0 %v4783
        %6719 = vmatpush1.bf16.msra.mxu0 %v4782
        %6720 = vmatprep.subr.bf16.mxu0 %v4787
        %6721 = vmatpush1.bf16.msra.mxu0 %v4786
        %6722 = vmatprep.subr.bf16.mxu0 %v4791
        %6723 = vmatpush1.bf16.msra.mxu0 %v4790
        %6724 = vmatprep.subr.bf16.mxu0 %v4795
        %6725 = vmatpush1.bf16.msra.mxu0 %v4794
        %6726 = vmatprep.subr.bf16.mxu0 %v4799
        %6727 = vmatpush1.bf16.msra.mxu0 %v4798
        %6728 = vmatprep.subr.bf16.mxu0 %v4803
        %6729 = vmatpush1.bf16.msra.mxu0 %v4802
        %6730 = vmatprep.mubr.bf16.mxu0 %v1359
        %6731 = vmatmul.mubr.bf16.gmra.mrb[0].mxu0 %v1358
        %v6732 = vpop.f32.mrb[0].mxu0
        %v6733 = vadd.f32 %v6692, %v6732
        %v6734 = vpop.f32.mrb[0].mxu0
        %v6735 = vadd.f32 %v6694, %v6734
        %v6736 = vpop.f32.mrb[0].mxu0
        %v6737 = vpop.f32.mrb[0].mxu0
        %6738 = vdwg.mxu0
        %6739 = vmatprep.subr.bf16.mxu0 %v4807
        %6740 = vmatpush1.bf16.msra.mxu0 %v4806
        %6741 = vmatprep.subr.bf16.mxu0 %v4811
        %6742 = vmatpush1.bf16.msra.mxu0 %v4810
        %6743 = vmatprep.subr.bf16.mxu0 %v4815
        %6744 = vmatpush1.bf16.msra.mxu0 %v4814
        %6745 = vmatprep.subr.bf16.mxu0 %v4819
        %6746 = vmatpush1.bf16.msra.mxu0 %v4818
        %6747 = vmatprep.subr.bf16.mxu0 %v4823
        %6748 = vmatpush1.bf16.msra.mxu0 %v4822
        %6749 = vmatprep.subr.bf16.mxu0 %v4827
        %6750 = vmatpush1.bf16.msra.mxu0 %v4826
        %6751 = vmatprep.subr.bf16.mxu0 %v4831
        %6752 = vmatpush1.bf16.msra.mxu0 %v4830
        %6753 = vmatprep.subr.bf16.mxu0 %v4835
        %6754 = vmatpush1.bf16.msra.mxu0 %v4834
        %6755 = vmatprep.subr.bf16.mxu0 %v4839
        %6756 = vmatpush1.bf16.msra.mxu0 %v4838
        %6757 = vmatprep.subr.bf16.mxu0 %v4843
        %6758 = vmatpush1.bf16.msra.mxu0 %v4842
        %6759 = vmatprep.subr.bf16.mxu0 %v4847
        %6760 = vmatpush1.bf16.msra.mxu0 %v4846
        %6761 = vmatprep.subr.bf16.mxu0 %v4851
        %6762 = vmatpush1.bf16.msra.mxu0 %v4850
        %6763 = vmatprep.subr.bf16.mxu0 %v4855
        %6764 = vmatpush1.bf16.msra.mxu0 %v4854
        %6765 = vmatprep.subr.bf16.mxu0 %v4859
        %6766 = vmatpush1.bf16.msra.mxu0 %v4858
        %6767 = vmatprep.subr.bf16.mxu0 %v4863
        %6768 = vmatpush1.bf16.msra.mxu0 %v4862
        %6769 = vmatprep.subr.bf16.mxu0 %v4867
        %6770 = vmatpush1.bf16.msra.mxu0 %v4866
        %6771 = vmatprep.mubr.bf16.mxu0 %v1361
        %6772 = vmatmul.mubr.bf16.gmra.mrb[0].mxu0 %v1360
        %v6773 = vpop.f32.mrb[0].mxu0
        %v6774 = vadd.f32 %v6733, %v6773
        %v6775 = vpop.f32.mrb[0].mxu0
        %v6776 = vadd.f32 %v6735, %v6775
        %v6777 = vpop.f32.mrb[0].mxu0
        %v6778 = vpop.f32.mrb[0].mxu0
        %6779 = vdwg.mxu0
        %6780 = vmatprep.subr.bf16.mxu0 %v4871
        %6781 = vmatpush1.bf16.msra.mxu0 %v4870
        %6782 = vmatprep.subr.bf16.mxu0 %v4875
        %6783 = vmatpush1.bf16.msra.mxu0 %v4874
        %6784 = vmatprep.subr.bf16.mxu0 %v4879
        %6785 = vmatpush1.bf16.msra.mxu0 %v4878
        %6786 = vmatprep.subr.bf16.mxu0 %v4883
        %6787 = vmatpush1.bf16.msra.mxu0 %v4882
        %6788 = vmatprep.subr.bf16.mxu0 %v4887
        %6789 = vmatpush1.bf16.msra.mxu0 %v4886
        %6790 = vmatprep.subr.bf16.mxu0 %v4891
        %6791 = vmatpush1.bf16.msra.mxu0 %v4890
        %6792 = vmatprep.subr.bf16.mxu0 %v4895
        %6793 = vmatpush1.bf16.msra.mxu0 %v4894
        %6794 = vmatprep.subr.bf16.mxu0 %v4899
        %6795 = vmatpush1.bf16.msra.mxu0 %v4898
        %6796 = vmatprep.subr.bf16.mxu0 %v4903
        %6797 = vmatpush1.bf16.msra.mxu0 %v4902
        %6798 = vmatprep.subr.bf16.mxu0 %v4907
        %6799 = vmatpush1.bf16.msra.mxu0 %v4906
        %6800 = vmatprep.subr.bf16.mxu0 %v4911
        %6801 = vmatpush1.bf16.msra.mxu0 %v4910
        %6802 = vmatprep.subr.bf16.mxu0 %v4915
        %6803 = vmatpush1.bf16.msra.mxu0 %v4914
        %6804 = vmatprep.subr.bf16.mxu0 %v4919
        %6805 = vmatpush1.bf16.msra.mxu0 %v4918
        %6806 = vmatprep.subr.bf16.mxu0 %v4923
        %6807 = vmatpush1.bf16.msra.mxu0 %v4922
        %6808 = vmatprep.subr.bf16.mxu0 %v4927
        %6809 = vmatpush1.bf16.msra.mxu0 %v4926
        %6810 = vmatprep.subr.bf16.mxu0 %v4931
        %6811 = vmatpush1.bf16.msra.mxu0 %v4930
        %6812 = vmatprep.mubr.bf16.mxu0 %v1363
        %6813 = vmatmul.mubr.bf16.gmra.mrb[0].mxu0 %v1362
        %v6814 = vpop.f32.mrb[0].mxu0
        %v6815 = vadd.f32 %v6774, %v6814
        %v6816 = vpop.f32.mrb[0].mxu0
        %v6817 = vadd.f32 %v6776, %v6816
        %v6818 = vpop.f32.mrb[0].mxu0
        %v6819 = vpop.f32.mrb[0].mxu0
        %6820 = vdwg.mxu0
        %6821 = vmatprep.subr.bf16.mxu0 %v4935
        %6822 = vmatpush1.bf16.msra.mxu0 %v4934
        %6823 = vmatprep.subr.bf16.mxu0 %v4939
        %6824 = vmatpush1.bf16.msra.mxu0 %v4938
        %6825 = vmatprep.subr.bf16.mxu0 %v4943
        %6826 = vmatpush1.bf16.msra.mxu0 %v4942
        %6827 = vmatprep.subr.bf16.mxu0 %v4947
        %6828 = vmatpush1.bf16.msra.mxu0 %v4946
        %6829 = vmatprep.subr.bf16.mxu0 %v4951
        %6830 = vmatpush1.bf16.msra.mxu0 %v4950
        %6831 = vmatprep.subr.bf16.mxu0 %v4955
        %6832 = vmatpush1.bf16.msra.mxu0 %v4954
        %6833 = vmatprep.subr.bf16.mxu0 %v4959
        %6834 = vmatpush1.bf16.msra.mxu0 %v4958
        %6835 = vmatprep.subr.bf16.mxu0 %v4963
        %6836 = vmatpush1.bf16.msra.mxu0 %v4962
        %6837 = vmatprep.subr.bf16.mxu0 %v4967
        %6838 = vmatpush1.bf16.msra.mxu0 %v4966
        %6839 = vmatprep.subr.bf16.mxu0 %v4971
        %6840 = vmatpush1.bf16.msra.mxu0 %v4970
        %6841 = vmatprep.subr.bf16.mxu0 %v4975
        %6842 = vmatpush1.bf16.msra.mxu0 %v4974
        %6843 = vmatprep.subr.bf16.mxu0 %v4979
        %6844 = vmatpush1.bf16.msra.mxu0 %v4978
        %6845 = vmatprep.subr.bf16.mxu0 %v4983
        %6846 = vmatpush1.bf16.msra.mxu0 %v4982
        %6847 = vmatprep.subr.bf16.mxu0 %v4987
        %6848 = vmatpush1.bf16.msra.mxu0 %v4986
        %6849 = vmatprep.subr.bf16.mxu0 %v4991
        %6850 = vmatpush1.bf16.msra.mxu0 %v4990
        %6851 = vmatprep.subr.bf16.mxu0 %v4995
        %6852 = vmatpush1.bf16.msra.mxu0 %v4994
        %6853 = vmatprep.mubr.bf16.mxu0 %v1365
        %6854 = vmatmul.mubr.bf16.gmra.mrb[0].mxu0 %v1364
        %v6855 = vpop.f32.mrb[0].mxu0
        %v6856 = vadd.f32 %v6815, %v6855
        %v6857 = vpop.f32.mrb[0].mxu0
        %v6858 = vadd.f32 %v6817, %v6857
        %v6859 = vpop.f32.mrb[0].mxu0
        %v6860 = vpop.f32.mrb[0].mxu0
        %6861 = vdwg.mxu0
        %6862 = vmatprep.subr.bf16.mxu0 %v4999
        %6863 = vmatpush1.bf16.msra.mxu0 %v4998
        %6864 = vmatprep.subr.bf16.mxu0 %v5003
        %6865 = vmatpush1.bf16.msra.mxu0 %v5002
        %6866 = vmatprep.subr.bf16.mxu0 %v5007
        %6867 = vmatpush1.bf16.msra.mxu0 %v5006
        %6868 = vmatprep.subr.bf16.mxu0 %v5011
        %6869 = vmatpush1.bf16.msra.mxu0 %v5010
        %6870 = vmatprep.subr.bf16.mxu0 %v5015
        %6871 = vmatpush1.bf16.msra.mxu0 %v5014
        %6872 = vmatprep.subr.bf16.mxu0 %v5019
        %6873 = vmatpush1.bf16.msra.mxu0 %v5018
        %6874 = vmatprep.subr.bf16.mxu0 %v5023
        %6875 = vmatpush1.bf16.msra.mxu0 %v5022
        %6876 = vmatprep.subr.bf16.mxu0 %v5027
        %6877 = vmatpush1.bf16.msra.mxu0 %v5026
        %6878 = vmatprep.subr.bf16.mxu0 %v5031
        %6879 = vmatpush1.bf16.msra.mxu0 %v5030
        %6880 = vmatprep.subr.bf16.mxu0 %v5035
        %6881 = vmatpush1.bf16.msra.mxu0 %v5034
        %6882 = vmatprep.subr.bf16.mxu0 %v5039
        %6883 = vmatpush1.bf16.msra.mxu0 %v5038
        %6884 = vmatprep.subr.bf16.mxu0 %v5043
        %6885 = vmatpush1.bf16.msra.mxu0 %v5042
        %6886 = vmatprep.subr.bf16.mxu0 %v5047
        %6887 = vmatpush1.bf16.msra.mxu0 %v5046
        %6888 = vmatprep.subr.bf16.mxu0 %v5051
        %6889 = vmatpush1.bf16.msra.mxu0 %v5050
        %6890 = vmatprep.subr.bf16.mxu0 %v5055
        %6891 = vmatpush1.bf16.msra.mxu0 %v5054
        %6892 = vmatprep.subr.bf16.mxu0 %v5059
        %6893 = vmatpush1.bf16.msra.mxu0 %v5058
        %6894 = vmatprep.mubr.bf16.mxu0 %v1367
        %6895 = vmatmul.mubr.bf16.gmra.mrb[0].mxu0 %v1366
        %v6896 = vpop.f32.mrb[0].mxu0
        %v6897 = vadd.f32 %v6856, %v6896
        %v6898 = vpop.f32.mrb[0].mxu0
        %v6899 = vadd.f32 %v6858, %v6898
        %v6900 = vpop.f32.mrb[0].mxu0
        %v6901 = vpop.f32.mrb[0].mxu0
        %6902 = vdwg.mxu0
        %6903 = vmatprep.subr.bf16.mxu0 %v5063
        %6904 = vmatpush1.bf16.msra.mxu0 %v5062
        %6905 = vmatprep.subr.bf16.mxu0 %v5067
        %6906 = vmatpush1.bf16.msra.mxu0 %v5066
        %6907 = vmatprep.subr.bf16.mxu0 %v5071
        %6908 = vmatpush1.bf16.msra.mxu0 %v5070
        %6909 = vmatprep.subr.bf16.mxu0 %v5075
        %6910 = vmatpush1.bf16.msra.mxu0 %v5074
        %6911 = vmatprep.subr.bf16.mxu0 %v5079
        %6912 = vmatpush1.bf16.msra.mxu0 %v5078
        %6913 = vmatprep.subr.bf16.mxu0 %v5083
        %6914 = vmatpush1.bf16.msra.mxu0 %v5082
        %6915 = vmatprep.subr.bf16.mxu0 %v5087
        %6916 = vmatpush1.bf16.msra.mxu0 %v5086
        %6917 = vmatprep.subr.bf16.mxu0 %v5091
        %6918 = vmatpush1.bf16.msra.mxu0 %v5090
        %6919 = vmatprep.subr.bf16.mxu0 %v5095
        %6920 = vmatpush1.bf16.msra.mxu0 %v5094
        %6921 = vmatprep.subr.bf16.mxu0 %v5099
        %6922 = vmatpush1.bf16.msra.mxu0 %v5098
        %6923 = vmatprep.subr.bf16.mxu0 %v5103
        %6924 = vmatpush1.bf16.msra.mxu0 %v5102
        %6925 = vmatprep.subr.bf16.mxu0 %v5107
        %6926 = vmatpush1.bf16.msra.mxu0 %v5106
        %6927 = vmatprep.subr.bf16.mxu0 %v5111
        %6928 = vmatpush1.bf16.msra.mxu0 %v5110
        %6929 = vmatprep.subr.bf16.mxu0 %v5115
        %6930 = vmatpush1.bf16.msra.mxu0 %v5114
        %6931 = vmatprep.subr.bf16.mxu0 %v5119
        %6932 = vmatpush1.bf16.msra.mxu0 %v5118
        %6933 = vmatprep.subr.bf16.mxu0 %v5123
        %6934 = vmatpush1.bf16.msra.mxu0 %v5122
        %6935 = vmatprep.mubr.bf16.mxu0 %v1369
        %6936 = vmatmul.mubr.bf16.gmra.mrb[0].mxu0 %v1368
        %v6937 = vpop.f32.mrb[0].mxu0
        %v6938 = vadd.f32 %v6897, %v6937
        %v6939 = vpop.f32.mrb[0].mxu0
        %v6940 = vadd.f32 %v6899, %v6939
        %v6941 = vpop.f32.mrb[0].mxu0
        %v6942 = vpop.f32.mrb[0].mxu0
        %6943 = vdwg.mxu0
        %6944 = vmatprep.subr.bf16.mxu0 %v5127
        %6945 = vmatpush1.bf16.msra.mxu0 %v5126
        %6946 = vmatprep.subr.bf16.mxu0 %v5131
        %6947 = vmatpush1.bf16.msra.mxu0 %v5130
        %6948 = vmatprep.subr.bf16.mxu0 %v5135
        %6949 = vmatpush1.bf16.msra.mxu0 %v5134
        %6950 = vmatprep.subr.bf16.mxu0 %v5139
        %6951 = vmatpush1.bf16.msra.mxu0 %v5138
        %6952 = vmatprep.subr.bf16.mxu0 %v5143
        %6953 = vmatpush1.bf16.msra.mxu0 %v5142
        %6954 = vmatprep.subr.bf16.mxu0 %v5147
        %6955 = vmatpush1.bf16.msra.mxu0 %v5146
        %6956 = vmatprep.subr.bf16.mxu0 %v5151
        %6957 = vmatpush1.bf16.msra.mxu0 %v5150
        %6958 = vmatprep.subr.bf16.mxu0 %v5155
        %6959 = vmatpush1.bf16.msra.mxu0 %v5154
        %6960 = vmatprep.subr.bf16.mxu0 %v5159
        %6961 = vmatpush1.bf16.msra.mxu0 %v5158
        %6962 = vmatprep.subr.bf16.mxu0 %v5163
        %6963 = vmatpush1.bf16.msra.mxu0 %v5162
        %6964 = vmatprep.subr.bf16.mxu0 %v5167
        %6965 = vmatpush1.bf16.msra.mxu0 %v5166
        %6966 = vmatprep.subr.bf16.mxu0 %v5171
        %6967 = vmatpush1.bf16.msra.mxu0 %v5170
        %6968 = vmatprep.subr.bf16.mxu0 %v5175
        %6969 = vmatpush1.bf16.msra.mxu0 %v5174
        %6970 = vmatprep.subr.bf16.mxu0 %v5179
        %6971 = vmatpush1.bf16.msra.mxu0 %v5178
        %6972 = vmatprep.subr.bf16.mxu0 %v5183
        %6973 = vmatpush1.bf16.msra.mxu0 %v5182
        %6974 = vmatprep.subr.bf16.mxu0 %v5187
        %6975 = vmatpush1.bf16.msra.mxu0 %v5186
        %6976 = vmatprep.mubr.bf16.mxu0 %v1371
        %6977 = vmatmul.mubr.bf16.gmra.mrb[0].mxu0 %v1370
        %v6978 = vpop.f32.mrb[0].mxu0
        %v6979 = vadd.f32 %v6938, %v6978
        %v6980 = vpop.f32.mrb[0].mxu0
        %v6981 = vadd.f32 %v6940, %v6980
        %v6982 = vpop.f32.mrb[0].mxu0
        %v6983 = vpop.f32.mrb[0].mxu0
        %6984 = vdwg.mxu0
        %6985 = vmatprep.subr.bf16.mxu0 %v5191
        %6986 = vmatpush1.bf16.msra.mxu0 %v5190
        %6987 = vmatprep.subr.bf16.mxu0 %v5195
        %6988 = vmatpush1.bf16.msra.mxu0 %v5194
        %6989 = vmatprep.subr.bf16.mxu0 %v5199
        %6990 = vmatpush1.bf16.msra.mxu0 %v5198
        %6991 = vmatprep.subr.bf16.mxu0 %v5203
        %6992 = vmatpush1.bf16.msra.mxu0 %v5202
        %6993 = vmatprep.subr.bf16.mxu0 %v5207
        %6994 = vmatpush1.bf16.msra.mxu0 %v5206
        %6995 = vmatprep.subr.bf16.mxu0 %v5211
        %6996 = vmatpush1.bf16.msra.mxu0 %v5210
        %6997 = vmatprep.subr.bf16.mxu0 %v5215
        %6998 = vmatpush1.bf16.msra.mxu0 %v5214
        %6999 = vmatprep.subr.bf16.mxu0 %v5219
        %7000 = vmatpush1.bf16.msra.mxu0 %v5218
        %7001 = vmatprep.subr.bf16.mxu0 %v5223
        %7002 = vmatpush1.bf16.msra.mxu0 %v5222
        %7003 = vmatprep.subr.bf16.mxu0 %v5227
        %7004 = vmatpush1.bf16.msra.mxu0 %v5226
        %7005 = vmatprep.subr.bf16.mxu0 %v5231
        %7006 = vmatpush1.bf16.msra.mxu0 %v5230
        %7007 = vmatprep.subr.bf16.mxu0 %v5235
        %7008 = vmatpush1.bf16.msra.mxu0 %v5234
        %7009 = vmatprep.subr.bf16.mxu0 %v5239
        %7010 = vmatpush1.bf16.msra.mxu0 %v5238
        %7011 = vmatprep.subr.bf16.mxu0 %v5243
        %7012 = vmatpush1.bf16.msra.mxu0 %v5242
        %7013 = vmatprep.subr.bf16.mxu0 %v5247
        %7014 = vmatpush1.bf16.msra.mxu0 %v5246
        %7015 = vmatprep.subr.bf16.mxu0 %v5251
        %7016 = vmatpush1.bf16.msra.mxu0 %v5250
        %7017 = vmatprep.mubr.bf16.mxu0 %v1373
        %7018 = vmatmul.mubr.bf16.gmra.mrb[0].mxu0 %v1372
        %v7019 = vpop.f32.mrb[0].mxu0
        %v7020 = vadd.f32 %v6979, %v7019
        %v7021 = vpop.f32.mrb[0].mxu0
        %v7022 = vadd.f32 %v6981, %v7021
        %v7023 = vpop.f32.mrb[0].mxu0
        %v7024 = vpop.f32.mrb[0].mxu0
        %7025 = vdwg.mxu0
        %7026 = vmatprep.subr.bf16.mxu0 %v5255
        %7027 = vmatpush1.bf16.msra.mxu0 %v5254
        %7028 = vmatprep.subr.bf16.mxu0 %v5259
        %7029 = vmatpush1.bf16.msra.mxu0 %v5258
        %7030 = vmatprep.subr.bf16.mxu0 %v5263
        %7031 = vmatpush1.bf16.msra.mxu0 %v5262
        %7032 = vmatprep.subr.bf16.mxu0 %v5267
        %7033 = vmatpush1.bf16.msra.mxu0 %v5266
        %7034 = vmatprep.subr.bf16.mxu0 %v5271
        %7035 = vmatpush1.bf16.msra.mxu0 %v5270
        %7036 = vmatprep.subr.bf16.mxu0 %v5275
        %7037 = vmatpush1.bf16.msra.mxu0 %v5274
        %7038 = vmatprep.subr.bf16.mxu0 %v5279
        %7039 = vmatpush1.bf16.msra.mxu0 %v5278
        %7040 = vmatprep.subr.bf16.mxu0 %v5283
        %7041 = vmatpush1.bf16.msra.mxu0 %v5282
        %7042 = vmatprep.subr.bf16.mxu0 %v5287
        %7043 = vmatpush1.bf16.msra.mxu0 %v5286
        %7044 = vmatprep.subr.bf16.mxu0 %v5291
        %7045 = vmatpush1.bf16.msra.mxu0 %v5290
        %7046 = vmatprep.subr.bf16.mxu0 %v5295
        %7047 = vmatpush1.bf16.msra.mxu0 %v5294
        %7048 = vmatprep.subr.bf16.mxu0 %v5299
        %7049 = vmatpush1.bf16.msra.mxu0 %v5298
        %7050 = vmatprep.subr.bf16.mxu0 %v5303
        %7051 = vmatpush1.bf16.msra.mxu0 %v5302
        %7052 = vmatprep.subr.bf16.mxu0 %v5307
        %7053 = vmatpush1.bf16.msra.mxu0 %v5306
        %7054 = vmatprep.subr.bf16.mxu0 %v5311
        %7055 = vmatpush1.bf16.msra.mxu0 %v5310
        %7056 = vmatprep.subr.bf16.mxu0 %v5315
        %7057 = vmatpush1.bf16.msra.mxu0 %v5314
        %7058 = vmatprep.mubr.bf16.mxu0 %v1375
        %7059 = vmatmul.mubr.bf16.gmra.mrb[0].mxu0 %v1374
        %v7060 = vpop.f32.mrb[0].mxu0
        %v7061 = vadd.f32 %v7020, %v7060
        %v7062 = vpop.f32.mrb[0].mxu0
        %v7063 = vadd.f32 %v7022, %v7062
        %v7064 = vpop.f32.mrb[0].mxu0
        %v7065 = vpop.f32.mrb[0].mxu0
        %7066 = vdwg.mxu0
        %7067 = vmatprep.subr.bf16.mxu0 %v5319
        %7068 = vmatpush1.bf16.msra.mxu0 %v5318
        %7069 = vmatprep.subr.bf16.mxu0 %v5323
        %7070 = vmatpush1.bf16.msra.mxu0 %v5322
        %7071 = vmatprep.subr.bf16.mxu0 %v5327
        %7072 = vmatpush1.bf16.msra.mxu0 %v5326
        %7073 = vmatprep.subr.bf16.mxu0 %v5331
        %7074 = vmatpush1.bf16.msra.mxu0 %v5330
        %7075 = vmatprep.subr.bf16.mxu0 %v5335
        %7076 = vmatpush1.bf16.msra.mxu0 %v5334
        %7077 = vmatprep.subr.bf16.mxu0 %v5339
        %7078 = vmatpush1.bf16.msra.mxu0 %v5338
        %7079 = vmatprep.subr.bf16.mxu0 %v5343
        %7080 = vmatpush1.bf16.msra.mxu0 %v5342
        %7081 = vmatprep.subr.bf16.mxu0 %v5347
        %7082 = vmatpush1.bf16.msra.mxu0 %v5346
        %7083 = vmatprep.subr.bf16.mxu0 %v5351
        %7084 = vmatpush1.bf16.msra.mxu0 %v5350
        %7085 = vmatprep.subr.bf16.mxu0 %v5355
        %7086 = vmatpush1.bf16.msra.mxu0 %v5354
        %7087 = vmatprep.subr.bf16.mxu0 %v5359
        %7088 = vmatpush1.bf16.msra.mxu0 %v5358
        %7089 = vmatprep.subr.bf16.mxu0 %v5363
        %7090 = vmatpush1.bf16.msra.mxu0 %v5362
        %7091 = vmatprep.subr.bf16.mxu0 %v5367
        %7092 = vmatpush1.bf16.msra.mxu0 %v5366
        %7093 = vmatprep.subr.bf16.mxu0 %v5371
        %7094 = vmatpush1.bf16.msra.mxu0 %v5370
        %7095 = vmatprep.subr.bf16.mxu0 %v5375
        %7096 = vmatpush1.bf16.msra.mxu0 %v5374
        %7097 = vmatprep.subr.bf16.mxu0 %v5379
        %7098 = vmatpush1.bf16.msra.mxu0 %v5378
        %7099 = vmatprep.mubr.bf16.mxu0 %v1377
        %7100 = vmatmul.mubr.bf16.gmra.mrb[0].mxu0 %v1376
        %v7101 = vpop.f32.mrb[0].mxu0
        %v7102 = vadd.f32 %v7061, %v7101
        %v7103 = vpop.f32.mrb[0].mxu0
        %v7104 = vadd.f32 %v7063, %v7103
        %v7105 = vpop.f32.mrb[0].mxu0
        %v7106 = vpop.f32.mrb[0].mxu0
        %7107 = vdwg.mxu0
        %7108 = vmatprep.subr.bf16.mxu0 %v5383
        %7109 = vmatpush1.bf16.msra.mxu0 %v5382
        %7110 = vmatprep.subr.bf16.mxu0 %v5387
        %7111 = vmatpush1.bf16.msra.mxu0 %v5386
        %7112 = vmatprep.subr.bf16.mxu0 %v5391
        %7113 = vmatpush1.bf16.msra.mxu0 %v5390
        %7114 = vmatprep.subr.bf16.mxu0 %v5395
        %7115 = vmatpush1.bf16.msra.mxu0 %v5394
        %7116 = vmatprep.subr.bf16.mxu0 %v5399
        %7117 = vmatpush1.bf16.msra.mxu0 %v5398
        %7118 = vmatprep.subr.bf16.mxu0 %v5403
        %7119 = vmatpush1.bf16.msra.mxu0 %v5402
        %7120 = vmatprep.subr.bf16.mxu0 %v5407
        %7121 = vmatpush1.bf16.msra.mxu0 %v5406
        %7122 = vmatprep.subr.bf16.mxu0 %v5411
        %7123 = vmatpush1.bf16.msra.mxu0 %v5410
        %7124 = vmatprep.subr.bf16.mxu0 %v5415
        %7125 = vmatpush1.bf16.msra.mxu0 %v5414
        %7126 = vmatprep.subr.bf16.mxu0 %v5419
        %7127 = vmatpush1.bf16.msra.mxu0 %v5418
        %7128 = vmatprep.subr.bf16.mxu0 %v5423
        %7129 = vmatpush1.bf16.msra.mxu0 %v5422
        %7130 = vmatprep.subr.bf16.mxu0 %v5427
        %7131 = vmatpush1.bf16.msra.mxu0 %v5426
        %7132 = vmatprep.subr.bf16.mxu0 %v5431
        %7133 = vmatpush1.bf16.msra.mxu0 %v5430
        %7134 = vmatprep.subr.bf16.mxu0 %v5435
        %7135 = vmatpush1.bf16.msra.mxu0 %v5434
        %7136 = vmatprep.subr.bf16.mxu0 %v5439
        %7137 = vmatpush1.bf16.msra.mxu0 %v5438
        %7138 = vmatprep.subr.bf16.mxu0 %v5443
        %7139 = vmatpush1.bf16.msra.mxu0 %v5442
        %7140 = vmatprep.mubr.bf16.mxu0 %v1379
        %7141 = vmatmul.mubr.bf16.gmra.mrb[0].mxu0 %v1378
        %v7142 = vpop.f32.mrb[0].mxu0
        %v7143 = vadd.f32 %v7102, %v7142
        %v7144 = vpop.f32.mrb[0].mxu0
        %v7145 = vadd.f32 %v7104, %v7144
        %v7146 = vpop.f32.mrb[0].mxu0
        %v7147 = vpop.f32.mrb[0].mxu0
        %7148 = vdwg.mxu0
        %7149 = vmatprep.subr.bf16.mxu0 %v5447
        %7150 = vmatpush1.bf16.msra.mxu0 %v5446
        %7151 = vmatprep.subr.bf16.mxu0 %v5451
        %7152 = vmatpush1.bf16.msra.mxu0 %v5450
        %7153 = vmatprep.subr.bf16.mxu0 %v5455
        %7154 = vmatpush1.bf16.msra.mxu0 %v5454
        %7155 = vmatprep.subr.bf16.mxu0 %v5459
        %7156 = vmatpush1.bf16.msra.mxu0 %v5458
        %7157 = vmatprep.subr.bf16.mxu0 %v5463
        %7158 = vmatpush1.bf16.msra.mxu0 %v5462
        %7159 = vmatprep.subr.bf16.mxu0 %v5467
        %7160 = vmatpush1.bf16.msra.mxu0 %v5466
        %7161 = vmatprep.subr.bf16.mxu0 %v5471
        %7162 = vmatpush1.bf16.msra.mxu0 %v5470
        %7163 = vmatprep.subr.bf16.mxu0 %v5475
        %7164 = vmatpush1.bf16.msra.mxu0 %v5474
        %7165 = vmatprep.subr.bf16.mxu0 %v5479
        %7166 = vmatpush1.bf16.msra.mxu0 %v5478
        %7167 = vmatprep.subr.bf16.mxu0 %v5483
        %7168 = vmatpush1.bf16.msra.mxu0 %v5482
        %7169 = vmatprep.subr.bf16.mxu0 %v5487
        %7170 = vmatpush1.bf16.msra.mxu0 %v5486
        %7171 = vmatprep.subr.bf16.mxu0 %v5491
        %7172 = vmatpush1.bf16.msra.mxu0 %v5490
        %7173 = vmatprep.subr.bf16.mxu0 %v5495
        %7174 = vmatpush1.bf16.msra.mxu0 %v5494
        %7175 = vmatprep.subr.bf16.mxu0 %v5499
        %7176 = vmatpush1.bf16.msra.mxu0 %v5498
        %7177 = vmatprep.subr.bf16.mxu0 %v5503
        %7178 = vmatpush1.bf16.msra.mxu0 %v5502
        %7179 = vmatprep.subr.bf16.mxu0 %v5507
        %7180 = vmatpush1.bf16.msra.mxu0 %v5506
        %7181 = vmatprep.mubr.bf16.mxu0 %v1381
        %7182 = vmatmul.mubr.bf16.gmra.mrb[0].mxu0 %v1380
        %v7183 = vpop.f32.mrb[0].mxu0
        %v7184 = vadd.f32 %v7143, %v7183
        %v7185 = vpop.f32.mrb[0].mxu0
        %v7186 = vadd.f32 %v7145, %v7185
        %v7187 = vpop.f32.mrb[0].mxu0
        %v7188 = vpop.f32.mrb[0].mxu0
        %7189 = vdwg.mxu0
        %7190 = vmatprep.subr.bf16.mxu0 %v4489
        %7191 = vmatpush1.bf16.msra.mxu0 %v4488
        %7192 = vmatprep.subr.bf16.mxu0 %v4493
        %7193 = vmatpush1.bf16.msra.mxu0 %v4492
        %7194 = vmatprep.subr.bf16.mxu0 %v4497
        %7195 = vmatpush1.bf16.msra.mxu0 %v4496
        %7196 = vmatprep.subr.bf16.mxu0 %v4501
        %7197 = vmatpush1.bf16.msra.mxu0 %v4500
        %7198 = vmatprep.subr.bf16.mxu0 %v4505
        %7199 = vmatpush1.bf16.msra.mxu0 %v4504
        %7200 = vmatprep.subr.bf16.mxu0 %v4509
        %7201 = vmatpush1.bf16.msra.mxu0 %v4508
        %7202 = vmatprep.subr.bf16.mxu0 %v4513
        %7203 = vmatpush1.bf16.msra.mxu0 %v4512
        %7204 = vmatprep.subr.bf16.mxu0 %v4517
        %7205 = vmatpush1.bf16.msra.mxu0 %v4516
        %7206 = vmatprep.subr.bf16.mxu0 %v4521
        %7207 = vmatpush1.bf16.msra.mxu0 %v4520
        %7208 = vmatprep.subr.bf16.mxu0 %v4525
        %7209 = vmatpush1.bf16.msra.mxu0 %v4524
        %7210 = vmatprep.subr.bf16.mxu0 %v4529
        %7211 = vmatpush1.bf16.msra.mxu0 %v4528
        %7212 = vmatprep.subr.bf16.mxu0 %v4533
        %7213 = vmatpush1.bf16.msra.mxu0 %v4532
        %7214 = vmatprep.subr.bf16.mxu0 %v4537
        %7215 = vmatpush1.bf16.msra.mxu0 %v4536
        %7216 = vmatprep.subr.bf16.mxu0 %v4541
        %7217 = vmatpush1.bf16.msra.mxu0 %v4540
        %7218 = vmatprep.subr.bf16.mxu0 %v4545
        %7219 = vmatpush1.bf16.msra.mxu0 %v4544
        %7220 = vmatprep.subr.bf16.mxu0 %v4549
        %7221 = vmatpush1.bf16.msra.mxu0 %v4548
        %7222 = vmatprep.mubr.bf16.mxu0 %v1351
        %7223 = vmatmul.mubr.bf16.gmra.mrb[0].mxu0 %v1350
        %v7224 = vpop.f32.mrb[0].mxu0
        %v7225 = vadd.f32 %v1293, %v7224
        %v7226 = vpop.f32.mrb[0].mxu0
        %v7227 = vadd.f32 %v1297, %v7226
        %v7228 = vpop.f32.mrb[0].mxu0
        %v7229 = vpop.f32.mrb[0].mxu0
        %7230 = vdwg.mxu0
        %7231 = vmatprep.subr.bf16.mxu0 %v4553
        %7232 = vmatpush1.bf16.msra.mxu0 %v4552
        %7233 = vmatprep.subr.bf16.mxu0 %v4557
        %7234 = vmatpush1.bf16.msra.mxu0 %v4556
        %7235 = vmatprep.subr.bf16.mxu0 %v4561
        %7236 = vmatpush1.bf16.msra.mxu0 %v4560
        %7237 = vmatprep.subr.bf16.mxu0 %v4565
        %7238 = vmatpush1.bf16.msra.mxu0 %v4564
        %7239 = vmatprep.subr.bf16.mxu0 %v4569
        %7240 = vmatpush1.bf16.msra.mxu0 %v4568
        %7241 = vmatprep.subr.bf16.mxu0 %v4573
        %7242 = vmatpush1.bf16.msra.mxu0 %v4572
        %7243 = vmatprep.subr.bf16.mxu0 %v4577
        %7244 = vmatpush1.bf16.msra.mxu0 %v4576
        %7245 = vmatprep.subr.bf16.mxu0 %v4581
        %7246 = vmatpush1.bf16.msra.mxu0 %v4580
        %7247 = vmatprep.subr.bf16.mxu0 %v4585
        %7248 = vmatpush1.bf16.msra.mxu0 %v4584
        %7249 = vmatprep.subr.bf16.mxu0 %v4589
        %7250 = vmatpush1.bf16.msra.mxu0 %v4588
        %7251 = vmatprep.subr.bf16.mxu0 %v4593
        %7252 = vmatpush1.bf16.msra.mxu0 %v4592
        %7253 = vmatprep.subr.bf16.mxu0 %v4597
        %7254 = vmatpush1.bf16.msra.mxu0 %v4596
        %7255 = vmatprep.subr.bf16.mxu0 %v4601
        %7256 = vmatpush1.bf16.msra.mxu0 %v4600
        %7257 = vmatprep.subr.bf16.mxu0 %v4605
        %7258 = vmatpush1.bf16.msra.mxu0 %v4604
        %7259 = vmatprep.subr.bf16.mxu0 %v4609
        %7260 = vmatpush1.bf16.msra.mxu0 %v4608
        %7261 = vmatprep.subr.bf16.mxu0 %v4613
        %7262 = vmatpush1.bf16.msra.mxu0 %v4612
        %7263 = vmatprep.mubr.bf16.mxu0 %v1353
        %7264 = vmatmul.mubr.bf16.gmra.mrb[0].mxu0 %v1352
        %v7265 = vpop.f32.mrb[0].mxu0
        %v7266 = vadd.f32 %v7225, %v7265
        %v7267 = vpop.f32.mrb[0].mxu0
        %v7268 = vadd.f32 %v7227, %v7267
        %v7269 = vpop.f32.mrb[0].mxu0
        %v7270 = vpop.f32.mrb[0].mxu0
        %7271 = vdwg.mxu0
        %7272 = vmatprep.subr.bf16.mxu0 %v4617
        %7273 = vmatpush1.bf16.msra.mxu0 %v4616
        %7274 = vmatprep.subr.bf16.mxu0 %v4621
        %7275 = vmatpush1.bf16.msra.mxu0 %v4620
        %7276 = vmatprep.subr.bf16.mxu0 %v4625
        %7277 = vmatpush1.bf16.msra.mxu0 %v4624
        %7278 = vmatprep.subr.bf16.mxu0 %v4629
        %7279 = vmatpush1.bf16.msra.mxu0 %v4628
        %7280 = vmatprep.subr.bf16.mxu0 %v4633
        %7281 = vmatpush1.bf16.msra.mxu0 %v4632
        %7282 = vmatprep.subr.bf16.mxu0 %v4637
        %7283 = vmatpush1.bf16.msra.mxu0 %v4636
        %7284 = vmatprep.subr.bf16.mxu0 %v4641
        %7285 = vmatpush1.bf16.msra.mxu0 %v4640
        %7286 = vmatprep.subr.bf16.mxu0 %v4645
        %7287 = vmatpush1.bf16.msra.mxu0 %v4644
        %7288 = vmatprep.subr.bf16.mxu0 %v4649
        %7289 = vmatpush1.bf16.msra.mxu0 %v4648
        %7290 = vmatprep.subr.bf16.mxu0 %v4653
        %7291 = vmatpush1.bf16.msra.mxu0 %v4652
        %7292 = vmatprep.subr.bf16.mxu0 %v4657
        %7293 = vmatpush1.bf16.msra.mxu0 %v4656
        %7294 = vmatprep.subr.bf16.mxu0 %v4661
        %7295 = vmatpush1.bf16.msra.mxu0 %v4660
        %7296 = vmatprep.subr.bf16.mxu0 %v4665
        %7297 = vmatpush1.bf16.msra.mxu0 %v4664
        %7298 = vmatprep.subr.bf16.mxu0 %v4669
        %7299 = vmatpush1.bf16.msra.mxu0 %v4668
        %7300 = vmatprep.subr.bf16.mxu0 %v4673
        %7301 = vmatpush1.bf16.msra.mxu0 %v4672
        %7302 = vmatprep.subr.bf16.mxu0 %v4677
        %7303 = vmatpush1.bf16.msra.mxu0 %v4676
        %7304 = vmatprep.mubr.bf16.mxu0 %v1355
        %7305 = vmatmul.mubr.bf16.gmra.mrb[0].mxu0 %v1354
        %v7306 = vpop.f32.mrb[0].mxu0
        %v7307 = vadd.f32 %v7266, %v7306
        %v7308 = vpop.f32.mrb[0].mxu0
        %v7309 = vadd.f32 %v7268, %v7308
        %v7310 = vpop.f32.mrb[0].mxu0
        %v7311 = vpop.f32.mrb[0].mxu0
        %7312 = vdwg.mxu0
        %7313 = vmatprep.subr.bf16.mxu0 %v4681
        %7314 = vmatpush1.bf16.msra.mxu0 %v4680
        %7315 = vmatprep.subr.bf16.mxu0 %v4685
        %7316 = vmatpush1.bf16.msra.mxu0 %v4684
        %7317 = vmatprep.subr.bf16.mxu0 %v4689
        %7318 = vmatpush1.bf16.msra.mxu0 %v4688
        %7319 = vmatprep.subr.bf16.mxu0 %v4693
        %7320 = vmatpush1.bf16.msra.mxu0 %v4692
        %7321 = vmatprep.subr.bf16.mxu0 %v4697
        %7322 = vmatpush1.bf16.msra.mxu0 %v4696
        %7323 = vmatprep.subr.bf16.mxu0 %v4701
        %7324 = vmatpush1.bf16.msra.mxu0 %v4700
        %7325 = vmatprep.subr.bf16.mxu0 %v4705
        %7326 = vmatpush1.bf16.msra.mxu0 %v4704
        %7327 = vmatprep.subr.bf16.mxu0 %v4709
        %7328 = vmatpush1.bf16.msra.mxu0 %v4708
        %7329 = vmatprep.subr.bf16.mxu0 %v4713
        %7330 = vmatpush1.bf16.msra.mxu0 %v4712
        %7331 = vmatprep.subr.bf16.mxu0 %v4717
        %7332 = vmatpush1.bf16.msra.mxu0 %v4716
        %7333 = vmatprep.subr.bf16.mxu0 %v4721
        %7334 = vmatpush1.bf16.msra.mxu0 %v4720
        %7335 = vmatprep.subr.bf16.mxu0 %v4725
        %7336 = vmatpush1.bf16.msra.mxu0 %v4724
        %7337 = vmatprep.subr.bf16.mxu0 %v4729
        %7338 = vmatpush1.bf16.msra.mxu0 %v4728
        %7339 = vmatprep.subr.bf16.mxu0 %v4733
        %7340 = vmatpush1.bf16.msra.mxu0 %v4732
        %7341 = vmatprep.subr.bf16.mxu0 %v4737
        %7342 = vmatpush1.bf16.msra.mxu0 %v4736
        %7343 = vmatprep.subr.bf16.mxu0 %v4741
        %7344 = vmatpush1.bf16.msra.mxu0 %v4740
        %7345 = vmatprep.mubr.bf16.mxu0 %v1357
        %7346 = vmatmul.mubr.bf16.gmra.mrb[0].mxu0 %v1356
        %v7347 = vpop.f32.mrb[0].mxu0
        %v7348 = vadd.f32 %v7307, %v7347
        %v7349 = vpop.f32.mrb[0].mxu0
        %v7350 = vadd.f32 %v7309, %v7349
        %v7351 = vpop.f32.mrb[0].mxu0
        %v7352 = vpop.f32.mrb[0].mxu0
        %7353 = vdwg.mxu0
        %7354 = vmatprep.subr.bf16.mxu0 %v4745
        %7355 = vmatpush1.bf16.msra.mxu0 %v4744
        %7356 = vmatprep.subr.bf16.mxu0 %v4749
        %7357 = vmatpush1.bf16.msra.mxu0 %v4748
        %7358 = vmatprep.subr.bf16.mxu0 %v4753
        %7359 = vmatpush1.bf16.msra.mxu0 %v4752
        %7360 = vmatprep.subr.bf16.mxu0 %v4757
        %7361 = vmatpush1.bf16.msra.mxu0 %v4756
        %7362 = vmatprep.subr.bf16.mxu0 %v4761
        %7363 = vmatpush1.bf16.msra.mxu0 %v4760
        %7364 = vmatprep.subr.bf16.mxu0 %v4765
        %7365 = vmatpush1.bf16.msra.mxu0 %v4764
        %7366 = vmatprep.subr.bf16.mxu0 %v4769
        %7367 = vmatpush1.bf16.msra.mxu0 %v4768
        %7368 = vmatprep.subr.bf16.mxu0 %v4773
        %7369 = vmatpush1.bf16.msra.mxu0 %v4772
        %7370 = vmatprep.subr.bf16.mxu0 %v4777
        %7371 = vmatpush1.bf16.msra.mxu0 %v4776
        %7372 = vmatprep.subr.bf16.mxu0 %v4781
        %7373 = vmatpush1.bf16.msra.mxu0 %v4780
        %7374 = vmatprep.subr.bf16.mxu0 %v4785
        %7375 = vmatpush1.bf16.msra.mxu0 %v4784
        %7376 = vmatprep.subr.bf16.mxu0 %v4789
        %7377 = vmatpush1.bf16.msra.mxu0 %v4788
        %7378 = vmatprep.subr.bf16.mxu0 %v4793
        %7379 = vmatpush1.bf16.msra.mxu0 %v4792
        %7380 = vmatprep.subr.bf16.mxu0 %v4797
        %7381 = vmatpush1.bf16.msra.mxu0 %v4796
        %7382 = vmatprep.subr.bf16.mxu0 %v4801
        %7383 = vmatpush1.bf16.msra.mxu0 %v4800
        %7384 = vmatprep.subr.bf16.mxu0 %v4805
        %7385 = vmatpush1.bf16.msra.mxu0 %v4804
        %7386 = vmatprep.mubr.bf16.mxu0 %v1359
        %7387 = vmatmul.mubr.bf16.gmra.mrb[0].mxu0 %v1358
        %v7388 = vpop.f32.mrb[0].mxu0
        %v7389 = vadd.f32 %v7348, %v7388
        %v7390 = vpop.f32.mrb[0].mxu0
        %v7391 = vadd.f32 %v7350, %v7390
        %v7392 = vpop.f32.mrb[0].mxu0
        %v7393 = vpop.f32.mrb[0].mxu0
        %7394 = vdwg.mxu0
        %7395 = vmatprep.subr.bf16.mxu0 %v4809
        %7396 = vmatpush1.bf16.msra.mxu0 %v4808
        %7397 = vmatprep.subr.bf16.mxu0 %v4813
        %7398 = vmatpush1.bf16.msra.mxu0 %v4812
        %7399 = vmatprep.subr.bf16.mxu0 %v4817
        %7400 = vmatpush1.bf16.msra.mxu0 %v4816
        %7401 = vmatprep.subr.bf16.mxu0 %v4821
        %7402 = vmatpush1.bf16.msra.mxu0 %v4820
        %7403 = vmatprep.subr.bf16.mxu0 %v4825
        %7404 = vmatpush1.bf16.msra.mxu0 %v4824
        %7405 = vmatprep.subr.bf16.mxu0 %v4829
        %7406 = vmatpush1.bf16.msra.mxu0 %v4828
        %7407 = vmatprep.subr.bf16.mxu0 %v4833
        %7408 = vmatpush1.bf16.msra.mxu0 %v4832
        %7409 = vmatprep.subr.bf16.mxu0 %v4837
        %7410 = vmatpush1.bf16.msra.mxu0 %v4836
        %7411 = vmatprep.subr.bf16.mxu0 %v4841
        %7412 = vmatpush1.bf16.msra.mxu0 %v4840
        %7413 = vmatprep.subr.bf16.mxu0 %v4845
        %7414 = vmatpush1.bf16.msra.mxu0 %v4844
        %7415 = vmatprep.subr.bf16.mxu0 %v4849
        %7416 = vmatpush1.bf16.msra.mxu0 %v4848
        %7417 = vmatprep.subr.bf16.mxu0 %v4853
        %7418 = vmatpush1.bf16.msra.mxu0 %v4852
        %7419 = vmatprep.subr.bf16.mxu0 %v4857
        %7420 = vmatpush1.bf16.msra.mxu0 %v4856
        %7421 = vmatprep.subr.bf16.mxu0 %v4861
        %7422 = vmatpush1.bf16.msra.mxu0 %v4860
        %7423 = vmatprep.subr.bf16.mxu0 %v4865
        %7424 = vmatpush1.bf16.msra.mxu0 %v4864
        %7425 = vmatprep.subr.bf16.mxu0 %v4869
        %7426 = vmatpush1.bf16.msra.mxu0 %v4868
        %7427 = vmatprep.mubr.bf16.mxu0 %v1361
        %7428 = vmatmul.mubr.bf16.gmra.mrb[0].mxu0 %v1360
        %v7429 = vpop.f32.mrb[0].mxu0
        %v7430 = vadd.f32 %v7389, %v7429
        %v7431 = vpop.f32.mrb[0].mxu0
        %v7432 = vadd.f32 %v7391, %v7431
        %v7433 = vpop.f32.mrb[0].mxu0
        %v7434 = vpop.f32.mrb[0].mxu0
        %7435 = vdwg.mxu0
        %7436 = vmatprep.subr.bf16.mxu0 %v4873
        %7437 = vmatpush1.bf16.msra.mxu0 %v4872
        %7438 = vmatprep.subr.bf16.mxu0 %v4877
        %7439 = vmatpush1.bf16.msra.mxu0 %v4876
        %7440 = vmatprep.subr.bf16.mxu0 %v4881
        %7441 = vmatpush1.bf16.msra.mxu0 %v4880
        %7442 = vmatprep.subr.bf16.mxu0 %v4885
        %7443 = vmatpush1.bf16.msra.mxu0 %v4884
        %7444 = vmatprep.subr.bf16.mxu0 %v4889
        %7445 = vmatpush1.bf16.msra.mxu0 %v4888
        %7446 = vmatprep.subr.bf16.mxu0 %v4893
        %7447 = vmatpush1.bf16.msra.mxu0 %v4892
        %7448 = vmatprep.subr.bf16.mxu0 %v4897
        %7449 = vmatpush1.bf16.msra.mxu0 %v4896
        %7450 = vmatprep.subr.bf16.mxu0 %v4901
        %7451 = vmatpush1.bf16.msra.mxu0 %v4900
        %7452 = vmatprep.subr.bf16.mxu0 %v4905
        %7453 = vmatpush1.bf16.msra.mxu0 %v4904
        %7454 = vmatprep.subr.bf16.mxu0 %v4909
        %7455 = vmatpush1.bf16.msra.mxu0 %v4908
        %7456 = vmatprep.subr.bf16.mxu0 %v4913
        %7457 = vmatpush1.bf16.msra.mxu0 %v4912
        %7458 = vmatprep.subr.bf16.mxu0 %v4917
        %7459 = vmatpush1.bf16.msra.mxu0 %v4916
        %7460 = vmatprep.subr.bf16.mxu0 %v4921
        %7461 = vmatpush1.bf16.msra.mxu0 %v4920
        %7462 = vmatprep.subr.bf16.mxu0 %v4925
        %7463 = vmatpush1.bf16.msra.mxu0 %v4924
        %7464 = vmatprep.subr.bf16.mxu0 %v4929
        %7465 = vmatpush1.bf16.msra.mxu0 %v4928
        %7466 = vmatprep.subr.bf16.mxu0 %v4933
        %7467 = vmatpush1.bf16.msra.mxu0 %v4932
        %7468 = vmatprep.mubr.bf16.mxu0 %v1363
        %7469 = vmatmul.mubr.bf16.gmra.mrb[0].mxu0 %v1362
        %v7470 = vpop.f32.mrb[0].mxu0
        %v7471 = vadd.f32 %v7430, %v7470
        %v7472 = vpop.f32.mrb[0].mxu0
        %v7473 = vadd.f32 %v7432, %v7472
        %v7474 = vpop.f32.mrb[0].mxu0
        %v7475 = vpop.f32.mrb[0].mxu0
        %7476 = vdwg.mxu0
        %7477 = vmatprep.subr.bf16.mxu0 %v4937
        %7478 = vmatpush1.bf16.msra.mxu0 %v4936
        %7479 = vmatprep.subr.bf16.mxu0 %v4941
        %7480 = vmatpush1.bf16.msra.mxu0 %v4940
        %7481 = vmatprep.subr.bf16.mxu0 %v4945
        %7482 = vmatpush1.bf16.msra.mxu0 %v4944
        %7483 = vmatprep.subr.bf16.mxu0 %v4949
        %7484 = vmatpush1.bf16.msra.mxu0 %v4948
        %7485 = vmatprep.subr.bf16.mxu0 %v4953
        %7486 = vmatpush1.bf16.msra.mxu0 %v4952
        %7487 = vmatprep.subr.bf16.mxu0 %v4957
        %7488 = vmatpush1.bf16.msra.mxu0 %v4956
        %7489 = vmatprep.subr.bf16.mxu0 %v4961
        %7490 = vmatpush1.bf16.msra.mxu0 %v4960
        %7491 = vmatprep.subr.bf16.mxu0 %v4965
        %7492 = vmatpush1.bf16.msra.mxu0 %v4964
        %7493 = vmatprep.subr.bf16.mxu0 %v4969
        %7494 = vmatpush1.bf16.msra.mxu0 %v4968
        %7495 = vmatprep.subr.bf16.mxu0 %v4973
        %7496 = vmatpush1.bf16.msra.mxu0 %v4972
        %7497 = vmatprep.subr.bf16.mxu0 %v4977
        %7498 = vmatpush1.bf16.msra.mxu0 %v4976
        %7499 = vmatprep.subr.bf16.mxu0 %v4981
        %7500 = vmatpush1.bf16.msra.mxu0 %v4980
        %7501 = vmatprep.subr.bf16.mxu0 %v4985
        %7502 = vmatpush1.bf16.msra.mxu0 %v4984
        %7503 = vmatprep.subr.bf16.mxu0 %v4989
        %7504 = vmatpush1.bf16.msra.mxu0 %v4988
        %7505 = vmatprep.subr.bf16.mxu0 %v4993
        %7506 = vmatpush1.bf16.msra.mxu0 %v4992
        %7507 = vmatprep.subr.bf16.mxu0 %v4997
        %7508 = vmatpush1.bf16.msra.mxu0 %v4996
        %7509 = vmatprep.mubr.bf16.mxu0 %v1365
        %7510 = vmatmul.mubr.bf16.gmra.mrb[0].mxu0 %v1364
        %v7511 = vpop.f32.mrb[0].mxu0
        %v7512 = vadd.f32 %v7471, %v7511
        %v7513 = vpop.f32.mrb[0].mxu0
        %v7514 = vadd.f32 %v7473, %v7513
        %v7515 = vpop.f32.mrb[0].mxu0
        %v7516 = vpop.f32.mrb[0].mxu0
        %7517 = vdwg.mxu0
        %7518 = vmatprep.subr.bf16.mxu0 %v5001
        %7519 = vmatpush1.bf16.msra.mxu0 %v5000
        %7520 = vmatprep.subr.bf16.mxu0 %v5005
        %7521 = vmatpush1.bf16.msra.mxu0 %v5004
        %7522 = vmatprep.subr.bf16.mxu0 %v5009
        %7523 = vmatpush1.bf16.msra.mxu0 %v5008
        %7524 = vmatprep.subr.bf16.mxu0 %v5013
        %7525 = vmatpush1.bf16.msra.mxu0 %v5012
        %7526 = vmatprep.subr.bf16.mxu0 %v5017
        %7527 = vmatpush1.bf16.msra.mxu0 %v5016
        %7528 = vmatprep.subr.bf16.mxu0 %v5021
        %7529 = vmatpush1.bf16.msra.mxu0 %v5020
        %7530 = vmatprep.subr.bf16.mxu0 %v5025
        %7531 = vmatpush1.bf16.msra.mxu0 %v5024
        %7532 = vmatprep.subr.bf16.mxu0 %v5029
        %7533 = vmatpush1.bf16.msra.mxu0 %v5028
        %7534 = vmatprep.subr.bf16.mxu0 %v5033
        %7535 = vmatpush1.bf16.msra.mxu0 %v5032
        %7536 = vmatprep.subr.bf16.mxu0 %v5037
        %7537 = vmatpush1.bf16.msra.mxu0 %v5036
        %7538 = vmatprep.subr.bf16.mxu0 %v5041
        %7539 = vmatpush1.bf16.msra.mxu0 %v5040
        %7540 = vmatprep.subr.bf16.mxu0 %v5045
        %7541 = vmatpush1.bf16.msra.mxu0 %v5044
        %7542 = vmatprep.subr.bf16.mxu0 %v5049
        %7543 = vmatpush1.bf16.msra.mxu0 %v5048
        %7544 = vmatprep.subr.bf16.mxu0 %v5053
        %7545 = vmatpush1.bf16.msra.mxu0 %v5052
        %7546 = vmatprep.subr.bf16.mxu0 %v5057
        %7547 = vmatpush1.bf16.msra.mxu0 %v5056
        %7548 = vmatprep.subr.bf16.mxu0 %v5061
        %7549 = vmatpush1.bf16.msra.mxu0 %v5060
        %7550 = vmatprep.mubr.bf16.mxu0 %v1367
        %7551 = vmatmul.mubr.bf16.gmra.mrb[0].mxu0 %v1366
        %v7552 = vpop.f32.mrb[0].mxu0
        %v7553 = vadd.f32 %v7512, %v7552
        %v7554 = vpop.f32.mrb[0].mxu0
        %v7555 = vadd.f32 %v7514, %v7554
        %v7556 = vpop.f32.mrb[0].mxu0
        %v7557 = vpop.f32.mrb[0].mxu0
        %7558 = vdwg.mxu0
        %7559 = vmatprep.subr.bf16.mxu0 %v5065
        %7560 = vmatpush1.bf16.msra.mxu0 %v5064
        %7561 = vmatprep.subr.bf16.mxu0 %v5069
        %7562 = vmatpush1.bf16.msra.mxu0 %v5068
        %7563 = vmatprep.subr.bf16.mxu0 %v5073
        %7564 = vmatpush1.bf16.msra.mxu0 %v5072
        %7565 = vmatprep.subr.bf16.mxu0 %v5077
        %7566 = vmatpush1.bf16.msra.mxu0 %v5076
        %7567 = vmatprep.subr.bf16.mxu0 %v5081
        %7568 = vmatpush1.bf16.msra.mxu0 %v5080
        %7569 = vmatprep.subr.bf16.mxu0 %v5085
        %7570 = vmatpush1.bf16.msra.mxu0 %v5084
        %7571 = vmatprep.subr.bf16.mxu0 %v5089
        %7572 = vmatpush1.bf16.msra.mxu0 %v5088
        %7573 = vmatprep.subr.bf16.mxu0 %v5093
        %7574 = vmatpush1.bf16.msra.mxu0 %v5092
        %7575 = vmatprep.subr.bf16.mxu0 %v5097
        %7576 = vmatpush1.bf16.msra.mxu0 %v5096
        %7577 = vmatprep.subr.bf16.mxu0 %v5101
        %7578 = vmatpush1.bf16.msra.mxu0 %v5100
        %7579 = vmatprep.subr.bf16.mxu0 %v5105
        %7580 = vmatpush1.bf16.msra.mxu0 %v5104
        %7581 = vmatprep.subr.bf16.mxu0 %v5109
        %7582 = vmatpush1.bf16.msra.mxu0 %v5108
        %7583 = vmatprep.subr.bf16.mxu0 %v5113
        %7584 = vmatpush1.bf16.msra.mxu0 %v5112
        %7585 = vmatprep.subr.bf16.mxu0 %v5117
        %7586 = vmatpush1.bf16.msra.mxu0 %v5116
        %7587 = vmatprep.subr.bf16.mxu0 %v5121
        %7588 = vmatpush1.bf16.msra.mxu0 %v5120
        %7589 = vmatprep.subr.bf16.mxu0 %v5125
        %7590 = vmatpush1.bf16.msra.mxu0 %v5124
        %7591 = vmatprep.mubr.bf16.mxu0 %v1369
        %7592 = vmatmul.mubr.bf16.gmra.mrb[0].mxu0 %v1368
        %v7593 = vpop.f32.mrb[0].mxu0
        %v7594 = vadd.f32 %v7553, %v7593
        %v7595 = vpop.f32.mrb[0].mxu0
        %v7596 = vadd.f32 %v7555, %v7595
        %v7597 = vpop.f32.mrb[0].mxu0
        %v7598 = vpop.f32.mrb[0].mxu0
        %7599 = vdwg.mxu0
        %7600 = vmatprep.subr.bf16.mxu0 %v5129
        %7601 = vmatpush1.bf16.msra.mxu0 %v5128
        %7602 = vmatprep.subr.bf16.mxu0 %v5133
        %7603 = vmatpush1.bf16.msra.mxu0 %v5132
        %7604 = vmatprep.subr.bf16.mxu0 %v5137
        %7605 = vmatpush1.bf16.msra.mxu0 %v5136
        %7606 = vmatprep.subr.bf16.mxu0 %v5141
        %7607 = vmatpush1.bf16.msra.mxu0 %v5140
        %7608 = vmatprep.subr.bf16.mxu0 %v5145
        %7609 = vmatpush1.bf16.msra.mxu0 %v5144
        %7610 = vmatprep.subr.bf16.mxu0 %v5149
        %7611 = vmatpush1.bf16.msra.mxu0 %v5148
        %7612 = vmatprep.subr.bf16.mxu0 %v5153
        %7613 = vmatpush1.bf16.msra.mxu0 %v5152
        %7614 = vmatprep.subr.bf16.mxu0 %v5157
        %7615 = vmatpush1.bf16.msra.mxu0 %v5156
        %7616 = vmatprep.subr.bf16.mxu0 %v5161
        %7617 = vmatpush1.bf16.msra.mxu0 %v5160
        %7618 = vmatprep.subr.bf16.mxu0 %v5165
        %7619 = vmatpush1.bf16.msra.mxu0 %v5164
        %7620 = vmatprep.subr.bf16.mxu0 %v5169
        %7621 = vmatpush1.bf16.msra.mxu0 %v5168
        %7622 = vmatprep.subr.bf16.mxu0 %v5173
        %7623 = vmatpush1.bf16.msra.mxu0 %v5172
        %7624 = vmatprep.subr.bf16.mxu0 %v5177
        %7625 = vmatpush1.bf16.msra.mxu0 %v5176
        %7626 = vmatprep.subr.bf16.mxu0 %v5181
        %7627 = vmatpush1.bf16.msra.mxu0 %v5180
        %7628 = vmatprep.subr.bf16.mxu0 %v5185
        %7629 = vmatpush1.bf16.msra.mxu0 %v5184
        %7630 = vmatprep.subr.bf16.mxu0 %v5189
        %7631 = vmatpush1.bf16.msra.mxu0 %v5188
        %7632 = vmatprep.mubr.bf16.mxu0 %v1371
        %7633 = vmatmul.mubr.bf16.gmra.mrb[0].mxu0 %v1370
        %v7634 = vpop.f32.mrb[0].mxu0
        %v7635 = vadd.f32 %v7594, %v7634
        %v7636 = vpop.f32.mrb[0].mxu0
        %v7637 = vadd.f32 %v7596, %v7636
        %v7638 = vpop.f32.mrb[0].mxu0
        %v7639 = vpop.f32.mrb[0].mxu0
        %7640 = vdwg.mxu0
        %7641 = vmatprep.subr.bf16.mxu0 %v5193
        %7642 = vmatpush1.bf16.msra.mxu0 %v5192
        %7643 = vmatprep.subr.bf16.mxu0 %v5197
        %7644 = vmatpush1.bf16.msra.mxu0 %v5196
        %7645 = vmatprep.subr.bf16.mxu0 %v5201
        %7646 = vmatpush1.bf16.msra.mxu0 %v5200
        %7647 = vmatprep.subr.bf16.mxu0 %v5205
        %7648 = vmatpush1.bf16.msra.mxu0 %v5204
        %7649 = vmatprep.subr.bf16.mxu0 %v5209
        %7650 = vmatpush1.bf16.msra.mxu0 %v5208
        %7651 = vmatprep.subr.bf16.mxu0 %v5213
        %7652 = vmatpush1.bf16.msra.mxu0 %v5212
        %7653 = vmatprep.subr.bf16.mxu0 %v5217
        %7654 = vmatpush1.bf16.msra.mxu0 %v5216
        %7655 = vmatprep.subr.bf16.mxu0 %v5221
        %7656 = vmatpush1.bf16.msra.mxu0 %v5220
        %7657 = vmatprep.subr.bf16.mxu0 %v5225
        %7658 = vmatpush1.bf16.msra.mxu0 %v5224
        %7659 = vmatprep.subr.bf16.mxu0 %v5229
        %7660 = vmatpush1.bf16.msra.mxu0 %v5228
        %7661 = vmatprep.subr.bf16.mxu0 %v5233
        %7662 = vmatpush1.bf16.msra.mxu0 %v5232
        %7663 = vmatprep.subr.bf16.mxu0 %v5237
        %7664 = vmatpush1.bf16.msra.mxu0 %v5236
        %7665 = vmatprep.subr.bf16.mxu0 %v5241
        %7666 = vmatpush1.bf16.msra.mxu0 %v5240
        %7667 = vmatprep.subr.bf16.mxu0 %v5245
        %7668 = vmatpush1.bf16.msra.mxu0 %v5244
        %7669 = vmatprep.subr.bf16.mxu0 %v5249
        %7670 = vmatpush1.bf16.msra.mxu0 %v5248
        %7671 = vmatprep.subr.bf16.mxu0 %v5253
        %7672 = vmatpush1.bf16.msra.mxu0 %v5252
        %7673 = vmatprep.mubr.bf16.mxu0 %v1373
        %7674 = vmatmul.mubr.bf16.gmra.mrb[0].mxu0 %v1372
        %v7675 = vpop.f32.mrb[0].mxu0
        %v7676 = vadd.f32 %v7635, %v7675
        %v7677 = vpop.f32.mrb[0].mxu0
        %v7678 = vadd.f32 %v7637, %v7677
        %v7679 = vpop.f32.mrb[0].mxu0
        %v7680 = vpop.f32.mrb[0].mxu0
        %7681 = vdwg.mxu0
        %7682 = vmatprep.subr.bf16.mxu0 %v5257
        %7683 = vmatpush1.bf16.msra.mxu0 %v5256
        %7684 = vmatprep.subr.bf16.mxu0 %v5261
        %7685 = vmatpush1.bf16.msra.mxu0 %v5260
        %7686 = vmatprep.subr.bf16.mxu0 %v5265
        %7687 = vmatpush1.bf16.msra.mxu0 %v5264
        %7688 = vmatprep.subr.bf16.mxu0 %v5269
        %7689 = vmatpush1.bf16.msra.mxu0 %v5268
        %7690 = vmatprep.subr.bf16.mxu0 %v5273
        %7691 = vmatpush1.bf16.msra.mxu0 %v5272
        %7692 = vmatprep.subr.bf16.mxu0 %v5277
        %7693 = vmatpush1.bf16.msra.mxu0 %v5276
        %7694 = vmatprep.subr.bf16.mxu0 %v5281
        %7695 = vmatpush1.bf16.msra.mxu0 %v5280
        %7696 = vmatprep.subr.bf16.mxu0 %v5285
        %7697 = vmatpush1.bf16.msra.mxu0 %v5284
        %7698 = vmatprep.subr.bf16.mxu0 %v5289
        %7699 = vmatpush1.bf16.msra.mxu0 %v5288
        %7700 = vmatprep.subr.bf16.mxu0 %v5293
        %7701 = vmatpush1.bf16.msra.mxu0 %v5292
        %7702 = vmatprep.subr.bf16.mxu0 %v5297
        %7703 = vmatpush1.bf16.msra.mxu0 %v5296
        %7704 = vmatprep.subr.bf16.mxu0 %v5301
        %7705 = vmatpush1.bf16.msra.mxu0 %v5300
        %7706 = vmatprep.subr.bf16.mxu0 %v5305
        %7707 = vmatpush1.bf16.msra.mxu0 %v5304
        %7708 = vmatprep.subr.bf16.mxu0 %v5309
        %7709 = vmatpush1.bf16.msra.mxu0 %v5308
        %7710 = vmatprep.subr.bf16.mxu0 %v5313
        %7711 = vmatpush1.bf16.msra.mxu0 %v5312
        %7712 = vmatprep.subr.bf16.mxu0 %v5317
        %7713 = vmatpush1.bf16.msra.mxu0 %v5316
        %7714 = vmatprep.mubr.bf16.mxu0 %v1375
        %7715 = vmatmul.mubr.bf16.gmra.mrb[0].mxu0 %v1374
        %v7716 = vpop.f32.mrb[0].mxu0
        %v7717 = vadd.f32 %v7676, %v7716
        %v7718 = vpop.f32.mrb[0].mxu0
        %v7719 = vadd.f32 %v7678, %v7718
        %v7720 = vpop.f32.mrb[0].mxu0
        %v7721 = vpop.f32.mrb[0].mxu0
        %7722 = vdwg.mxu0
        %7723 = vmatprep.subr.bf16.mxu0 %v5321
        %7724 = vmatpush1.bf16.msra.mxu0 %v5320
        %7725 = vmatprep.subr.bf16.mxu0 %v5325
        %7726 = vmatpush1.bf16.msra.mxu0 %v5324
        %7727 = vmatprep.subr.bf16.mxu0 %v5329
        %7728 = vmatpush1.bf16.msra.mxu0 %v5328
        %7729 = vmatprep.subr.bf16.mxu0 %v5333
        %7730 = vmatpush1.bf16.msra.mxu0 %v5332
        %7731 = vmatprep.subr.bf16.mxu0 %v5337
        %7732 = vmatpush1.bf16.msra.mxu0 %v5336
        %7733 = vmatprep.subr.bf16.mxu0 %v5341
        %7734 = vmatpush1.bf16.msra.mxu0 %v5340
        %7735 = vmatprep.subr.bf16.mxu0 %v5345
        %7736 = vmatpush1.bf16.msra.mxu0 %v5344
        %7737 = vmatprep.subr.bf16.mxu0 %v5349
        %7738 = vmatpush1.bf16.msra.mxu0 %v5348
        %7739 = vmatprep.subr.bf16.mxu0 %v5353
        %7740 = vmatpush1.bf16.msra.mxu0 %v5352
        %7741 = vmatprep.subr.bf16.mxu0 %v5357
        %7742 = vmatpush1.bf16.msra.mxu0 %v5356
        %7743 = vmatprep.subr.bf16.mxu0 %v5361
        %7744 = vmatpush1.bf16.msra.mxu0 %v5360
        %7745 = vmatprep.subr.bf16.mxu0 %v5365
        %7746 = vmatpush1.bf16.msra.mxu0 %v5364
        %7747 = vmatprep.subr.bf16.mxu0 %v5369
        %7748 = vmatpush1.bf16.msra.mxu0 %v5368
        %7749 = vmatprep.subr.bf16.mxu0 %v5373
        %7750 = vmatpush1.bf16.msra.mxu0 %v5372
        %7751 = vmatprep.subr.bf16.mxu0 %v5377
        %7752 = vmatpush1.bf16.msra.mxu0 %v5376
        %7753 = vmatprep.subr.bf16.mxu0 %v5381
        %7754 = vmatpush1.bf16.msra.mxu0 %v5380
        %7755 = vmatprep.mubr.bf16.mxu0 %v1377
        %7756 = vmatmul.mubr.bf16.gmra.mrb[0].mxu0 %v1376
        %v7757 = vpop.f32.mrb[0].mxu0
        %v7758 = vadd.f32 %v7717, %v7757
        %v7759 = vpop.f32.mrb[0].mxu0
        %v7760 = vadd.f32 %v7719, %v7759
        %v7761 = vpop.f32.mrb[0].mxu0
        %v7762 = vpop.f32.mrb[0].mxu0
        %7763 = vdwg.mxu0
        %7764 = vmatprep.subr.bf16.mxu0 %v5385
        %7765 = vmatpush1.bf16.msra.mxu0 %v5384
        %7766 = vmatprep.subr.bf16.mxu0 %v5389
        %7767 = vmatpush1.bf16.msra.mxu0 %v5388
        %7768 = vmatprep.subr.bf16.mxu0 %v5393
        %7769 = vmatpush1.bf16.msra.mxu0 %v5392
        %7770 = vmatprep.subr.bf16.mxu0 %v5397
        %7771 = vmatpush1.bf16.msra.mxu0 %v5396
        %7772 = vmatprep.subr.bf16.mxu0 %v5401
        %7773 = vmatpush1.bf16.msra.mxu0 %v5400
        %7774 = vmatprep.subr.bf16.mxu0 %v5405
        %7775 = vmatpush1.bf16.msra.mxu0 %v5404
        %7776 = vmatprep.subr.bf16.mxu0 %v5409
        %7777 = vmatpush1.bf16.msra.mxu0 %v5408
        %7778 = vmatprep.subr.bf16.mxu0 %v5413
        %7779 = vmatpush1.bf16.msra.mxu0 %v5412
        %7780 = vmatprep.subr.bf16.mxu0 %v5417
        %7781 = vmatpush1.bf16.msra.mxu0 %v5416
        %7782 = vmatprep.subr.bf16.mxu0 %v5421
        %7783 = vmatpush1.bf16.msra.mxu0 %v5420
        %7784 = vmatprep.subr.bf16.mxu0 %v5425
        %7785 = vmatpush1.bf16.msra.mxu0 %v5424
        %7786 = vmatprep.subr.bf16.mxu0 %v5429
        %7787 = vmatpush1.bf16.msra.mxu0 %v5428
        %7788 = vmatprep.subr.bf16.mxu0 %v5433
        %7789 = vmatpush1.bf16.msra.mxu0 %v5432
        %7790 = vmatprep.subr.bf16.mxu0 %v5437
        %7791 = vmatpush1.bf16.msra.mxu0 %v5436
        %7792 = vmatprep.subr.bf16.mxu0 %v5441
        %7793 = vmatpush1.bf16.msra.mxu0 %v5440
        %7794 = vmatprep.subr.bf16.mxu0 %v5445
        %7795 = vmatpush1.bf16.msra.mxu0 %v5444
        %7796 = vmatprep.mubr.bf16.mxu0 %v1379
        %7797 = vmatmul.mubr.bf16.gmra.mrb[0].mxu0 %v1378
        %v7798 = vpop.f32.mrb[0].mxu0
        %v7799 = vadd.f32 %v7758, %v7798
        %v7800 = vpop.f32.mrb[0].mxu0
        %v7801 = vadd.f32 %v7760, %v7800
        %v7802 = vpop.f32.mrb[0].mxu0
        %v7803 = vpop.f32.mrb[0].mxu0
        %7804 = vdwg.mxu0
        %7805 = vmatprep.subr.bf16.mxu0 %v5449
        %7806 = vmatpush1.bf16.msra.mxu0 %v5448
        %7807 = vmatprep.subr.bf16.mxu0 %v5453
        %7808 = vmatpush1.bf16.msra.mxu0 %v5452
        %7809 = vmatprep.subr.bf16.mxu0 %v5457
        %7810 = vmatpush1.bf16.msra.mxu0 %v5456
        %7811 = vmatprep.subr.bf16.mxu0 %v5461
        %7812 = vmatpush1.bf16.msra.mxu0 %v5460
        %7813 = vmatprep.subr.bf16.mxu0 %v5465
        %7814 = vmatpush1.bf16.msra.mxu0 %v5464
        %7815 = vmatprep.subr.bf16.mxu0 %v5469
        %7816 = vmatpush1.bf16.msra.mxu0 %v5468
        %7817 = vmatprep.subr.bf16.mxu0 %v5473
        %7818 = vmatpush1.bf16.msra.mxu0 %v5472
        %7819 = vmatprep.subr.bf16.mxu0 %v5477
        %7820 = vmatpush1.bf16.msra.mxu0 %v5476
        %7821 = vmatprep.subr.bf16.mxu0 %v5481
        %7822 = vmatpush1.bf16.msra.mxu0 %v5480
        %7823 = vmatprep.subr.bf16.mxu0 %v5485
        %7824 = vmatpush1.bf16.msra.mxu0 %v5484
        %7825 = vmatprep.subr.bf16.mxu0 %v5489
        %7826 = vmatpush1.bf16.msra.mxu0 %v5488
        %7827 = vmatprep.subr.bf16.mxu0 %v5493
        %7828 = vmatpush1.bf16.msra.mxu0 %v5492
        %7829 = vmatprep.subr.bf16.mxu0 %v5497
        %7830 = vmatpush1.bf16.msra.mxu0 %v5496
        %7831 = vmatprep.subr.bf16.mxu0 %v5501
        %7832 = vmatpush1.bf16.msra.mxu0 %v5500
        %7833 = vmatprep.subr.bf16.mxu0 %v5505
        %7834 = vmatpush1.bf16.msra.mxu0 %v5504
        %7835 = vmatprep.subr.bf16.mxu0 %v5509
        %7836 = vmatpush1.bf16.msra.mxu0 %v5508
        %7837 = vmatprep.mubr.bf16.mxu0 %v1381
        %7838 = vmatmul.mubr.bf16.gmra.mrb[0].mxu0 %v1380
        %v7839 = vpop.f32.mrb[0].mxu0
        %v7840 = vadd.f32 %v7799, %v7839
        %v7841 = vpop.f32.mrb[0].mxu0
        %v7842 = vadd.f32 %v7801, %v7841
        %v7843 = vpop.f32.mrb[0].mxu0
        %v7844 = vpop.f32.mrb[0].mxu0
        %7845 = vdwg.mxu0
        %v7846 = vmax.f32 %v7184, 0.0
        %v7847 = vmax.f32 %v7186, 0.0
        %v7848 = vmax.f32 %v7840, 0.0
        %v7849 = vmax.f32 %v7842, 0.0
        %v7850 = vpack.c.bf16 %v7846, %v7846
        %v7851 = vpack.c.bf16 %v7847, %v7847
        %v7852 = vpack.c.bf16 %v7848, %v7848
        %v7853 = vpack.c.bf16 %v7849, %v7849
        %v7858 = vunpack.c.l.b16 %v7850
        %v7859 = vunpack.c.l.b16 %v7851
        %v7860 = vunpack.c.l.b16 %v7852
        %v7861 = vunpack.c.l.b16 %v7853
        %v7862 = vpack.c.b16 %v7859, %v7858
        %v7863 = vpack.c.b16 %v7861, %v7860
        %7866 = vst [vmem:[%s236] sm:$0xff] %v7862
        %7867 = vst [vmem:[%s236 + $0x8] sm:$0xff] %v7863
        %s7868 = sand.u32 %s102, 1
        %s7869 = scalar_lea.sflag [#allocation4], %s7868
        %s7870 = sand.u32 %s102, 1
        %s7871 = smul.addr %s7870, 16
        %s7872 = scalar_lea.vmem [#allocation8], %s7871
        // Predicated region
        $region45: #{tpu_custom_call.1} parent=31 // pred_check
          %p7873 = pneg %p112
        $region46: #{tpu_custom_call.1} parent=31 // pred_check_branch
          %7875 = sbr.rel (%p7873) target = $region48
        $region47: #{tpu_custom_call.1} parent=31 // pred_region
          %s7876 = smul.u32 4, %s21
          %s7878 = ssub.s32 256, 256
          %7879 = vsyncadd %s7869, %s7878
          %s7880 = smul.addr %s7876, 64
          %s7881 = scalar_lea.hbm %s3, %s7880
          %s7883 = sshll.u32 %s7872, 4
          %s7884 = int_to_ptr.vmem [resolvable:$true] %s7883
          %7886 = dma.vmem_to_hbm [thread:$0]  %s7884, 256, %s7881, %s7869
        $region48: #{tpu_custom_call.1} parent=31 // pred_fallthru
          _
      $region32: #{tpu_custom_call.1} parent=5 // pred_fallthru
        _
      %p7887 = scmp.le.s32.totalorder 2, %s16
      // Predicated region
      $region49: #{tpu_custom_call.1} parent=5 // pred_check
        %p7888 = pneg %p7887
      $region50: #{tpu_custom_call.1} parent=5 // pred_check_branch
        %7890 = sbr.rel (%p7888) target = $region52
      $region51: #{tpu_custom_call.1} parent=5 // pred_region
        %s7891 = ssub.s32 %s16, 2
        // Predicated region
        $region53: #{tpu_custom_call.1} parent=51 // pred_check
          %p7892 = pneg %p118
        $region54: #{tpu_custom_call.1} parent=51 // pred_check_branch
          %7894 = sbr.rel (%p7892) target = $region56
        $region55: #{tpu_custom_call.1} parent=51 // pred_region
          %s7895 = sand.u32 %s103, 1
          %s7896 = scalar_lea.sflag [#allocation4], %s7895
          %s7897 = sand.u32 %s103, 1
          %s7898 = smul.addr %s7897, 16
          %s7899 = scalar_lea.vmem [#allocation8], %s7898
          %7900 = dma.done %s7896, 256
        $region56: #{tpu_custom_call.1} parent=51 // pred_fallthru
          _
      $region52: #{tpu_custom_call.1} parent=5 // pred_fallthru
        _
    $region6: #{tpu_custom_call.1} parent=1 // loop_footer
      %s20 = sadd.s32 1, %s16
    $region7: #{tpu_custom_call.1} parent=1 // loop_footer_branch
      %15 = sbr.rel target = $region3
    $region8: #{tpu_custom_call.1} parent=1 // loop_exit
      _
    %7901 = vsyncpa [#allocation3], 1
    %s7902 = scalar_lea.sflag [#allocation3], 1
    %7903 = vsyncpa %s7902, 1
    %7904 = vsyncpa [#allocation6], 1
    %s7905 = scalar_lea.sflag [#allocation6], 1
    %7906 = vsyncpa %s7905, 1
    %7907 = vsyncpa [#allocation4], 1
    %s7908 = scalar_lea.sflag [#allocation4], 1
    %7909 = vsyncpa %s7908, 1

</llo_original>
